<compile_context>
chip_gen: v6e
topology: v6e:2x2x1
jax: 0.10.0
libtpu: 0.0.40
codegen_flags: <defaults>
</compile_context>

<pallas_src>
import jax
import jax.numpy as jnp
from jax.experimental import pallas as pl
from jax.experimental.pallas import tpu as pltpu


# -----------------------------------------------------------------------------
# Fused Pallas kernel: whole SpatwaveLSTM forward in one invocation
# -----------------------------------------------------------------------------
def _spatwave_kernel(xw_ref, xs_ref, h0w_ref, c0w_ref, h0s_ref, c0s_ref,
                     wavep_ref, l0p_ref, l1p_ref,
                     wave_out_ref, spat_out_ref, clf_ref, out_ref):
    f32 = jnp.float32
    B = out_ref.shape[0]
    Cin = xw_ref.shape[1]            # wave input features (= in_chan)
    T = xs_ref.shape[1]              # time_step (spat L0 input width, wave seq length)
    n_t = xw_ref.shape[0] // B       # wave sequence length (== T)
    C = xs_ref.shape[0] // B         # spat sequence length (= in_chan)
    Hw = h0w_ref.shape[2]            # wave hidden size
    Hs = h0s_ref.shape[2]            # spat hidden size per direction
    D = 2 * Hs                       # fused (bidirectional) spat state width
    F = wave_out_ref.shape[1]        # dim_final_feature
    A = ((Cin + 7) // 8) * 8         # sublane-aligned offset inside wave_pack

    def dot(a, b):
        return jnp.dot(a, b, preferred_element_type=f32)

    def cell(gates, c, H):
        # gate column order is (i, f, o, g), each H wide (reordered at prep time):
        # one sigmoid over the contiguous 3H slice, one tanh over the last H.
        sg = jax.nn.sigmoid(gates[:, :3 * H])
        g = jnp.tanh(gates[:, 3 * H:])
        i = sg[:, 0:H]
        f = sg[:, H:2 * H]
        o = sg[:, 2 * H:3 * H]
        c_new = f * c + i * g
        return o * jnp.tanh(c_new), c_new

    # ---------------- wave branch (fc_wave + biases folded into one batched dot) ----
    w_ih_w = wavep_ref[0:Cin, :]                # (Cin, 4Hw)
    w_hh_w = wavep_ref[A:A + Hw, :]             # (Hw, 4Hw)
    b_w = wavep_ref[A + Hw:A + Hw + 1, :]       # (1, 4Hw)
    p_wave = dot(xw_ref[...], w_ih_w) + b_w     # (T*B, 4Hw) — hoisted input projection
    h_w = h0w_ref[0]
    c_w = c0w_ref[0]
    for t in range(n_t):                        # unrolled; only dot(h, W_hh) per step
        gates = p_wave[t * B:(t + 1) * B, :] + dot(h_w, w_hh_w)
        h_w, c_w = cell(gates, c_w, Hw)
    # fc_final_wave + bn_wave (folded); only the final hidden state is consumed.
    ff_wave = dot(h_w, wave_out_ref[0:Hw, :]) + wave_out_ref[Hw:Hw + 1, :]

    # ---------------- spat branch: 2-layer bidirectional LSTM, directions fused ----
    def bidir_layer(layer_in, pack_ref, n_in, h0, c0):
        """One fused bidirectional LSTM layer.

        layer_in : (C*B, n_in), rows ordered position-major.
        pack_ref : rows [0:n_in) fwd-only ih, [n_in:2n_in) rev-only ih,
                   [2n_in:2n_in+D) block-diag hh, [2n_in+D] bias (all 8Hs wide,
                   gate-type interleaved columns [i_f,i_r,f_f,f_r,o_f,o_r,g_f,g_r]).
        Returns the per-step fused hidden states ([:, :Hs]=fwd at step s,
        [:, Hs:]=rev at position C-1-s).
        """
        ih_f = pack_ref[0:n_in, :]
        ih_r = pack_ref[n_in:2 * n_in, :]
        hh = pack_ref[2 * n_in:2 * n_in + D, :]
        b = pack_ref[2 * n_in + D:2 * n_in + D + 1, :]
        p_f = dot(layer_in, ih_f) + b           # (C*B, 8Hs), bias folded in once
        p_r = dot(layer_in, ih_r)               # (C*B, 8Hs)
        h, c = h0, c0
        steps = []
        for s in range(C):
            rs = C - 1 - s
            x_in = p_f[s * B:(s + 1) * B, :] + p_r[rs * B:(rs + 1) * B, :]
            gates = x_in + dot(h, hh)           # single recurrence dot for BOTH dirs
            h, c = cell(gates, c, D)
            steps.append(h)
        return steps

    xs = xs_ref[...]                            # (C*B, T)
    h0_l0 = jnp.concatenate([h0s_ref[0], h0s_ref[1]], axis=1)   # [h_f | h_r]
    c0_l0 = jnp.concatenate([c0s_ref[0], c0s_ref[1]], axis=1)
    out0 = bidir_layer(xs, l0p_ref, T, h0_l0, c0_l0)

    # per-position reassembly (fwd half from step p, rev half from step C-1-p),
    # packed into one (C*B, 2Hs) buffer -> single batched layer-1 input projection.
    l1_in = jnp.concatenate(
        [jnp.concatenate([out0[p][:, :Hs], out0[C - 1 - p][:, Hs:]], axis=1)
         for p in range(C)], axis=0)            # (C*B, 2Hs)

    h0_l1 = jnp.concatenate([h0s_ref[2], h0s_ref[3]], axis=1)
    c0_l1 = jnp.concatenate([c0s_ref[2], c0s_ref[3]], axis=1)
    out1 = bidir_layer(l1_in, l1p_ref, D, h0_l1, c0_l1)

    # lane-pack the per-position outputs into one (B, C*2Hs) vreg and do ONE dot
    # for fc_final_spat + bn_spat (folded); K = C*2Hs = 128 fills the MXU contraction.
    spat_feat = jnp.concatenate(
        [jnp.concatenate([out1[p][:, :Hs], out1[C - 1 - p][:, Hs:]], axis=1)
         for p in range(C)], axis=1)            # (B, C*2Hs)
    ff_spat = dot(spat_feat, spat_out_ref[0:C * D, :]) + spat_out_ref[C * D:C * D + 1, :]

    # ---------------- head: add branches + clf Linear + log_softmax ----------------
    feat = ff_spat + ff_wave                    # (B, F)
    logits = dot(feat, clf_ref[0:F, :]) + clf_ref[F:F + 1, :]
    mx = jnp.max(logits, axis=-1, keepdims=True)
    shifted = logits - mx
    lse = jnp.log(jnp.sum(jnp.exp(shifted), axis=-1, keepdims=True))
    out_ref[...] = (shifted - lse).astype(out_ref.dtype)


# -----------------------------------------------------------------------------
# One-time parameter preprocessing (folding + packing + gate reorder), hoisted
# out of the forward pass.
# -----------------------------------------------------------------------------
def prepare_params(p, eps=1e-5):
    f32 = jnp.float32

    def fold_bn(w, b, g, beta, rm, rv):
        s = g * jax.lax.rsqrt(rv + eps)
        return w * s[:, None], (b - rm) * s + beta

    def reorder_ifog(w_t, H):
        # columns in PyTorch order (i, f, g, o) -> (i, f, o, g)
        return jnp.concatenate(
            [w_t[:, 0:H], w_t[:, H:2 * H], w_t[:, 3 * H:4 * H], w_t[:, 2 * H:3 * H]],
            axis=1)

    # ---- wave LSTM: fc_wave folded into W_ih (exact linear composition) ----
    wl = p['wave_lstm']
    Hw = wl['w_hh'].shape[1]
    Cin = p['fc_wave_w'].shape[1]
    w_ih_eff = wl['w_ih'] @ p['fc_wave_w']                       # (4Hw, Cin)
    b_eff = wl['b_ih'] + wl['b_hh'] + wl['w_ih'] @ p['fc_wave_b']
    w_ih_r = reorder_ifog(w_ih_eff.T, Hw)                        # (Cin, 4Hw)
    w_hh_r = reorder_ifog(wl['w_hh'].T, Hw)                      # (Hw, 4Hw)
    b_r = reorder_ifog(b_eff[None, :], Hw)                       # (1, 4Hw)
    A = ((Cin + 7) // 8) * 8
    wave_pack = jnp.zeros((A + Hw + 1, 4 * Hw), f32)
    wave_pack = wave_pack.at[0:Cin].set(w_ih_r)
    wave_pack = wave_pack.at[A:A + Hw].set(w_hh_r)
    wave_pack = wave_pack.at[A + Hw].set(b_r[0])

    # ---- spat LSTM: fused-bidirectional packing with gate-type interleave ----
    def pack_bidir(fwd, rev):
        Hs = fwd['w_hh'].shape[1]
        n_in = fwd['w_ih'].shape[1]

        def gblocks(w_t):   # -> (i, f, o, g) column blocks
            return (w_t[:, 0:Hs], w_t[:, Hs:2 * Hs],
                    w_t[:, 3 * Hs:4 * Hs], w_t[:, 2 * Hs:3 * Hs])

        fi, ff_, fo, fg = gblocks(fwd['w_ih'].T)
        ri, rf, ro, rg = gblocks(rev['w_ih'].T)
        zi = jnp.zeros((n_in, Hs), f32)
        ih_f = jnp.concatenate([fi, zi, ff_, zi, fo, zi, fg, zi], axis=1)   # fwd cols only
        ih_r = jnp.concatenate([zi, ri, zi, rf, zi, ro, zi, rg], axis=1)    # rev cols only

        hfi, hff, hfo, hfg = gblocks(fwd['w_hh'].T)
        hri, hrf, hro, hrg = gblocks(rev['w_hh'].T)
        zh = jnp.zeros((Hs, Hs), f32)
        hh_top = jnp.concatenate([hfi, zh, hff, zh, hfo, zh, hfg, zh], axis=1)
        hh_bot = jnp.concatenate([zh, hri, zh, hrf, zh, hro, zh, hrg], axis=1)
        hh = jnp.concatenate([hh_top, hh_bot], axis=0)                      # (2Hs, 8Hs)

        bf = fwd['b_ih'] + fwd['b_hh']
        br = rev['b_ih'] + rev['b_hh']

        def bblk(b):
            return b[0:Hs], b[Hs:2 * Hs], b[3 * Hs:4 * Hs], b[2 * Hs:3 * Hs]

        bfi, bff, bfo, bfg = bblk(bf)
        bri, brf, bro, brg = bblk(br)
        bias = jnp.concatenate([bfi, bri, bff, brf, bfo, bro, bfg, brg])[None, :]
        # rows: [0:n_in) fwd ih, [n_in:2n_in) rev ih, [2n_in:2n_in+2Hs) hh, [2n_in+2Hs] bias
        return jnp.concatenate([ih_f, ih_r, hh, bias], axis=0).astype(f32)

    spat_l0_pack = pack_bidir(p['spat_l0_fwd'], p['spat_l0_rev'])   # (2T+2Hs+1, 8Hs)
    spat_l1_pack = pack_bidir(p['spat_l1_fwd'], p['spat_l1_rev'])   # (6Hs+1, 8Hs)

    # ---- final Linears with eval-mode BatchNorm folded; bias packed as last row ----
    ww, wb = fold_bn(p['fc_final_wave_w'], p['fc_final_wave_b'],
                     p['bn_wave_g'], p['bn_wave_b'], p['bn_wave_rm'], p['bn_wave_rv'])
    sw, sb = fold_bn(p['fc_final_spat_w'], p['fc_final_spat_b'],
                     p['bn_spat_g'], p['bn_spat_b'], p['bn_spat_rm'], p['bn_spat_rv'])
    wave_out = jnp.concatenate([ww.T, wb[None, :]], axis=0)          # (Hw + 1, F)
    spat_out = jnp.concatenate([sw.T, sb[None, :]], axis=0)          # (C*2Hs + 1, F)
    clf = jnp.concatenate([p['clf_w'].T, p['clf_b'][None, :]], axis=0)  # (F + 1, n_cls)

    return dict(wave_pack=wave_pack, spat_l0_pack=spat_l0_pack, spat_l1_pack=spat_l1_pack,
                wave_out=wave_out, spat_out=spat_out, clf=clf)


# -----------------------------------------------------------------------------
# Forward wrapper: one fused pallas_call (single launch, no grid)
# -----------------------------------------------------------------------------
@jax.jit
def spatwave_lstm_forward(x, prep, states):
    """x: (B, in_chan, time_step) [or (B,1,in_chan,time_step)] -> (B, n_classes) log-probs."""
    if x.ndim == 4:
        x = jnp.squeeze(x, axis=1)
    B, C, T = x.shape
    n_classes = prep['clf'].shape[1]
    # Row-major (step, batch) flats feeding the hoisted batched input projections.
    xw_flat = jnp.transpose(x, (2, 0, 1)).reshape(T * B, C)      # (T*B, Cin)
    xs_flat = jnp.transpose(x, (1, 0, 2)).reshape(C * B, T)      # (C*B, T)

    vmem = lambda: pl.BlockSpec(memory_space=pltpu.MemorySpace.VMEM)
    return pl.pallas_call(
        _spatwave_kernel,
        out_shape=jax.ShapeDtypeStruct((B, n_classes), jnp.float32),
        in_specs=[vmem() for _ in range(12)],
        out_specs=vmem(),
    )(xw_flat, xs_flat,
      states['h0_wave'], states['c0_wave'],
      states['h0_spat'], states['c0_spat'],
      prep['wave_pack'], prep['spat_l0_pack'], prep['spat_l1_pack'],
      prep['wave_out'], prep['spat_out'], prep['clf'])


# -----------------------------------------------------------------------------
# Pure-JAX reference (mirrors the PyTorch forward in eval mode) for a tolerance test
# -----------------------------------------------------------------------------
def reference_forward(x, p, states, eps=1e-5):
    def cell(prm, x_t, h, c):
        H = prm['w_hh'].shape[1]
        g = x_t @ prm['w_ih'].T + h @ prm['w_hh'].T + prm['b_ih'] + prm['b_hh']
        i = jax.nn.sigmoid(g[:, 0:H])
        f = jax.nn.sigmoid(g[:, H:2 * H])
        gg = jnp.tanh(g[:, 2 * H:3 * H])
        o = jax.nn.sigmoid(g[:, 3 * H:4 * H])
        c = f * c + i * gg
        return o * jnp.tanh(c), c

    def bn(v, g, b, rm, rv):
        return (v - rm) * g * jax.lax.rsqrt(rv + eps) + b

    B, C, T = x.shape
    # wave branch
    xw = jnp.swapaxes(x, 1, 2)
    fw = xw @ p['fc_wave_w'].T + p['fc_wave_b']
    h, c = states['h0_wave'][0], states['c0_wave'][0]
    for t in range(T):
        h, c = cell(p['wave_lstm'], fw[:, t, :], h, c)
    ffw = bn(h @ p['fc_final_wave_w'].T + p['fc_final_wave_b'],
             p['bn_wave_g'], p['bn_wave_b'], p['bn_wave_rm'], p['bn_wave_rv'])

    # spat branch (2-layer bidirectional)
    def bidir(layer_f, layer_r, inputs, hf, cf, hr, cr):
        outf = []
        for s in range(C):
            hf, cf = cell(layer_f, inputs[s], hf, cf)
            outf.append(hf)
        outr = [None] * C
        for s in reversed(range(C)):
            hr, cr = cell(layer_r, inputs[s], hr, cr)
            outr[s] = hr
        return [jnp.concatenate([outf[s], outr[s]], axis=1) for s in range(C)]

    in0 = [x[:, s, :] for s in range(C)]
    out0 = bidir(p['spat_l0_fwd'], p['spat_l0_rev'], in0,
                 states['h0_spat'][0], states['c0_spat'][0],
                 states['h0_spat'][1], states['c0_spat'][1])
    out1 = bidir(p['spat_l1_fwd'], p['spat_l1_rev'], out0,
                 states['h0_spat'][2], states['c0_spat'][2],
                 states['h0_spat'][3], states['c0_spat'][3])
    flat = jnp.concatenate(out1, axis=1)
    ffs = bn(flat @ p['fc_final_spat_w'].T + p['fc_final_spat_b'],
             p['bn_spat_g'], p['bn_spat_b'], p['bn_spat_rm'], p['bn_spat_rv'])

    logits = (ffs + ffw) @ p['clf_w'].T + p['clf_b']
    return jax.nn.log_softmax(logits, axis=-1)


# -----------------------------------------------------------------------------
# Deterministic parameter init (shapes match the nn.Module __init__)
# -----------------------------------------------------------------------------
def _init_lstm(key, input_size, hidden, scale=0.1):
    k1, k2, k3, k4 = jax.random.split(key, 4)
    return dict(
        w_ih=scale * jax.random.normal(k1, (4 * hidden, input_size), jnp.float32),
        w_hh=scale * jax.random.normal(k2, (4 * hidden, hidden), jnp.float32),
        b_ih=scale * jax.random.normal(k3, (4 * hidden,), jnp.float32),
        b_hh=scale * jax.random.normal(k4, (4 * hidden,), jnp.float32),
    )


def _init_linear(key, out_f, in_f, scale=0.1):
    k1, k2 = jax.random.split(key)
    return (scale * jax.random.normal(k1, (out_f, in_f), jnp.float32),
            scale * jax.random.normal(k2, (out_f,), jnp.float32))


def init_params(key, in_chan, time_step, n_classes, input_size_wave,
                hidden_size_spat, hidden_size_wave, dim_final_feature):
    keys = jax.random.split(key, 10)
    params = {}
    params['fc_wave_w'], params['fc_wave_b'] = _init_linear(keys[0], input_size_wave, in_chan)
    params['fc_final_wave_w'], params['fc_final_wave_b'] = _init_linear(
        keys[1], dim_final_feature, hidden_size_wave * 1)
    params['fc_final_spat_w'], params['fc_final_spat_b'] = _init_linear(
        keys[2], dim_final_feature, in_chan * hidden_size_spat * 2)
    params['clf_w'], params['clf_b'] = _init_linear(keys[3], n_classes, dim_final_feature)

    params['wave_lstm'] = _init_lstm(keys[4], input_size_wave, hidden_size_wave)
    params['spat_l0_fwd'] = _init_lstm(keys[5], time_step, hidden_size_spat)
    params['spat_l0_rev'] = _init_lstm(keys[6], time_step, hidden_size_spat)
    params['spat_l1_fwd'] = _init_lstm(keys[7], 2 * hidden_size_spat, hidden_size_spat)
    params['spat_l1_rev'] = _init_lstm(keys[8], 2 * hidden_size_spat, hidden_size_spat)

    # BatchNorm1d defaults (eval): weight=1, bias=0, running_mean=0, running_var=1
    F = dim_final_feature
    for name in ('bn_wave', 'bn_spat'):
        params[f'{name}_g'] = jnp.ones((F,), jnp.float32)
        params[f'{name}_b'] = jnp.zeros((F,), jnp.float32)
        params[f'{name}_rm'] = jnp.zeros((F,), jnp.float32)
        params[f'{name}_rv'] = jnp.ones((F,), jnp.float32)
    return params


if __name__ == "__main__":
    # Small shapes consistent with the module's forward:
    B, in_chan, time_step = 2, 4, 16
    n_classes = 5
    input_size_wave, hidden_size_spat, hidden_size_wave, dim_final_feature = 8, 16, 32, 24

    key = jax.random.PRNGKey(0)
    kx, kp, kh1, kc1, kh2, kc2 = jax.random.split(key, 6)

    x = jax.random.normal(kx, (B, in_chan, time_step), jnp.float32)
    params = init_params(kp, in_chan, time_step, n_classes, input_size_wave,
                         hidden_size_spat, hidden_size_wave, dim_final_feature)
    prep = prepare_params(params)   # one-time folding / packing / gate reordering

    # The PyTorch forward draws h0/c0 from torch.randn each call; drawn deterministically
    # here with the PyTorch state layout (num_layers*num_directions, B, H).
    states = dict(
        h0_wave=jax.random.normal(kh1, (1, B, hidden_size_wave), jnp.float32),
        c0_wave=jax.random.normal(kc1, (1, B, hidden_size_wave), jnp.float32),
        h0_spat=jax.random.normal(kh2, (4, B, hidden_size_spat), jnp.float32),
        c0_spat=jax.random.normal(kc2, (4, B, hidden_size_spat), jnp.float32),
    )

    pred = spatwave_lstm_forward(x, prep, states)
    jax.block_until_ready(pred)
    assert pred.shape == (B, n_classes)

    # Reference-model tolerance test (guards the gate-reorder / direction-fusion packing).
    ref = reference_forward(x, params, states)
    max_err = float(jnp.max(jnp.abs(pred - ref)))
    assert max_err < 2e-4, f"kernel/reference mismatch: max abs err = {max_err}"

    # log_softmax sanity: probabilities sum to 1
    probs_sum = jnp.sum(jnp.exp(pred), axis=-1)
    assert bool(jnp.all(jnp.abs(probs_sum - 1.0) < 1e-3))
    print("KERNEL_OK")
</pallas_src>

<mosaic_0001>
module attributes {stable_mosaic.version = 11 : i64} {
  func.func @_spatwave_kernel(%arg0: memref<32x4xf32, #tpu.memory_space<vmem>>, %arg1: memref<8x16xf32, #tpu.memory_space<vmem>>, %arg2: memref<1x2x32xf32, #tpu.memory_space<vmem>>, %arg3: memref<1x2x32xf32, #tpu.memory_space<vmem>>, %arg4: memref<4x2x16xf32, #tpu.memory_space<vmem>>, %arg5: memref<4x2x16xf32, #tpu.memory_space<vmem>>, %arg6: memref<41x128xf32, #tpu.memory_space<vmem>>, %arg7: memref<65x128xf32, #tpu.memory_space<vmem>>, %arg8: memref<97x128xf32, #tpu.memory_space<vmem>>, %arg9: memref<33x24xf32, #tpu.memory_space<vmem>>, %arg10: memref<129x24xf32, #tpu.memory_space<vmem>>, %arg11: memref<25x5xf32, #tpu.memory_space<vmem>>, %arg12: memref<2x5xf32, #tpu.memory_space<vmem>>) attributes {dimension_semantics = [], scalar_prefetch = 0 : i64, scratch_operands = 0 : i64, tpu.core_type = #tpu.core_type<tc>} {
    %c0 = arith.constant 0 : index
    %c0_0 = arith.constant 0 : index
    %0 = vector.load %arg6[%c0, %c0_0] : memref<41x128xf32, #tpu.memory_space<vmem>>, vector<4x128xf32>
    %c8 = arith.constant 8 : index
    %c0_1 = arith.constant 0 : index
    %1 = vector.load %arg6[%c8, %c0_1] : memref<41x128xf32, #tpu.memory_space<vmem>>, vector<32x128xf32>
    %c40 = arith.constant 40 : index
    %c0_2 = arith.constant 0 : index
    %2 = vector.load %arg6[%c40, %c0_2] : memref<41x128xf32, #tpu.memory_space<vmem>>, vector<1x128xf32>
    %c0_3 = arith.constant 0 : index
    %c0_4 = arith.constant 0 : index
    %3 = vector.load %arg0[%c0_3, %c0_4] : memref<32x4xf32, #tpu.memory_space<vmem>>, vector<32x4xf32>
    %cst = arith.constant dense<0.000000e+00> : vector<32x128xf32>
    %4 = tpu.matmul %3, %0, %cst {dimension_numbers = #tpu.dot_dimension_numbers<[1], [0], [0], [1], [0, 0, 1, 1], [], []>} : vector<32x4xf32>, vector<4x128xf32>, vector<32x128xf32> -> vector<32x128xf32>
    %5 = vector.broadcast %2 : vector<1x128xf32> to vector<32x128xf32>
    %6 = arith.addf %4, %5 : vector<32x128xf32>
    %c0_5 = arith.constant 0 : index
    %c0_6 = arith.constant 0 : index
    %c0_7 = arith.constant 0 : index
    %7 = vector.load %arg2[%c0_5, %c0_6, %c0_7] : memref<1x2x32xf32, #tpu.memory_space<vmem>>, vector<1x2x32xf32>
    %8 = vector.shape_cast %7 : vector<1x2x32xf32> to vector<2x32xf32>
    %c0_8 = arith.constant 0 : index
    %c0_9 = arith.constant 0 : index
    %c0_10 = arith.constant 0 : index
    %9 = vector.load %arg3[%c0_8, %c0_9, %c0_10] : memref<1x2x32xf32, #tpu.memory_space<vmem>>, vector<1x2x32xf32>
    %10 = vector.shape_cast %9 : vector<1x2x32xf32> to vector<2x32xf32>
    %11 = vector.extract_strided_slice %6 {offsets = [0, 0], sizes = [2, 128], strides = [1, 1]} : vector<32x128xf32> to vector<2x128xf32>
    %cst_11 = arith.constant dense<0.000000e+00> : vector<2x128xf32>
    %12 = tpu.matmul %8, %1, %cst_11 {dimension_numbers = #tpu.dot_dimension_numbers<[1], [0], [0], [1], [0, 0, 1, 1], [], []>} : vector<2x32xf32>, vector<32x128xf32>, vector<2x128xf32> -> vector<2x128xf32>
    %13 = arith.addf %11, %12 : vector<2x128xf32>
    %14 = vector.extract_strided_slice %13 {offsets = [0, 0], sizes = [2, 96], strides = [1, 1]} : vector<2x128xf32> to vector<2x96xf32>
    %15 = arith.negf %14 : vector<2x96xf32>
    %16 = math.exp %15 : vector<2x96xf32>
    %cst_12 = arith.constant 1.000000e+00 : f32
    %17 = vector.broadcast %cst_12 : f32 to vector<2x96xf32>
    %18 = arith.addf %17, %16 : vector<2x96xf32>
    %19 = arith.divf %17, %18 : vector<2x96xf32>
    %20 = vector.extract_strided_slice %13 {offsets = [0, 96], sizes = [2, 32], strides = [1, 1]} : vector<2x128xf32> to vector<2x32xf32>
    %21 = math.tanh %20 : vector<2x32xf32>
    %22 = vector.extract_strided_slice %19 {offsets = [0, 0], sizes = [2, 32], strides = [1, 1]} : vector<2x96xf32> to vector<2x32xf32>
    %23 = vector.extract_strided_slice %19 {offsets = [0, 32], sizes = [2, 32], strides = [1, 1]} : vector<2x96xf32> to vector<2x32xf32>
    %24 = vector.extract_strided_slice %19 {offsets = [0, 64], sizes = [2, 32], strides = [1, 1]} : vector<2x96xf32> to vector<2x32xf32>
    %25 = arith.mulf %23, %10 : vector<2x32xf32>
    %26 = arith.mulf %22, %21 : vector<2x32xf32>
    %27 = arith.addf %25, %26 : vector<2x32xf32>
    %28 = math.tanh %27 : vector<2x32xf32>
    %29 = arith.mulf %24, %28 : vector<2x32xf32>
    %30 = vector.extract_strided_slice %6 {offsets = [2, 0], sizes = [2, 128], strides = [1, 1]} : vector<32x128xf32> to vector<2x128xf32>
    %cst_13 = arith.constant dense<0.000000e+00> : vector<2x128xf32>
    %31 = tpu.matmul %29, %1, %cst_13 {dimension_numbers = #tpu.dot_dimension_numbers<[1], [0], [0], [1], [0, 0, 1, 1], [], []>} : vector<2x32xf32>, vector<32x128xf32>, vector<2x128xf32> -> vector<2x128xf32>
    %32 = arith.addf %30, %31 : vector<2x128xf32>
    %33 = vector.extract_strided_slice %32 {offsets = [0, 0], sizes = [2, 96], strides = [1, 1]} : vector<2x128xf32> to vector<2x96xf32>
    %34 = arith.negf %33 : vector<2x96xf32>
    %35 = math.exp %34 : vector<2x96xf32>
    %cst_14 = arith.constant 1.000000e+00 : f32
    %36 = vector.broadcast %cst_14 : f32 to vector<2x96xf32>
    %37 = arith.addf %36, %35 : vector<2x96xf32>
    %38 = arith.divf %36, %37 : vector<2x96xf32>
    %39 = vector.extract_strided_slice %32 {offsets = [0, 96], sizes = [2, 32], strides = [1, 1]} : vector<2x128xf32> to vector<2x32xf32>
    %40 = math.tanh %39 : vector<2x32xf32>
    %41 = vector.extract_strided_slice %38 {offsets = [0, 0], sizes = [2, 32], strides = [1, 1]} : vector<2x96xf32> to vector<2x32xf32>
    %42 = vector.extract_strided_slice %38 {offsets = [0, 32], sizes = [2, 32], strides = [1, 1]} : vector<2x96xf32> to vector<2x32xf32>
    %43 = vector.extract_strided_slice %38 {offsets = [0, 64], sizes = [2, 32], strides = [1, 1]} : vector<2x96xf32> to vector<2x32xf32>
    %44 = arith.mulf %42, %27 : vector<2x32xf32>
    %45 = arith.mulf %41, %40 : vector<2x32xf32>
    %46 = arith.addf %44, %45 : vector<2x32xf32>
    %47 = math.tanh %46 : vector<2x32xf32>
    %48 = arith.mulf %43, %47 : vector<2x32xf32>
    %49 = vector.extract_strided_slice %6 {offsets = [4, 0], sizes = [2, 128], strides = [1, 1]} : vector<32x128xf32> to vector<2x128xf32>
    %cst_15 = arith.constant dense<0.000000e+00> : vector<2x128xf32>
    %50 = tpu.matmul %48, %1, %cst_15 {dimension_numbers = #tpu.dot_dimension_numbers<[1], [0], [0], [1], [0, 0, 1, 1], [], []>} : vector<2x32xf32>, vector<32x128xf32>, vector<2x128xf32> -> vector<2x128xf32>
    %51 = arith.addf %49, %50 : vector<2x128xf32>
    %52 = vector.extract_strided_slice %51 {offsets = [0, 0], sizes = [2, 96], strides = [1, 1]} : vector<2x128xf32> to vector<2x96xf32>
    %53 = arith.negf %52 : vector<2x96xf32>
    %54 = math.exp %53 : vector<2x96xf32>
    %cst_16 = arith.constant 1.000000e+00 : f32
    %55 = vector.broadcast %cst_16 : f32 to vector<2x96xf32>
    %56 = arith.addf %55, %54 : vector<2x96xf32>
    %57 = arith.divf %55, %56 : vector<2x96xf32>
    %58 = vector.extract_strided_slice %51 {offsets = [0, 96], sizes = [2, 32], strides = [1, 1]} : vector<2x128xf32> to vector<2x32xf32>
    %59 = math.tanh %58 : vector<2x32xf32>
    %60 = vector.extract_strided_slice %57 {offsets = [0, 0], sizes = [2, 32], strides = [1, 1]} : vector<2x96xf32> to vector<2x32xf32>
    %61 = vector.extract_strided_slice %57 {offsets = [0, 32], sizes = [2, 32], strides = [1, 1]} : vector<2x96xf32> to vector<2x32xf32>
    %62 = vector.extract_strided_slice %57 {offsets = [0, 64], sizes = [2, 32], strides = [1, 1]} : vector<2x96xf32> to vector<2x32xf32>
    %63 = arith.mulf %61, %46 : vector<2x32xf32>
    %64 = arith.mulf %60, %59 : vector<2x32xf32>
    %65 = arith.addf %63, %64 : vector<2x32xf32>
    %66 = math.tanh %65 : vector<2x32xf32>
    %67 = arith.mulf %62, %66 : vector<2x32xf32>
    %68 = vector.extract_strided_slice %6 {offsets = [6, 0], sizes = [2, 128], strides = [1, 1]} : vector<32x128xf32> to vector<2x128xf32>
    %cst_17 = arith.constant dense<0.000000e+00> : vector<2x128xf32>
    %69 = tpu.matmul %67, %1, %cst_17 {dimension_numbers = #tpu.dot_dimension_numbers<[1], [0], [0], [1], [0, 0, 1, 1], [], []>} : vector<2x32xf32>, vector<32x128xf32>, vector<2x128xf32> -> vector<2x128xf32>
    %70 = arith.addf %68, %69 : vector<2x128xf32>
    %71 = vector.extract_strided_slice %70 {offsets = [0, 0], sizes = [2, 96], strides = [1, 1]} : vector<2x128xf32> to vector<2x96xf32>
    %72 = arith.negf %71 : vector<2x96xf32>
    %73 = math.exp %72 : vector<2x96xf32>
    %cst_18 = arith.constant 1.000000e+00 : f32
    %74 = vector.broadcast %cst_18 : f32 to vector<2x96xf32>
    %75 = arith.addf %74, %73 : vector<2x96xf32>
    %76 = arith.divf %74, %75 : vector<2x96xf32>
    %77 = vector.extract_strided_slice %70 {offsets = [0, 96], sizes = [2, 32], strides = [1, 1]} : vector<2x128xf32> to vector<2x32xf32>
    %78 = math.tanh %77 : vector<2x32xf32>
    %79 = vector.extract_strided_slice %76 {offsets = [0, 0], sizes = [2, 32], strides = [1, 1]} : vector<2x96xf32> to vector<2x32xf32>
    %80 = vector.extract_strided_slice %76 {offsets = [0, 32], sizes = [2, 32], strides = [1, 1]} : vector<2x96xf32> to vector<2x32xf32>
    %81 = vector.extract_strided_slice %76 {offsets = [0, 64], sizes = [2, 32], strides = [1, 1]} : vector<2x96xf32> to vector<2x32xf32>
    %82 = arith.mulf %80, %65 : vector<2x32xf32>
    %83 = arith.mulf %79, %78 : vector<2x32xf32>
    %84 = arith.addf %82, %83 : vector<2x32xf32>
    %85 = math.tanh %84 : vector<2x32xf32>
    %86 = arith.mulf %81, %85 : vector<2x32xf32>
    %87 = vector.extract_strided_slice %6 {offsets = [8, 0], sizes = [2, 128], strides = [1, 1]} : vector<32x128xf32> to vector<2x128xf32>
    %cst_19 = arith.constant dense<0.000000e+00> : vector<2x128xf32>
    %88 = tpu.matmul %86, %1, %cst_19 {dimension_numbers = #tpu.dot_dimension_numbers<[1], [0], [0], [1], [0, 0, 1, 1], [], []>} : vector<2x32xf32>, vector<32x128xf32>, vector<2x128xf32> -> vector<2x128xf32>
    %89 = arith.addf %87, %88 : vector<2x128xf32>
    %90 = vector.extract_strided_slice %89 {offsets = [0, 0], sizes = [2, 96], strides = [1, 1]} : vector<2x128xf32> to vector<2x96xf32>
    %91 = arith.negf %90 : vector<2x96xf32>
    %92 = math.exp %91 : vector<2x96xf32>
    %cst_20 = arith.constant 1.000000e+00 : f32
    %93 = vector.broadcast %cst_20 : f32 to vector<2x96xf32>
    %94 = arith.addf %93, %92 : vector<2x96xf32>
    %95 = arith.divf %93, %94 : vector<2x96xf32>
    %96 = vector.extract_strided_slice %89 {offsets = [0, 96], sizes = [2, 32], strides = [1, 1]} : vector<2x128xf32> to vector<2x32xf32>
    %97 = math.tanh %96 : vector<2x32xf32>
    %98 = vector.extract_strided_slice %95 {offsets = [0, 0], sizes = [2, 32], strides = [1, 1]} : vector<2x96xf32> to vector<2x32xf32>
    %99 = vector.extract_strided_slice %95 {offsets = [0, 32], sizes = [2, 32], strides = [1, 1]} : vector<2x96xf32> to vector<2x32xf32>
    %100 = vector.extract_strided_slice %95 {offsets = [0, 64], sizes = [2, 32], strides = [1, 1]} : vector<2x96xf32> to vector<2x32xf32>
    %101 = arith.mulf %99, %84 : vector<2x32xf32>
    %102 = arith.mulf %98, %97 : vector<2x32xf32>
    %103 = arith.addf %101, %102 : vector<2x32xf32>
    %104 = math.tanh %103 : vector<2x32xf32>
    %105 = arith.mulf %100, %104 : vector<2x32xf32>
    %106 = vector.extract_strided_slice %6 {offsets = [10, 0], sizes = [2, 128], strides = [1, 1]} : vector<32x128xf32> to vector<2x128xf32>
    %cst_21 = arith.constant dense<0.000000e+00> : vector<2x128xf32>
    %107 = tpu.matmul %105, %1, %cst_21 {dimension_numbers = #tpu.dot_dimension_numbers<[1], [0], [0], [1], [0, 0, 1, 1], [], []>} : vector<2x32xf32>, vector<32x128xf32>, vector<2x128xf32> -> vector<2x128xf32>
    %108 = arith.addf %106, %107 : vector<2x128xf32>
    %109 = vector.extract_strided_slice %108 {offsets = [0, 0], sizes = [2, 96], strides = [1, 1]} : vector<2x128xf32> to vector<2x96xf32>
    %110 = arith.negf %109 : vector<2x96xf32>
    %111 = math.exp %110 : vector<2x96xf32>
    %cst_22 = arith.constant 1.000000e+00 : f32
    %112 = vector.broadcast %cst_22 : f32 to vector<2x96xf32>
    %113 = arith.addf %112, %111 : vector<2x96xf32>
    %114 = arith.divf %112, %113 : vector<2x96xf32>
    %115 = vector.extract_strided_slice %108 {offsets = [0, 96], sizes = [2, 32], strides = [1, 1]} : vector<2x128xf32> to vector<2x32xf32>
    %116 = math.tanh %115 : vector<2x32xf32>
    %117 = vector.extract_strided_slice %114 {offsets = [0, 0], sizes = [2, 32], strides = [1, 1]} : vector<2x96xf32> to vector<2x32xf32>
    %118 = vector.extract_strided_slice %114 {offsets = [0, 32], sizes = [2, 32], strides = [1, 1]} : vector<2x96xf32> to vector<2x32xf32>
    %119 = vector.extract_strided_slice %114 {offsets = [0, 64], sizes = [2, 32], strides = [1, 1]} : vector<2x96xf32> to vector<2x32xf32>
    %120 = arith.mulf %118, %103 : vector<2x32xf32>
    %121 = arith.mulf %117, %116 : vector<2x32xf32>
    %122 = arith.addf %120, %121 : vector<2x32xf32>
    %123 = math.tanh %122 : vector<2x32xf32>
    %124 = arith.mulf %119, %123 : vector<2x32xf32>
    %125 = vector.extract_strided_slice %6 {offsets = [12, 0], sizes = [2, 128], strides = [1, 1]} : vector<32x128xf32> to vector<2x128xf32>
    %cst_23 = arith.constant dense<0.000000e+00> : vector<2x128xf32>
    %126 = tpu.matmul %124, %1, %cst_23 {dimension_numbers = #tpu.dot_dimension_numbers<[1], [0], [0], [1], [0, 0, 1, 1], [], []>} : vector<2x32xf32>, vector<32x128xf32>, vector<2x128xf32> -> vector<2x128xf32>
    %127 = arith.addf %125, %126 : vector<2x128xf32>
    %128 = vector.extract_strided_slice %127 {offsets = [0, 0], sizes = [2, 96], strides = [1, 1]} : vector<2x128xf32> to vector<2x96xf32>
    %129 = arith.negf %128 : vector<2x96xf32>
    %130 = math.exp %129 : vector<2x96xf32>
    %cst_24 = arith.constant 1.000000e+00 : f32
    %131 = vector.broadcast %cst_24 : f32 to vector<2x96xf32>
    %132 = arith.addf %131, %130 : vector<2x96xf32>
    %133 = arith.divf %131, %132 : vector<2x96xf32>
    %134 = vector.extract_strided_slice %127 {offsets = [0, 96], sizes = [2, 32], strides = [1, 1]} : vector<2x128xf32> to vector<2x32xf32>
    %135 = math.tanh %134 : vector<2x32xf32>
    %136 = vector.extract_strided_slice %133 {offsets = [0, 0], sizes = [2, 32], strides = [1, 1]} : vector<2x96xf32> to vector<2x32xf32>
    %137 = vector.extract_strided_slice %133 {offsets = [0, 32], sizes = [2, 32], strides = [1, 1]} : vector<2x96xf32> to vector<2x32xf32>
    %138 = vector.extract_strided_slice %133 {offsets = [0, 64], sizes = [2, 32], strides = [1, 1]} : vector<2x96xf32> to vector<2x32xf32>
    %139 = arith.mulf %137, %122 : vector<2x32xf32>
    %140 = arith.mulf %136, %135 : vector<2x32xf32>
    %141 = arith.addf %139, %140 : vector<2x32xf32>
    %142 = math.tanh %141 : vector<2x32xf32>
    %143 = arith.mulf %138, %142 : vector<2x32xf32>
    %144 = vector.extract_strided_slice %6 {offsets = [14, 0], sizes = [2, 128], strides = [1, 1]} : vector<32x128xf32> to vector<2x128xf32>
    %cst_25 = arith.constant dense<0.000000e+00> : vector<2x128xf32>
    %145 = tpu.matmul %143, %1, %cst_25 {dimension_numbers = #tpu.dot_dimension_numbers<[1], [0], [0], [1], [0, 0, 1, 1], [], []>} : vector<2x32xf32>, vector<32x128xf32>, vector<2x128xf32> -> vector<2x128xf32>
    %146 = arith.addf %144, %145 : vector<2x128xf32>
    %147 = vector.extract_strided_slice %146 {offsets = [0, 0], sizes = [2, 96], strides = [1, 1]} : vector<2x128xf32> to vector<2x96xf32>
    %148 = arith.negf %147 : vector<2x96xf32>
    %149 = math.exp %148 : vector<2x96xf32>
    %cst_26 = arith.constant 1.000000e+00 : f32
    %150 = vector.broadcast %cst_26 : f32 to vector<2x96xf32>
    %151 = arith.addf %150, %149 : vector<2x96xf32>
    %152 = arith.divf %150, %151 : vector<2x96xf32>
    %153 = vector.extract_strided_slice %146 {offsets = [0, 96], sizes = [2, 32], strides = [1, 1]} : vector<2x128xf32> to vector<2x32xf32>
    %154 = math.tanh %153 : vector<2x32xf32>
    %155 = vector.extract_strided_slice %152 {offsets = [0, 0], sizes = [2, 32], strides = [1, 1]} : vector<2x96xf32> to vector<2x32xf32>
    %156 = vector.extract_strided_slice %152 {offsets = [0, 32], sizes = [2, 32], strides = [1, 1]} : vector<2x96xf32> to vector<2x32xf32>
    %157 = vector.extract_strided_slice %152 {offsets = [0, 64], sizes = [2, 32], strides = [1, 1]} : vector<2x96xf32> to vector<2x32xf32>
    %158 = arith.mulf %156, %141 : vector<2x32xf32>
    %159 = arith.mulf %155, %154 : vector<2x32xf32>
    %160 = arith.addf %158, %159 : vector<2x32xf32>
    %161 = math.tanh %160 : vector<2x32xf32>
    %162 = arith.mulf %157, %161 : vector<2x32xf32>
    %163 = vector.extract_strided_slice %6 {offsets = [16, 0], sizes = [2, 128], strides = [1, 1]} : vector<32x128xf32> to vector<2x128xf32>
    %cst_27 = arith.constant dense<0.000000e+00> : vector<2x128xf32>
    %164 = tpu.matmul %162, %1, %cst_27 {dimension_numbers = #tpu.dot_dimension_numbers<[1], [0], [0], [1], [0, 0, 1, 1], [], []>} : vector<2x32xf32>, vector<32x128xf32>, vector<2x128xf32> -> vector<2x128xf32>
    %165 = arith.addf %163, %164 : vector<2x128xf32>
    %166 = vector.extract_strided_slice %165 {offsets = [0, 0], sizes = [2, 96], strides = [1, 1]} : vector<2x128xf32> to vector<2x96xf32>
    %167 = arith.negf %166 : vector<2x96xf32>
    %168 = math.exp %167 : vector<2x96xf32>
    %cst_28 = arith.constant 1.000000e+00 : f32
    %169 = vector.broadcast %cst_28 : f32 to vector<2x96xf32>
    %170 = arith.addf %169, %168 : vector<2x96xf32>
    %171 = arith.divf %169, %170 : vector<2x96xf32>
    %172 = vector.extract_strided_slice %165 {offsets = [0, 96], sizes = [2, 32], strides = [1, 1]} : vector<2x128xf32> to vector<2x32xf32>
    %173 = math.tanh %172 : vector<2x32xf32>
    %174 = vector.extract_strided_slice %171 {offsets = [0, 0], sizes = [2, 32], strides = [1, 1]} : vector<2x96xf32> to vector<2x32xf32>
    %175 = vector.extract_strided_slice %171 {offsets = [0, 32], sizes = [2, 32], strides = [1, 1]} : vector<2x96xf32> to vector<2x32xf32>
    %176 = vector.extract_strided_slice %171 {offsets = [0, 64], sizes = [2, 32], strides = [1, 1]} : vector<2x96xf32> to vector<2x32xf32>
    %177 = arith.mulf %175, %160 : vector<2x32xf32>
    %178 = arith.mulf %174, %173 : vector<2x32xf32>
    %179 = arith.addf %177, %178 : vector<2x32xf32>
    %180 = math.tanh %179 : vector<2x32xf32>
    %181 = arith.mulf %176, %180 : vector<2x32xf32>
    %182 = vector.extract_strided_slice %6 {offsets = [18, 0], sizes = [2, 128], strides = [1, 1]} : vector<32x128xf32> to vector<2x128xf32>
    %cst_29 = arith.constant dense<0.000000e+00> : vector<2x128xf32>
    %183 = tpu.matmul %181, %1, %cst_29 {dimension_numbers = #tpu.dot_dimension_numbers<[1], [0], [0], [1], [0, 0, 1, 1], [], []>} : vector<2x32xf32>, vector<32x128xf32>, vector<2x128xf32> -> vector<2x128xf32>
    %184 = arith.addf %182, %183 : vector<2x128xf32>
    %185 = vector.extract_strided_slice %184 {offsets = [0, 0], sizes = [2, 96], strides = [1, 1]} : vector<2x128xf32> to vector<2x96xf32>
    %186 = arith.negf %185 : vector<2x96xf32>
    %187 = math.exp %186 : vector<2x96xf32>
    %cst_30 = arith.constant 1.000000e+00 : f32
    %188 = vector.broadcast %cst_30 : f32 to vector<2x96xf32>
    %189 = arith.addf %188, %187 : vector<2x96xf32>
    %190 = arith.divf %188, %189 : vector<2x96xf32>
    %191 = vector.extract_strided_slice %184 {offsets = [0, 96], sizes = [2, 32], strides = [1, 1]} : vector<2x128xf32> to vector<2x32xf32>
    %192 = math.tanh %191 : vector<2x32xf32>
    %193 = vector.extract_strided_slice %190 {offsets = [0, 0], sizes = [2, 32], strides = [1, 1]} : vector<2x96xf32> to vector<2x32xf32>
    %194 = vector.extract_strided_slice %190 {offsets = [0, 32], sizes = [2, 32], strides = [1, 1]} : vector<2x96xf32> to vector<2x32xf32>
    %195 = vector.extract_strided_slice %190 {offsets = [0, 64], sizes = [2, 32], strides = [1, 1]} : vector<2x96xf32> to vector<2x32xf32>
    %196 = arith.mulf %194, %179 : vector<2x32xf32>
    %197 = arith.mulf %193, %192 : vector<2x32xf32>
    %198 = arith.addf %196, %197 : vector<2x32xf32>
    %199 = math.tanh %198 : vector<2x32xf32>
    %200 = arith.mulf %195, %199 : vector<2x32xf32>
    %201 = vector.extract_strided_slice %6 {offsets = [20, 0], sizes = [2, 128], strides = [1, 1]} : vector<32x128xf32> to vector<2x128xf32>
    %cst_31 = arith.constant dense<0.000000e+00> : vector<2x128xf32>
    %202 = tpu.matmul %200, %1, %cst_31 {dimension_numbers = #tpu.dot_dimension_numbers<[1], [0], [0], [1], [0, 0, 1, 1], [], []>} : vector<2x32xf32>, vector<32x128xf32>, vector<2x128xf32> -> vector<2x128xf32>
    %203 = arith.addf %201, %202 : vector<2x128xf32>
    %204 = vector.extract_strided_slice %203 {offsets = [0, 0], sizes = [2, 96], strides = [1, 1]} : vector<2x128xf32> to vector<2x96xf32>
    %205 = arith.negf %204 : vector<2x96xf32>
    %206 = math.exp %205 : vector<2x96xf32>
    %cst_32 = arith.constant 1.000000e+00 : f32
    %207 = vector.broadcast %cst_32 : f32 to vector<2x96xf32>
    %208 = arith.addf %207, %206 : vector<2x96xf32>
    %209 = arith.divf %207, %208 : vector<2x96xf32>
    %210 = vector.extract_strided_slice %203 {offsets = [0, 96], sizes = [2, 32], strides = [1, 1]} : vector<2x128xf32> to vector<2x32xf32>
    %211 = math.tanh %210 : vector<2x32xf32>
    %212 = vector.extract_strided_slice %209 {offsets = [0, 0], sizes = [2, 32], strides = [1, 1]} : vector<2x96xf32> to vector<2x32xf32>
    %213 = vector.extract_strided_slice %209 {offsets = [0, 32], sizes = [2, 32], strides = [1, 1]} : vector<2x96xf32> to vector<2x32xf32>
    %214 = vector.extract_strided_slice %209 {offsets = [0, 64], sizes = [2, 32], strides = [1, 1]} : vector<2x96xf32> to vector<2x32xf32>
    %215 = arith.mulf %213, %198 : vector<2x32xf32>
    %216 = arith.mulf %212, %211 : vector<2x32xf32>
    %217 = arith.addf %215, %216 : vector<2x32xf32>
    %218 = math.tanh %217 : vector<2x32xf32>
    %219 = arith.mulf %214, %218 : vector<2x32xf32>
    %220 = vector.extract_strided_slice %6 {offsets = [22, 0], sizes = [2, 128], strides = [1, 1]} : vector<32x128xf32> to vector<2x128xf32>
    %cst_33 = arith.constant dense<0.000000e+00> : vector<2x128xf32>
    %221 = tpu.matmul %219, %1, %cst_33 {dimension_numbers = #tpu.dot_dimension_numbers<[1], [0], [0], [1], [0, 0, 1, 1], [], []>} : vector<2x32xf32>, vector<32x128xf32>, vector<2x128xf32> -> vector<2x128xf32>
    %222 = arith.addf %220, %221 : vector<2x128xf32>
    %223 = vector.extract_strided_slice %222 {offsets = [0, 0], sizes = [2, 96], strides = [1, 1]} : vector<2x128xf32> to vector<2x96xf32>
    %224 = arith.negf %223 : vector<2x96xf32>
    %225 = math.exp %224 : vector<2x96xf32>
    %cst_34 = arith.constant 1.000000e+00 : f32
    %226 = vector.broadcast %cst_34 : f32 to vector<2x96xf32>
    %227 = arith.addf %226, %225 : vector<2x96xf32>
    %228 = arith.divf %226, %227 : vector<2x96xf32>
    %229 = vector.extract_strided_slice %222 {offsets = [0, 96], sizes = [2, 32], strides = [1, 1]} : vector<2x128xf32> to vector<2x32xf32>
    %230 = math.tanh %229 : vector<2x32xf32>
    %231 = vector.extract_strided_slice %228 {offsets = [0, 0], sizes = [2, 32], strides = [1, 1]} : vector<2x96xf32> to vector<2x32xf32>
    %232 = vector.extract_strided_slice %228 {offsets = [0, 32], sizes = [2, 32], strides = [1, 1]} : vector<2x96xf32> to vector<2x32xf32>
    %233 = vector.extract_strided_slice %228 {offsets = [0, 64], sizes = [2, 32], strides = [1, 1]} : vector<2x96xf32> to vector<2x32xf32>
    %234 = arith.mulf %232, %217 : vector<2x32xf32>
    %235 = arith.mulf %231, %230 : vector<2x32xf32>
    %236 = arith.addf %234, %235 : vector<2x32xf32>
    %237 = math.tanh %236 : vector<2x32xf32>
    %238 = arith.mulf %233, %237 : vector<2x32xf32>
    %239 = vector.extract_strided_slice %6 {offsets = [24, 0], sizes = [2, 128], strides = [1, 1]} : vector<32x128xf32> to vector<2x128xf32>
    %cst_35 = arith.constant dense<0.000000e+00> : vector<2x128xf32>
    %240 = tpu.matmul %238, %1, %cst_35 {dimension_numbers = #tpu.dot_dimension_numbers<[1], [0], [0], [1], [0, 0, 1, 1], [], []>} : vector<2x32xf32>, vector<32x128xf32>, vector<2x128xf32> -> vector<2x128xf32>
    %241 = arith.addf %239, %240 : vector<2x128xf32>
    %242 = vector.extract_strided_slice %241 {offsets = [0, 0], sizes = [2, 96], strides = [1, 1]} : vector<2x128xf32> to vector<2x96xf32>
    %243 = arith.negf %242 : vector<2x96xf32>
    %244 = math.exp %243 : vector<2x96xf32>
    %cst_36 = arith.constant 1.000000e+00 : f32
    %245 = vector.broadcast %cst_36 : f32 to vector<2x96xf32>
    %246 = arith.addf %245, %244 : vector<2x96xf32>
    %247 = arith.divf %245, %246 : vector<2x96xf32>
    %248 = vector.extract_strided_slice %241 {offsets = [0, 96], sizes = [2, 32], strides = [1, 1]} : vector<2x128xf32> to vector<2x32xf32>
    %249 = math.tanh %248 : vector<2x32xf32>
    %250 = vector.extract_strided_slice %247 {offsets = [0, 0], sizes = [2, 32], strides = [1, 1]} : vector<2x96xf32> to vector<2x32xf32>
    %251 = vector.extract_strided_slice %247 {offsets = [0, 32], sizes = [2, 32], strides = [1, 1]} : vector<2x96xf32> to vector<2x32xf32>
    %252 = vector.extract_strided_slice %247 {offsets = [0, 64], sizes = [2, 32], strides = [1, 1]} : vector<2x96xf32> to vector<2x32xf32>
    %253 = arith.mulf %251, %236 : vector<2x32xf32>
    %254 = arith.mulf %250, %249 : vector<2x32xf32>
    %255 = arith.addf %253, %254 : vector<2x32xf32>
    %256 = math.tanh %255 : vector<2x32xf32>
    %257 = arith.mulf %252, %256 : vector<2x32xf32>
    %258 = vector.extract_strided_slice %6 {offsets = [26, 0], sizes = [2, 128], strides = [1, 1]} : vector<32x128xf32> to vector<2x128xf32>
    %cst_37 = arith.constant dense<0.000000e+00> : vector<2x128xf32>
    %259 = tpu.matmul %257, %1, %cst_37 {dimension_numbers = #tpu.dot_dimension_numbers<[1], [0], [0], [1], [0, 0, 1, 1], [], []>} : vector<2x32xf32>, vector<32x128xf32>, vector<2x128xf32> -> vector<2x128xf32>
    %260 = arith.addf %258, %259 : vector<2x128xf32>
    %261 = vector.extract_strided_slice %260 {offsets = [0, 0], sizes = [2, 96], strides = [1, 1]} : vector<2x128xf32> to vector<2x96xf32>
    %262 = arith.negf %261 : vector<2x96xf32>
    %263 = math.exp %262 : vector<2x96xf32>
    %cst_38 = arith.constant 1.000000e+00 : f32
    %264 = vector.broadcast %cst_38 : f32 to vector<2x96xf32>
    %265 = arith.addf %264, %263 : vector<2x96xf32>
    %266 = arith.divf %264, %265 : vector<2x96xf32>
    %267 = vector.extract_strided_slice %260 {offsets = [0, 96], sizes = [2, 32], strides = [1, 1]} : vector<2x128xf32> to vector<2x32xf32>
    %268 = math.tanh %267 : vector<2x32xf32>
    %269 = vector.extract_strided_slice %266 {offsets = [0, 0], sizes = [2, 32], strides = [1, 1]} : vector<2x96xf32> to vector<2x32xf32>
    %270 = vector.extract_strided_slice %266 {offsets = [0, 32], sizes = [2, 32], strides = [1, 1]} : vector<2x96xf32> to vector<2x32xf32>
    %271 = vector.extract_strided_slice %266 {offsets = [0, 64], sizes = [2, 32], strides = [1, 1]} : vector<2x96xf32> to vector<2x32xf32>
    %272 = arith.mulf %270, %255 : vector<2x32xf32>
    %273 = arith.mulf %269, %268 : vector<2x32xf32>
    %274 = arith.addf %272, %273 : vector<2x32xf32>
    %275 = math.tanh %274 : vector<2x32xf32>
    %276 = arith.mulf %271, %275 : vector<2x32xf32>
    %277 = vector.extract_strided_slice %6 {offsets = [28, 0], sizes = [2, 128], strides = [1, 1]} : vector<32x128xf32> to vector<2x128xf32>
    %cst_39 = arith.constant dense<0.000000e+00> : vector<2x128xf32>
    %278 = tpu.matmul %276, %1, %cst_39 {dimension_numbers = #tpu.dot_dimension_numbers<[1], [0], [0], [1], [0, 0, 1, 1], [], []>} : vector<2x32xf32>, vector<32x128xf32>, vector<2x128xf32> -> vector<2x128xf32>
    %279 = arith.addf %277, %278 : vector<2x128xf32>
    %280 = vector.extract_strided_slice %279 {offsets = [0, 0], sizes = [2, 96], strides = [1, 1]} : vector<2x128xf32> to vector<2x96xf32>
    %281 = arith.negf %280 : vector<2x96xf32>
    %282 = math.exp %281 : vector<2x96xf32>
    %cst_40 = arith.constant 1.000000e+00 : f32
    %283 = vector.broadcast %cst_40 : f32 to vector<2x96xf32>
    %284 = arith.addf %283, %282 : vector<2x96xf32>
    %285 = arith.divf %283, %284 : vector<2x96xf32>
    %286 = vector.extract_strided_slice %279 {offsets = [0, 96], sizes = [2, 32], strides = [1, 1]} : vector<2x128xf32> to vector<2x32xf32>
    %287 = math.tanh %286 : vector<2x32xf32>
    %288 = vector.extract_strided_slice %285 {offsets = [0, 0], sizes = [2, 32], strides = [1, 1]} : vector<2x96xf32> to vector<2x32xf32>
    %289 = vector.extract_strided_slice %285 {offsets = [0, 32], sizes = [2, 32], strides = [1, 1]} : vector<2x96xf32> to vector<2x32xf32>
    %290 = vector.extract_strided_slice %285 {offsets = [0, 64], sizes = [2, 32], strides = [1, 1]} : vector<2x96xf32> to vector<2x32xf32>
    %291 = arith.mulf %289, %274 : vector<2x32xf32>
    %292 = arith.mulf %288, %287 : vector<2x32xf32>
    %293 = arith.addf %291, %292 : vector<2x32xf32>
    %294 = math.tanh %293 : vector<2x32xf32>
    %295 = arith.mulf %290, %294 : vector<2x32xf32>
    %296 = vector.extract_strided_slice %6 {offsets = [30, 0], sizes = [2, 128], strides = [1, 1]} : vector<32x128xf32> to vector<2x128xf32>
    %cst_41 = arith.constant dense<0.000000e+00> : vector<2x128xf32>
    %297 = tpu.matmul %295, %1, %cst_41 {dimension_numbers = #tpu.dot_dimension_numbers<[1], [0], [0], [1], [0, 0, 1, 1], [], []>} : vector<2x32xf32>, vector<32x128xf32>, vector<2x128xf32> -> vector<2x128xf32>
    %298 = arith.addf %296, %297 : vector<2x128xf32>
    %299 = vector.extract_strided_slice %298 {offsets = [0, 0], sizes = [2, 96], strides = [1, 1]} : vector<2x128xf32> to vector<2x96xf32>
    %300 = arith.negf %299 : vector<2x96xf32>
    %301 = math.exp %300 : vector<2x96xf32>
    %cst_42 = arith.constant 1.000000e+00 : f32
    %302 = vector.broadcast %cst_42 : f32 to vector<2x96xf32>
    %303 = arith.addf %302, %301 : vector<2x96xf32>
    %304 = arith.divf %302, %303 : vector<2x96xf32>
    %305 = vector.extract_strided_slice %298 {offsets = [0, 96], sizes = [2, 32], strides = [1, 1]} : vector<2x128xf32> to vector<2x32xf32>
    %306 = math.tanh %305 : vector<2x32xf32>
    %307 = vector.extract_strided_slice %304 {offsets = [0, 0], sizes = [2, 32], strides = [1, 1]} : vector<2x96xf32> to vector<2x32xf32>
    %308 = vector.extract_strided_slice %304 {offsets = [0, 32], sizes = [2, 32], strides = [1, 1]} : vector<2x96xf32> to vector<2x32xf32>
    %309 = vector.extract_strided_slice %304 {offsets = [0, 64], sizes = [2, 32], strides = [1, 1]} : vector<2x96xf32> to vector<2x32xf32>
    %310 = arith.mulf %308, %293 : vector<2x32xf32>
    %311 = arith.mulf %307, %306 : vector<2x32xf32>
    %312 = arith.addf %310, %311 : vector<2x32xf32>
    %313 = math.tanh %312 : vector<2x32xf32>
    %314 = arith.mulf %309, %313 : vector<2x32xf32>
    %c0_43 = arith.constant 0 : index
    %c0_44 = arith.constant 0 : index
    %315 = vector.load %arg9[%c0_43, %c0_44] : memref<33x24xf32, #tpu.memory_space<vmem>>, vector<32x24xf32>
    %cst_45 = arith.constant dense<0.000000e+00> : vector<2x24xf32>
    %316 = tpu.matmul %314, %315, %cst_45 {dimension_numbers = #tpu.dot_dimension_numbers<[1], [0], [0], [1], [0, 0, 1, 1], [], []>} : vector<2x32xf32>, vector<32x24xf32>, vector<2x24xf32> -> vector<2x24xf32>
    %c32 = arith.constant 32 : index
    %c0_46 = arith.constant 0 : index
    %317 = vector.load %arg9[%c32, %c0_46] : memref<33x24xf32, #tpu.memory_space<vmem>>, vector<1x24xf32>
    %318 = vector.broadcast %317 : vector<1x24xf32> to vector<2x24xf32>
    %319 = arith.addf %316, %318 : vector<2x24xf32>
    %c0_47 = arith.constant 0 : index
    %c0_48 = arith.constant 0 : index
    %320 = vector.load %arg1[%c0_47, %c0_48] : memref<8x16xf32, #tpu.memory_space<vmem>>, vector<8x16xf32>
    %c0_49 = arith.constant 0 : index
    %c0_50 = arith.constant 0 : index
    %c0_51 = arith.constant 0 : index
    %321 = vector.load %arg4[%c0_49, %c0_50, %c0_51] : memref<4x2x16xf32, #tpu.memory_space<vmem>>, vector<1x2x16xf32>
    %322 = vector.shape_cast %321 : vector<1x2x16xf32> to vector<2x16xf32>
    %c1 = arith.constant 1 : index
    %c0_52 = arith.constant 0 : index
    %c0_53 = arith.constant 0 : index
    %323 = vector.load %arg4[%c1, %c0_52, %c0_53] : memref<4x2x16xf32, #tpu.memory_space<vmem>>, vector<1x2x16xf32>
    %324 = vector.shape_cast %323 : vector<1x2x16xf32> to vector<2x16xf32>
    %325 = tpu.concatenate %322, %324 in 1 : vector<2x16xf32>, vector<2x16xf32> -> vector<2x32xf32>
    %c0_54 = arith.constant 0 : index
    %c0_55 = arith.constant 0 : index
    %c0_56 = arith.constant 0 : index
    %326 = vector.load %arg5[%c0_54, %c0_55, %c0_56] : memref<4x2x16xf32, #tpu.memory_space<vmem>>, vector<1x2x16xf32>
    %327 = vector.shape_cast %326 : vector<1x2x16xf32> to vector<2x16xf32>
    %c1_57 = arith.constant 1 : index
    %c0_58 = arith.constant 0 : index
    %c0_59 = arith.constant 0 : index
    %328 = vector.load %arg5[%c1_57, %c0_58, %c0_59] : memref<4x2x16xf32, #tpu.memory_space<vmem>>, vector<1x2x16xf32>
    %329 = vector.shape_cast %328 : vector<1x2x16xf32> to vector<2x16xf32>
    %330 = tpu.concatenate %327, %329 in 1 : vector<2x16xf32>, vector<2x16xf32> -> vector<2x32xf32>
    %c0_60 = arith.constant 0 : index
    %c0_61 = arith.constant 0 : index
    %331 = vector.load %arg7[%c0_60, %c0_61] : memref<65x128xf32, #tpu.memory_space<vmem>>, vector<16x128xf32>
    %c16 = arith.constant 16 : index
    %c0_62 = arith.constant 0 : index
    %332 = vector.load %arg7[%c16, %c0_62] : memref<65x128xf32, #tpu.memory_space<vmem>>, vector<16x128xf32>
    %c32_63 = arith.constant 32 : index
    %c0_64 = arith.constant 0 : index
    %333 = vector.load %arg7[%c32_63, %c0_64] : memref<65x128xf32, #tpu.memory_space<vmem>>, vector<32x128xf32>
    %c64 = arith.constant 64 : index
    %c0_65 = arith.constant 0 : index
    %334 = vector.load %arg7[%c64, %c0_65] : memref<65x128xf32, #tpu.memory_space<vmem>>, vector<1x128xf32>
    %cst_66 = arith.constant dense<0.000000e+00> : vector<8x128xf32>
    %335 = tpu.matmul %320, %331, %cst_66 {dimension_numbers = #tpu.dot_dimension_numbers<[1], [0], [0], [1], [0, 0, 1, 1], [], []>} : vector<8x16xf32>, vector<16x128xf32>, vector<8x128xf32> -> vector<8x128xf32>
    %336 = vector.broadcast %334 : vector<1x128xf32> to vector<8x128xf32>
    %337 = arith.addf %335, %336 : vector<8x128xf32>
    %cst_67 = arith.constant dense<0.000000e+00> : vector<8x128xf32>
    %338 = tpu.matmul %320, %332, %cst_67 {dimension_numbers = #tpu.dot_dimension_numbers<[1], [0], [0], [1], [0, 0, 1, 1], [], []>} : vector<8x16xf32>, vector<16x128xf32>, vector<8x128xf32> -> vector<8x128xf32>
    %339 = vector.extract_strided_slice %337 {offsets = [0, 0], sizes = [2, 128], strides = [1, 1]} : vector<8x128xf32> to vector<2x128xf32>
    %340 = vector.extract_strided_slice %338 {offsets = [6, 0], sizes = [2, 128], strides = [1, 1]} : vector<8x128xf32> to vector<2x128xf32>
    %341 = arith.addf %339, %340 : vector<2x128xf32>
    %cst_68 = arith.constant dense<0.000000e+00> : vector<2x128xf32>
    %342 = tpu.matmul %325, %333, %cst_68 {dimension_numbers = #tpu.dot_dimension_numbers<[1], [0], [0], [1], [0, 0, 1, 1], [], []>} : vector<2x32xf32>, vector<32x128xf32>, vector<2x128xf32> -> vector<2x128xf32>
    %343 = arith.addf %341, %342 : vector<2x128xf32>
    %344 = vector.extract_strided_slice %343 {offsets = [0, 0], sizes = [2, 96], strides = [1, 1]} : vector<2x128xf32> to vector<2x96xf32>
    %345 = arith.negf %344 : vector<2x96xf32>
    %346 = math.exp %345 : vector<2x96xf32>
    %cst_69 = arith.constant 1.000000e+00 : f32
    %347 = vector.broadcast %cst_69 : f32 to vector<2x96xf32>
    %348 = arith.addf %347, %346 : vector<2x96xf32>
    %349 = arith.divf %347, %348 : vector<2x96xf32>
    %350 = vector.extract_strided_slice %343 {offsets = [0, 96], sizes = [2, 32], strides = [1, 1]} : vector<2x128xf32> to vector<2x32xf32>
    %351 = math.tanh %350 : vector<2x32xf32>
    %352 = vector.extract_strided_slice %349 {offsets = [0, 0], sizes = [2, 32], strides = [1, 1]} : vector<2x96xf32> to vector<2x32xf32>
    %353 = vector.extract_strided_slice %349 {offsets = [0, 32], sizes = [2, 32], strides = [1, 1]} : vector<2x96xf32> to vector<2x32xf32>
    %354 = vector.extract_strided_slice %349 {offsets = [0, 64], sizes = [2, 32], strides = [1, 1]} : vector<2x96xf32> to vector<2x32xf32>
    %355 = arith.mulf %353, %330 : vector<2x32xf32>
    %356 = arith.mulf %352, %351 : vector<2x32xf32>
    %357 = arith.addf %355, %356 : vector<2x32xf32>
    %358 = math.tanh %357 : vector<2x32xf32>
    %359 = arith.mulf %354, %358 : vector<2x32xf32>
    %360 = vector.extract_strided_slice %337 {offsets = [2, 0], sizes = [2, 128], strides = [1, 1]} : vector<8x128xf32> to vector<2x128xf32>
    %361 = vector.extract_strided_slice %338 {offsets = [4, 0], sizes = [2, 128], strides = [1, 1]} : vector<8x128xf32> to vector<2x128xf32>
    %362 = arith.addf %360, %361 : vector<2x128xf32>
    %cst_70 = arith.constant dense<0.000000e+00> : vector<2x128xf32>
    %363 = tpu.matmul %359, %333, %cst_70 {dimension_numbers = #tpu.dot_dimension_numbers<[1], [0], [0], [1], [0, 0, 1, 1], [], []>} : vector<2x32xf32>, vector<32x128xf32>, vector<2x128xf32> -> vector<2x128xf32>
    %364 = arith.addf %362, %363 : vector<2x128xf32>
    %365 = vector.extract_strided_slice %364 {offsets = [0, 0], sizes = [2, 96], strides = [1, 1]} : vector<2x128xf32> to vector<2x96xf32>
    %366 = arith.negf %365 : vector<2x96xf32>
    %367 = math.exp %366 : vector<2x96xf32>
    %cst_71 = arith.constant 1.000000e+00 : f32
    %368 = vector.broadcast %cst_71 : f32 to vector<2x96xf32>
    %369 = arith.addf %368, %367 : vector<2x96xf32>
    %370 = arith.divf %368, %369 : vector<2x96xf32>
    %371 = vector.extract_strided_slice %364 {offsets = [0, 96], sizes = [2, 32], strides = [1, 1]} : vector<2x128xf32> to vector<2x32xf32>
    %372 = math.tanh %371 : vector<2x32xf32>
    %373 = vector.extract_strided_slice %370 {offsets = [0, 0], sizes = [2, 32], strides = [1, 1]} : vector<2x96xf32> to vector<2x32xf32>
    %374 = vector.extract_strided_slice %370 {offsets = [0, 32], sizes = [2, 32], strides = [1, 1]} : vector<2x96xf32> to vector<2x32xf32>
    %375 = vector.extract_strided_slice %370 {offsets = [0, 64], sizes = [2, 32], strides = [1, 1]} : vector<2x96xf32> to vector<2x32xf32>
    %376 = arith.mulf %374, %357 : vector<2x32xf32>
    %377 = arith.mulf %373, %372 : vector<2x32xf32>
    %378 = arith.addf %376, %377 : vector<2x32xf32>
    %379 = math.tanh %378 : vector<2x32xf32>
    %380 = arith.mulf %375, %379 : vector<2x32xf32>
    %381 = vector.extract_strided_slice %337 {offsets = [4, 0], sizes = [2, 128], strides = [1, 1]} : vector<8x128xf32> to vector<2x128xf32>
    %382 = vector.extract_strided_slice %338 {offsets = [2, 0], sizes = [2, 128], strides = [1, 1]} : vector<8x128xf32> to vector<2x128xf32>
    %383 = arith.addf %381, %382 : vector<2x128xf32>
    %cst_72 = arith.constant dense<0.000000e+00> : vector<2x128xf32>
    %384 = tpu.matmul %380, %333, %cst_72 {dimension_numbers = #tpu.dot_dimension_numbers<[1], [0], [0], [1], [0, 0, 1, 1], [], []>} : vector<2x32xf32>, vector<32x128xf32>, vector<2x128xf32> -> vector<2x128xf32>
    %385 = arith.addf %383, %384 : vector<2x128xf32>
    %386 = vector.extract_strided_slice %385 {offsets = [0, 0], sizes = [2, 96], strides = [1, 1]} : vector<2x128xf32> to vector<2x96xf32>
    %387 = arith.negf %386 : vector<2x96xf32>
    %388 = math.exp %387 : vector<2x96xf32>
    %cst_73 = arith.constant 1.000000e+00 : f32
    %389 = vector.broadcast %cst_73 : f32 to vector<2x96xf32>
    %390 = arith.addf %389, %388 : vector<2x96xf32>
    %391 = arith.divf %389, %390 : vector<2x96xf32>
    %392 = vector.extract_strided_slice %385 {offsets = [0, 96], sizes = [2, 32], strides = [1, 1]} : vector<2x128xf32> to vector<2x32xf32>
    %393 = math.tanh %392 : vector<2x32xf32>
    %394 = vector.extract_strided_slice %391 {offsets = [0, 0], sizes = [2, 32], strides = [1, 1]} : vector<2x96xf32> to vector<2x32xf32>
    %395 = vector.extract_strided_slice %391 {offsets = [0, 32], sizes = [2, 32], strides = [1, 1]} : vector<2x96xf32> to vector<2x32xf32>
    %396 = vector.extract_strided_slice %391 {offsets = [0, 64], sizes = [2, 32], strides = [1, 1]} : vector<2x96xf32> to vector<2x32xf32>
    %397 = arith.mulf %395, %378 : vector<2x32xf32>
    %398 = arith.mulf %394, %393 : vector<2x32xf32>
    %399 = arith.addf %397, %398 : vector<2x32xf32>
    %400 = math.tanh %399 : vector<2x32xf32>
    %401 = arith.mulf %396, %400 : vector<2x32xf32>
    %402 = vector.extract_strided_slice %337 {offsets = [6, 0], sizes = [2, 128], strides = [1, 1]} : vector<8x128xf32> to vector<2x128xf32>
    %403 = vector.extract_strided_slice %338 {offsets = [0, 0], sizes = [2, 128], strides = [1, 1]} : vector<8x128xf32> to vector<2x128xf32>
    %404 = arith.addf %402, %403 : vector<2x128xf32>
    %cst_74 = arith.constant dense<0.000000e+00> : vector<2x128xf32>
    %405 = tpu.matmul %401, %333, %cst_74 {dimension_numbers = #tpu.dot_dimension_numbers<[1], [0], [0], [1], [0, 0, 1, 1], [], []>} : vector<2x32xf32>, vector<32x128xf32>, vector<2x128xf32> -> vector<2x128xf32>
    %406 = arith.addf %404, %405 : vector<2x128xf32>
    %407 = vector.extract_strided_slice %406 {offsets = [0, 0], sizes = [2, 96], strides = [1, 1]} : vector<2x128xf32> to vector<2x96xf32>
    %408 = arith.negf %407 : vector<2x96xf32>
    %409 = math.exp %408 : vector<2x96xf32>
    %cst_75 = arith.constant 1.000000e+00 : f32
    %410 = vector.broadcast %cst_75 : f32 to vector<2x96xf32>
    %411 = arith.addf %410, %409 : vector<2x96xf32>
    %412 = arith.divf %410, %411 : vector<2x96xf32>
    %413 = vector.extract_strided_slice %406 {offsets = [0, 96], sizes = [2, 32], strides = [1, 1]} : vector<2x128xf32> to vector<2x32xf32>
    %414 = math.tanh %413 : vector<2x32xf32>
    %415 = vector.extract_strided_slice %412 {offsets = [0, 0], sizes = [2, 32], strides = [1, 1]} : vector<2x96xf32> to vector<2x32xf32>
    %416 = vector.extract_strided_slice %412 {offsets = [0, 32], sizes = [2, 32], strides = [1, 1]} : vector<2x96xf32> to vector<2x32xf32>
    %417 = vector.extract_strided_slice %412 {offsets = [0, 64], sizes = [2, 32], strides = [1, 1]} : vector<2x96xf32> to vector<2x32xf32>
    %418 = arith.mulf %416, %399 : vector<2x32xf32>
    %419 = arith.mulf %415, %414 : vector<2x32xf32>
    %420 = arith.addf %418, %419 : vector<2x32xf32>
    %421 = math.tanh %420 : vector<2x32xf32>
    %422 = arith.mulf %417, %421 : vector<2x32xf32>
    %423 = vector.extract_strided_slice %359 {offsets = [0, 0], sizes = [2, 16], strides = [1, 1]} : vector<2x32xf32> to vector<2x16xf32>
    %424 = vector.extract_strided_slice %422 {offsets = [0, 16], sizes = [2, 16], strides = [1, 1]} : vector<2x32xf32> to vector<2x16xf32>
    %425 = tpu.concatenate %423, %424 in 1 : vector<2x16xf32>, vector<2x16xf32> -> vector<2x32xf32>
    %426 = vector.extract_strided_slice %380 {offsets = [0, 0], sizes = [2, 16], strides = [1, 1]} : vector<2x32xf32> to vector<2x16xf32>
    %427 = vector.extract_strided_slice %401 {offsets = [0, 16], sizes = [2, 16], strides = [1, 1]} : vector<2x32xf32> to vector<2x16xf32>
    %428 = tpu.concatenate %426, %427 in 1 : vector<2x16xf32>, vector<2x16xf32> -> vector<2x32xf32>
    %429 = vector.extract_strided_slice %401 {offsets = [0, 0], sizes = [2, 16], strides = [1, 1]} : vector<2x32xf32> to vector<2x16xf32>
    %430 = vector.extract_strided_slice %380 {offsets = [0, 16], sizes = [2, 16], strides = [1, 1]} : vector<2x32xf32> to vector<2x16xf32>
    %431 = tpu.concatenate %429, %430 in 1 : vector<2x16xf32>, vector<2x16xf32> -> vector<2x32xf32>
    %432 = vector.extract_strided_slice %422 {offsets = [0, 0], sizes = [2, 16], strides = [1, 1]} : vector<2x32xf32> to vector<2x16xf32>
    %433 = vector.extract_strided_slice %359 {offsets = [0, 16], sizes = [2, 16], strides = [1, 1]} : vector<2x32xf32> to vector<2x16xf32>
    %434 = tpu.concatenate %432, %433 in 1 : vector<2x16xf32>, vector<2x16xf32> -> vector<2x32xf32>
    %435 = tpu.concatenate %425, %428, %431, %434 in 0 : vector<2x32xf32>, vector<2x32xf32>, vector<2x32xf32>, vector<2x32xf32> -> vector<8x32xf32>
    %c2 = arith.constant 2 : index
    %c0_76 = arith.constant 0 : index
    %c0_77 = arith.constant 0 : index
    %436 = vector.load %arg4[%c2, %c0_76, %c0_77] : memref<4x2x16xf32, #tpu.memory_space<vmem>>, vector<1x2x16xf32>
    %437 = vector.shape_cast %436 : vector<1x2x16xf32> to vector<2x16xf32>
    %c3 = arith.constant 3 : index
    %c0_78 = arith.constant 0 : index
    %c0_79 = arith.constant 0 : index
    %438 = vector.load %arg4[%c3, %c0_78, %c0_79] : memref<4x2x16xf32, #tpu.memory_space<vmem>>, vector<1x2x16xf32>
    %439 = vector.shape_cast %438 : vector<1x2x16xf32> to vector<2x16xf32>
    %440 = tpu.concatenate %437, %439 in 1 : vector<2x16xf32>, vector<2x16xf32> -> vector<2x32xf32>
    %c2_80 = arith.constant 2 : index
    %c0_81 = arith.constant 0 : index
    %c0_82 = arith.constant 0 : index
    %441 = vector.load %arg5[%c2_80, %c0_81, %c0_82] : memref<4x2x16xf32, #tpu.memory_space<vmem>>, vector<1x2x16xf32>
    %442 = vector.shape_cast %441 : vector<1x2x16xf32> to vector<2x16xf32>
    %c3_83 = arith.constant 3 : index
    %c0_84 = arith.constant 0 : index
    %c0_85 = arith.constant 0 : index
    %443 = vector.load %arg5[%c3_83, %c0_84, %c0_85] : memref<4x2x16xf32, #tpu.memory_space<vmem>>, vector<1x2x16xf32>
    %444 = vector.shape_cast %443 : vector<1x2x16xf32> to vector<2x16xf32>
    %445 = tpu.concatenate %442, %444 in 1 : vector<2x16xf32>, vector<2x16xf32> -> vector<2x32xf32>
    %c0_86 = arith.constant 0 : index
    %c0_87 = arith.constant 0 : index
    %446 = vector.load %arg8[%c0_86, %c0_87] : memref<97x128xf32, #tpu.memory_space<vmem>>, vector<32x128xf32>
    %c32_88 = arith.constant 32 : index
    %c0_89 = arith.constant 0 : index
    %447 = vector.load %arg8[%c32_88, %c0_89] : memref<97x128xf32, #tpu.memory_space<vmem>>, vector<32x128xf32>
    %c64_90 = arith.constant 64 : index
    %c0_91 = arith.constant 0 : index
    %448 = vector.load %arg8[%c64_90, %c0_91] : memref<97x128xf32, #tpu.memory_space<vmem>>, vector<32x128xf32>
    %c96 = arith.constant 96 : index
    %c0_92 = arith.constant 0 : index
    %449 = vector.load %arg8[%c96, %c0_92] : memref<97x128xf32, #tpu.memory_space<vmem>>, vector<1x128xf32>
    %cst_93 = arith.constant dense<0.000000e+00> : vector<8x128xf32>
    %450 = tpu.matmul %435, %446, %cst_93 {dimension_numbers = #tpu.dot_dimension_numbers<[1], [0], [0], [1], [0, 0, 1, 1], [], []>} : vector<8x32xf32>, vector<32x128xf32>, vector<8x128xf32> -> vector<8x128xf32>
    %451 = vector.broadcast %449 : vector<1x128xf32> to vector<8x128xf32>
    %452 = arith.addf %450, %451 : vector<8x128xf32>
    %cst_94 = arith.constant dense<0.000000e+00> : vector<8x128xf32>
    %453 = tpu.matmul %435, %447, %cst_94 {dimension_numbers = #tpu.dot_dimension_numbers<[1], [0], [0], [1], [0, 0, 1, 1], [], []>} : vector<8x32xf32>, vector<32x128xf32>, vector<8x128xf32> -> vector<8x128xf32>
    %454 = vector.extract_strided_slice %452 {offsets = [0, 0], sizes = [2, 128], strides = [1, 1]} : vector<8x128xf32> to vector<2x128xf32>
    %455 = vector.extract_strided_slice %453 {offsets = [6, 0], sizes = [2, 128], strides = [1, 1]} : vector<8x128xf32> to vector<2x128xf32>
    %456 = arith.addf %454, %455 : vector<2x128xf32>
    %cst_95 = arith.constant dense<0.000000e+00> : vector<2x128xf32>
    %457 = tpu.matmul %440, %448, %cst_95 {dimension_numbers = #tpu.dot_dimension_numbers<[1], [0], [0], [1], [0, 0, 1, 1], [], []>} : vector<2x32xf32>, vector<32x128xf32>, vector<2x128xf32> -> vector<2x128xf32>
    %458 = arith.addf %456, %457 : vector<2x128xf32>
    %459 = vector.extract_strided_slice %458 {offsets = [0, 0], sizes = [2, 96], strides = [1, 1]} : vector<2x128xf32> to vector<2x96xf32>
    %460 = arith.negf %459 : vector<2x96xf32>
    %461 = math.exp %460 : vector<2x96xf32>
    %cst_96 = arith.constant 1.000000e+00 : f32
    %462 = vector.broadcast %cst_96 : f32 to vector<2x96xf32>
    %463 = arith.addf %462, %461 : vector<2x96xf32>
    %464 = arith.divf %462, %463 : vector<2x96xf32>
    %465 = vector.extract_strided_slice %458 {offsets = [0, 96], sizes = [2, 32], strides = [1, 1]} : vector<2x128xf32> to vector<2x32xf32>
    %466 = math.tanh %465 : vector<2x32xf32>
    %467 = vector.extract_strided_slice %464 {offsets = [0, 0], sizes = [2, 32], strides = [1, 1]} : vector<2x96xf32> to vector<2x32xf32>
    %468 = vector.extract_strided_slice %464 {offsets = [0, 32], sizes = [2, 32], strides = [1, 1]} : vector<2x96xf32> to vector<2x32xf32>
    %469 = vector.extract_strided_slice %464 {offsets = [0, 64], sizes = [2, 32], strides = [1, 1]} : vector<2x96xf32> to vector<2x32xf32>
    %470 = arith.mulf %468, %445 : vector<2x32xf32>
    %471 = arith.mulf %467, %466 : vector<2x32xf32>
    %472 = arith.addf %470, %471 : vector<2x32xf32>
    %473 = math.tanh %472 : vector<2x32xf32>
    %474 = arith.mulf %469, %473 : vector<2x32xf32>
    %475 = vector.extract_strided_slice %452 {offsets = [2, 0], sizes = [2, 128], strides = [1, 1]} : vector<8x128xf32> to vector<2x128xf32>
    %476 = vector.extract_strided_slice %453 {offsets = [4, 0], sizes = [2, 128], strides = [1, 1]} : vector<8x128xf32> to vector<2x128xf32>
    %477 = arith.addf %475, %476 : vector<2x128xf32>
    %cst_97 = arith.constant dense<0.000000e+00> : vector<2x128xf32>
    %478 = tpu.matmul %474, %448, %cst_97 {dimension_numbers = #tpu.dot_dimension_numbers<[1], [0], [0], [1], [0, 0, 1, 1], [], []>} : vector<2x32xf32>, vector<32x128xf32>, vector<2x128xf32> -> vector<2x128xf32>
    %479 = arith.addf %477, %478 : vector<2x128xf32>
    %480 = vector.extract_strided_slice %479 {offsets = [0, 0], sizes = [2, 96], strides = [1, 1]} : vector<2x128xf32> to vector<2x96xf32>
    %481 = arith.negf %480 : vector<2x96xf32>
    %482 = math.exp %481 : vector<2x96xf32>
    %cst_98 = arith.constant 1.000000e+00 : f32
    %483 = vector.broadcast %cst_98 : f32 to vector<2x96xf32>
    %484 = arith.addf %483, %482 : vector<2x96xf32>
    %485 = arith.divf %483, %484 : vector<2x96xf32>
    %486 = vector.extract_strided_slice %479 {offsets = [0, 96], sizes = [2, 32], strides = [1, 1]} : vector<2x128xf32> to vector<2x32xf32>
    %487 = math.tanh %486 : vector<2x32xf32>
    %488 = vector.extract_strided_slice %485 {offsets = [0, 0], sizes = [2, 32], strides = [1, 1]} : vector<2x96xf32> to vector<2x32xf32>
    %489 = vector.extract_strided_slice %485 {offsets = [0, 32], sizes = [2, 32], strides = [1, 1]} : vector<2x96xf32> to vector<2x32xf32>
    %490 = vector.extract_strided_slice %485 {offsets = [0, 64], sizes = [2, 32], strides = [1, 1]} : vector<2x96xf32> to vector<2x32xf32>
    %491 = arith.mulf %489, %472 : vector<2x32xf32>
    %492 = arith.mulf %488, %487 : vector<2x32xf32>
    %493 = arith.addf %491, %492 : vector<2x32xf32>
    %494 = math.tanh %493 : vector<2x32xf32>
    %495 = arith.mulf %490, %494 : vector<2x32xf32>
    %496 = vector.extract_strided_slice %452 {offsets = [4, 0], sizes = [2, 128], strides = [1, 1]} : vector<8x128xf32> to vector<2x128xf32>
    %497 = vector.extract_strided_slice %453 {offsets = [2, 0], sizes = [2, 128], strides = [1, 1]} : vector<8x128xf32> to vector<2x128xf32>
    %498 = arith.addf %496, %497 : vector<2x128xf32>
    %cst_99 = arith.constant dense<0.000000e+00> : vector<2x128xf32>
    %499 = tpu.matmul %495, %448, %cst_99 {dimension_numbers = #tpu.dot_dimension_numbers<[1], [0], [0], [1], [0, 0, 1, 1], [], []>} : vector<2x32xf32>, vector<32x128xf32>, vector<2x128xf32> -> vector<2x128xf32>
    %500 = arith.addf %498, %499 : vector<2x128xf32>
    %501 = vector.extract_strided_slice %500 {offsets = [0, 0], sizes = [2, 96], strides = [1, 1]} : vector<2x128xf32> to vector<2x96xf32>
    %502 = arith.negf %501 : vector<2x96xf32>
    %503 = math.exp %502 : vector<2x96xf32>
    %cst_100 = arith.constant 1.000000e+00 : f32
    %504 = vector.broadcast %cst_100 : f32 to vector<2x96xf32>
    %505 = arith.addf %504, %503 : vector<2x96xf32>
    %506 = arith.divf %504, %505 : vector<2x96xf32>
    %507 = vector.extract_strided_slice %500 {offsets = [0, 96], sizes = [2, 32], strides = [1, 1]} : vector<2x128xf32> to vector<2x32xf32>
    %508 = math.tanh %507 : vector<2x32xf32>
    %509 = vector.extract_strided_slice %506 {offsets = [0, 0], sizes = [2, 32], strides = [1, 1]} : vector<2x96xf32> to vector<2x32xf32>
    %510 = vector.extract_strided_slice %506 {offsets = [0, 32], sizes = [2, 32], strides = [1, 1]} : vector<2x96xf32> to vector<2x32xf32>
    %511 = vector.extract_strided_slice %506 {offsets = [0, 64], sizes = [2, 32], strides = [1, 1]} : vector<2x96xf32> to vector<2x32xf32>
    %512 = arith.mulf %510, %493 : vector<2x32xf32>
    %513 = arith.mulf %509, %508 : vector<2x32xf32>
    %514 = arith.addf %512, %513 : vector<2x32xf32>
    %515 = math.tanh %514 : vector<2x32xf32>
    %516 = arith.mulf %511, %515 : vector<2x32xf32>
    %517 = vector.extract_strided_slice %452 {offsets = [6, 0], sizes = [2, 128], strides = [1, 1]} : vector<8x128xf32> to vector<2x128xf32>
    %518 = vector.extract_strided_slice %453 {offsets = [0, 0], sizes = [2, 128], strides = [1, 1]} : vector<8x128xf32> to vector<2x128xf32>
    %519 = arith.addf %517, %518 : vector<2x128xf32>
    %cst_101 = arith.constant dense<0.000000e+00> : vector<2x128xf32>
    %520 = tpu.matmul %516, %448, %cst_101 {dimension_numbers = #tpu.dot_dimension_numbers<[1], [0], [0], [1], [0, 0, 1, 1], [], []>} : vector<2x32xf32>, vector<32x128xf32>, vector<2x128xf32> -> vector<2x128xf32>
    %521 = arith.addf %519, %520 : vector<2x128xf32>
    %522 = vector.extract_strided_slice %521 {offsets = [0, 0], sizes = [2, 96], strides = [1, 1]} : vector<2x128xf32> to vector<2x96xf32>
    %523 = arith.negf %522 : vector<2x96xf32>
    %524 = math.exp %523 : vector<2x96xf32>
    %cst_102 = arith.constant 1.000000e+00 : f32
    %525 = vector.broadcast %cst_102 : f32 to vector<2x96xf32>
    %526 = arith.addf %525, %524 : vector<2x96xf32>
    %527 = arith.divf %525, %526 : vector<2x96xf32>
    %528 = vector.extract_strided_slice %521 {offsets = [0, 96], sizes = [2, 32], strides = [1, 1]} : vector<2x128xf32> to vector<2x32xf32>
    %529 = math.tanh %528 : vector<2x32xf32>
    %530 = vector.extract_strided_slice %527 {offsets = [0, 0], sizes = [2, 32], strides = [1, 1]} : vector<2x96xf32> to vector<2x32xf32>
    %531 = vector.extract_strided_slice %527 {offsets = [0, 32], sizes = [2, 32], strides = [1, 1]} : vector<2x96xf32> to vector<2x32xf32>
    %532 = vector.extract_strided_slice %527 {offsets = [0, 64], sizes = [2, 32], strides = [1, 1]} : vector<2x96xf32> to vector<2x32xf32>
    %533 = arith.mulf %531, %514 : vector<2x32xf32>
    %534 = arith.mulf %530, %529 : vector<2x32xf32>
    %535 = arith.addf %533, %534 : vector<2x32xf32>
    %536 = math.tanh %535 : vector<2x32xf32>
    %537 = arith.mulf %532, %536 : vector<2x32xf32>
    %538 = vector.extract_strided_slice %474 {offsets = [0, 0], sizes = [2, 16], strides = [1, 1]} : vector<2x32xf32> to vector<2x16xf32>
    %539 = vector.extract_strided_slice %537 {offsets = [0, 16], sizes = [2, 16], strides = [1, 1]} : vector<2x32xf32> to vector<2x16xf32>
    %540 = tpu.concatenate %538, %539 in 1 : vector<2x16xf32>, vector<2x16xf32> -> vector<2x32xf32>
    %541 = vector.extract_strided_slice %495 {offsets = [0, 0], sizes = [2, 16], strides = [1, 1]} : vector<2x32xf32> to vector<2x16xf32>
    %542 = vector.extract_strided_slice %516 {offsets = [0, 16], sizes = [2, 16], strides = [1, 1]} : vector<2x32xf32> to vector<2x16xf32>
    %543 = tpu.concatenate %541, %542 in 1 : vector<2x16xf32>, vector<2x16xf32> -> vector<2x32xf32>
    %544 = vector.extract_strided_slice %516 {offsets = [0, 0], sizes = [2, 16], strides = [1, 1]} : vector<2x32xf32> to vector<2x16xf32>
    %545 = vector.extract_strided_slice %495 {offsets = [0, 16], sizes = [2, 16], strides = [1, 1]} : vector<2x32xf32> to vector<2x16xf32>
    %546 = tpu.concatenate %544, %545 in 1 : vector<2x16xf32>, vector<2x16xf32> -> vector<2x32xf32>
    %547 = vector.extract_strided_slice %537 {offsets = [0, 0], sizes = [2, 16], strides = [1, 1]} : vector<2x32xf32> to vector<2x16xf32>
    %548 = vector.extract_strided_slice %474 {offsets = [0, 16], sizes = [2, 16], strides = [1, 1]} : vector<2x32xf32> to vector<2x16xf32>
    %549 = tpu.concatenate %547, %548 in 1 : vector<2x16xf32>, vector<2x16xf32> -> vector<2x32xf32>
    %550 = tpu.concatenate %540, %543, %546, %549 in 1 : vector<2x32xf32>, vector<2x32xf32>, vector<2x32xf32>, vector<2x32xf32> -> vector<2x128xf32>
    %c0_103 = arith.constant 0 : index
    %c0_104 = arith.constant 0 : index
    %551 = vector.load %arg10[%c0_103, %c0_104] : memref<129x24xf32, #tpu.memory_space<vmem>>, vector<128x24xf32>
    %cst_105 = arith.constant dense<0.000000e+00> : vector<2x24xf32>
    %552 = tpu.matmul %550, %551, %cst_105 {dimension_numbers = #tpu.dot_dimension_numbers<[1], [0], [0], [1], [0, 0, 1, 1], [], []>} : vector<2x128xf32>, vector<128x24xf32>, vector<2x24xf32> -> vector<2x24xf32>
    %c128 = arith.constant 128 : index
    %c0_106 = arith.constant 0 : index
    %553 = vector.load %arg10[%c128, %c0_106] : memref<129x24xf32, #tpu.memory_space<vmem>>, vector<1x24xf32>
    %554 = vector.broadcast %553 : vector<1x24xf32> to vector<2x24xf32>
    %555 = arith.addf %552, %554 : vector<2x24xf32>
    %556 = arith.addf %555, %319 : vector<2x24xf32>
    %c0_107 = arith.constant 0 : index
    %c0_108 = arith.constant 0 : index
    %557 = vector.load %arg11[%c0_107, %c0_108] : memref<25x5xf32, #tpu.memory_space<vmem>>, vector<24x5xf32>
    %cst_109 = arith.constant dense<0.000000e+00> : vector<2x5xf32>
    %558 = tpu.matmul %556, %557, %cst_109 {dimension_numbers = #tpu.dot_dimension_numbers<[1], [0], [0], [1], [0, 0, 1, 1], [], []>} : vector<2x24xf32>, vector<24x5xf32>, vector<2x5xf32> -> vector<2x5xf32>
    %c24 = arith.constant 24 : index
    %c0_110 = arith.constant 0 : index
    %559 = vector.load %arg11[%c24, %c0_110] : memref<25x5xf32, #tpu.memory_space<vmem>>, vector<1x5xf32>
    %560 = vector.broadcast %559 : vector<1x5xf32> to vector<2x5xf32>
    %561 = arith.addf %558, %560 : vector<2x5xf32>
    %cst_111 = arith.constant dense<0xFF800000> : vector<2xf32>
    %562 = vector.multi_reduction <maximumf>, %561, %cst_111 [1] : vector<2x5xf32> to vector<2xf32>
    %563 = vector.shape_cast %562 : vector<2xf32> to vector<2x1xf32>
    %564 = vector.broadcast %563 : vector<2x1xf32> to vector<2x5xf32>
    %565 = arith.subf %561, %564 : vector<2x5xf32>
    %566 = math.exp %565 : vector<2x5xf32>
    %cst_112 = arith.constant dense<0.000000e+00> : vector<2xf32>
    %567 = vector.multi_reduction <add>, %566, %cst_112 [1] : vector<2x5xf32> to vector<2xf32>
    %568 = vector.shape_cast %567 : vector<2xf32> to vector<2x1xf32>
    %569 = math.log %568 : vector<2x1xf32>
    %570 = vector.broadcast %569 : vector<2x1xf32> to vector<2x5xf32>
    %571 = arith.subf %565, %570 : vector<2x5xf32>
    %c0_113 = arith.constant 0 : index
    %c0_114 = arith.constant 0 : index
    %572 = vector.load %arg12[%c0_113, %c0_114] : memref<2x5xf32, #tpu.memory_space<vmem>>, vector<2x5xf32>
    tpu.vector_store %arg12[%c0_113, %c0_114], %571 {strides = array<i32>} : memref<2x5xf32, #tpu.memory_space<vmem>>, vector<2x5xf32>,
    return
  }
}

</mosaic_0001>

<llo_original>
// kernel: spatwave_lstm_forward.1
$region0: #{spatwave_lstm_forward.1}
  #allocation0 [shape = 'u32[]', space=smem, size = 0x4, offset = 0x4, fixed_abs, tag = 'smem constant byte address 0x4 - core index']
  #allocation1 [shape = 'u32[144,128]{1,0:T(1,128)}', space=vmem, size = 0x12000, scoped, tag = 'internal scratch']
  %s0 = inlined_call_operand.vmem [shape: f32[32,4], index: 0, kind: input, shape index: {}]
  %s1 = inlined_call_operand.vmem [shape: f32[8,16], index: 1, kind: input, shape index: {}]
  %s2 = inlined_call_operand.vmem [shape: f32[1,2,32], index: 2, kind: input, shape index: {}]
  %s3 = inlined_call_operand.vmem [shape: f32[1,2,32], index: 3, kind: input, shape index: {}]
  %s4 = inlined_call_operand.vmem [shape: f32[4,2,16], index: 4, kind: input, shape index: {}]
  %s5 = inlined_call_operand.vmem [shape: f32[4,2,16], index: 5, kind: input, shape index: {}]
  %s6 = inlined_call_operand.vmem [shape: f32[41,128], index: 6, kind: input, shape index: {}]
  %s7 = inlined_call_operand.vmem [shape: f32[65,128], index: 7, kind: input, shape index: {}]
  %s8 = inlined_call_operand.vmem [shape: f32[97,128], index: 8, kind: input, shape index: {}]
  %s9 = inlined_call_operand.vmem [shape: f32[33,24], index: 9, kind: input, shape index: {}]
  %s10 = inlined_call_operand.vmem [shape: f32[129,24], index: 10, kind: input, shape index: {}]
  %s11 = inlined_call_operand.vmem [shape: f32[25,5], index: 11, kind: input, shape index: {}]
  %s12 = inlined_call_operand.hbm [shape: f32[2,5], index: 12, kind: output, shape index: {}]
  %s13 = sld [smem:[#allocation0]]
  $region58: #{spatwave_lstm_forward.1} parent=0
    _
  %s15 = ssub.s32 1, %s13
  %s16 = scalar_select 0, %s15, %s13
  $region1: #{spatwave_lstm_forward.1} parent=0
    #allocation2 [shape = 'u8[1024]{0}', space=vmem, size = 0x400, scoped, tag = 'output window, operand 0, single buffered']
    #allocation3 [shape = 's32[1]{0}', space=sflag, size = 0x4, scoped, tag = 'scoped memory for spatwave_lstm_forward.1']
    %17 = vsyncpa [#allocation3], 0
    // Predicated region
    $region2: #{spatwave_lstm_forward.1} parent=1 // pred_check
      _
    $region3: #{spatwave_lstm_forward.1} parent=1 // pred_check_branch
      %19 = sbr.rel (0) target = $region5
    $region4: #{spatwave_lstm_forward.1} parent=1 // pred_region
      _
    $region5: #{spatwave_lstm_forward.1} parent=1 // pred_fallthru
      _
    // Predicated region
    $region6: #{spatwave_lstm_forward.1} parent=1 // pred_check
      _
    $region7: #{spatwave_lstm_forward.1} parent=1 // pred_check_branch
      %21 = sbr.rel (0) target = $region9
    $region8: #{spatwave_lstm_forward.1} parent=1 // pred_region
      _
    $region9: #{spatwave_lstm_forward.1} parent=1 // pred_fallthru
      _
    // Predicated region
    $region10: #{spatwave_lstm_forward.1} parent=1 // pred_check
      _
    $region11: #{spatwave_lstm_forward.1} parent=1 // pred_check_branch
      %23 = sbr.rel (0) target = $region13
    $region12: #{spatwave_lstm_forward.1} parent=1 // pred_region
      _
    $region13: #{spatwave_lstm_forward.1} parent=1 // pred_fallthru
      _
    // Predicated region
    $region14: #{spatwave_lstm_forward.1} parent=1 // pred_check
      _
    $region15: #{spatwave_lstm_forward.1} parent=1 // pred_check_branch
      %25 = sbr.rel (0) target = $region17
    $region16: #{spatwave_lstm_forward.1} parent=1 // pred_region
      _
    $region17: #{spatwave_lstm_forward.1} parent=1 // pred_fallthru
      _
    // Predicated region
    $region18: #{spatwave_lstm_forward.1} parent=1 // pred_check
      _
    $region19: #{spatwave_lstm_forward.1} parent=1 // pred_check_branch
      %27 = sbr.rel (0) target = $region21
    $region20: #{spatwave_lstm_forward.1} parent=1 // pred_region
      _
    $region21: #{spatwave_lstm_forward.1} parent=1 // pred_fallthru
      _
    // Predicated region
    $region22: #{spatwave_lstm_forward.1} parent=1 // pred_check
      _
    $region23: #{spatwave_lstm_forward.1} parent=1 // pred_check_branch
      %29 = sbr.rel (0) target = $region25
    $region24: #{spatwave_lstm_forward.1} parent=1 // pred_region
      _
    $region25: #{spatwave_lstm_forward.1} parent=1 // pred_fallthru
      _
    // Predicated region
    $region26: #{spatwave_lstm_forward.1} parent=1 // pred_check
      _
    $region27: #{spatwave_lstm_forward.1} parent=1 // pred_check_branch
      %31 = sbr.rel (0) target = $region29
    $region28: #{spatwave_lstm_forward.1} parent=1 // pred_region
      _
    $region29: #{spatwave_lstm_forward.1} parent=1 // pred_fallthru
      _
    // Predicated region
    $region30: #{spatwave_lstm_forward.1} parent=1 // pred_check
      _
    $region31: #{spatwave_lstm_forward.1} parent=1 // pred_check_branch
      %33 = sbr.rel (0) target = $region33
    $region32: #{spatwave_lstm_forward.1} parent=1 // pred_region
      _
    $region33: #{spatwave_lstm_forward.1} parent=1 // pred_fallthru
      _
    // Predicated region
    $region34: #{spatwave_lstm_forward.1} parent=1 // pred_check
      _
    $region35: #{spatwave_lstm_forward.1} parent=1 // pred_check_branch
      %35 = sbr.rel (0) target = $region37
    $region36: #{spatwave_lstm_forward.1} parent=1 // pred_region
      _
    $region37: #{spatwave_lstm_forward.1} parent=1 // pred_fallthru
      _
    // Predicated region
    $region38: #{spatwave_lstm_forward.1} parent=1 // pred_check
      _
    $region39: #{spatwave_lstm_forward.1} parent=1 // pred_check_branch
      %37 = sbr.rel (0) target = $region41
    $region40: #{spatwave_lstm_forward.1} parent=1 // pred_region
      _
    $region41: #{spatwave_lstm_forward.1} parent=1 // pred_fallthru
      _
    // Predicated region
    $region42: #{spatwave_lstm_forward.1} parent=1 // pred_check
      _
    $region43: #{spatwave_lstm_forward.1} parent=1 // pred_check_branch
      %39 = sbr.rel (0) target = $region45
    $region44: #{spatwave_lstm_forward.1} parent=1 // pred_region
      _
    $region45: #{spatwave_lstm_forward.1} parent=1 // pred_fallthru
      _
    // Predicated region
    $region46: #{spatwave_lstm_forward.1} parent=1 // pred_check
      _
    $region47: #{spatwave_lstm_forward.1} parent=1 // pred_check_branch
      %41 = sbr.rel (0) target = $region49
    $region48: #{spatwave_lstm_forward.1} parent=1 // pred_region
      _
    $region49: #{spatwave_lstm_forward.1} parent=1 // pred_fallthru
      _
    %v42 = vld [vmem:[%s6] sm:$0xf]
    %v43 = vld [vmem:[%s6 + $0x8] sm:$0xff]
    %v44 = vld [vmem:[%s6 + $0x10] sm:$0xff]
    %v45 = vld [vmem:[%s6 + $0x18] sm:$0xff]
    %v46 = vld [vmem:[%s6 + $0x20] sm:$0xff]
    %v47 = vld [vmem:[%s6 + $0x28] sm:$0x1]
    %v48 = vld [vmem:[%s0] sm:$0xff]
    %v49 = vld [vmem:[%s0 + $0x8] sm:$0xff]
    %v50 = vld [vmem:[%s0 + $0x10] sm:$0xff]
    %v51 = vld [vmem:[%s0 + $0x18] sm:$0xff]
    %v52 = vlaneseq
    %v53 = vshrl.u32 %v52, 7
    %v54 = vsub.s32 0, %v53
    %v55 = vrot.slane %v47, %v54
    %vm56 = vcmask 31744
    %v58 = vsel %vm56, %v48, 0
    %v61 = vsel %vm56, %v49, 0
    %v64 = vsel %vm56, %v50, 0
    %v67 = vsel %vm56, %v51, 0
    %vm69 = vcmask 1043456
    %v71 = vsel %vm69, %v42, 0
    %73 = vmatprep.subr.mxu0 0.0
    %74 = vmatpush1.msra.mxu0 0.0
    %75 = vmatprep.subr.mxu0 0.0
    %76 = vmatpush1.msra.mxu0 0.0
    %77 = vmatprep.subr.mxu0 0.0
    %78 = vmatpush1.msra.mxu0 0.0
    %79 = vmatprep.subr.mxu0 0.0
    %80 = vmatpush1.msra.mxu0 0.0
    %81 = vmatprep.subr.mxu0 0.0
    %82 = vmatpush1.msra.mxu0 0.0
    %83 = vmatprep.subr.mxu0 0.0
    %84 = vmatpush1.msra.mxu0 0.0
    %85 = vmatprep.subr.mxu0 0.0
    %86 = vmatpush1.msra.mxu0 0.0
    %87 = vmatprep.subr.mxu0 0.0
    %88 = vmatpush1.msra.mxu0 0.0
    %89 = vmatprep.subr.mxu0 0.0
    %90 = vmatpush1.msra.mxu0 0.0
    %91 = vmatprep.subr.mxu0 0.0
    %92 = vmatpush1.msra.mxu0 0.0
    %93 = vmatprep.subr.mxu0 0.0
    %94 = vmatpush1.msra.mxu0 0.0
    %95 = vmatprep.subr.mxu0 0.0
    %96 = vmatpush1.msra.mxu0 0.0
    %97 = vmatprep.subr.mxu0 0.0
    %98 = vmatpush1.msra.mxu0 0.0
    %99 = vmatprep.subr.mxu0 0.0
    %100 = vmatpush1.msra.mxu0 0.0
    %101 = vmatprep.subr.mxu0 0.0
    %102 = vmatpush1.msra.mxu0 0.0
    %103 = vmatprep.subr.mxu0 0.0
    %104 = vmatpush1.msra.mxu0 %v71
    %105 = vmatprep.subr.mxu0 0.0
    %106 = vmatpush2.msra.mxu0 0.0
    %107 = vmatprep.subr.mxu0 0.0
    %108 = vmatpush2.msra.mxu0 0.0
    %109 = vmatprep.subr.mxu0 0.0
    %110 = vmatpush2.msra.mxu0 0.0
    %111 = vmatprep.subr.mxu0 0.0
    %112 = vmatpush2.msra.mxu0 0.0
    %113 = vmatprep.subr.mxu0 0.0
    %114 = vmatpush2.msra.mxu0 0.0
    %115 = vmatprep.subr.mxu0 0.0
    %116 = vmatpush2.msra.mxu0 0.0
    %117 = vmatprep.subr.mxu0 0.0
    %118 = vmatpush2.msra.mxu0 0.0
    %119 = vmatprep.subr.mxu0 0.0
    %120 = vmatpush2.msra.mxu0 0.0
    %121 = vmatprep.subr.mxu0 0.0
    %122 = vmatpush2.msra.mxu0 0.0
    %123 = vmatprep.subr.mxu0 0.0
    %124 = vmatpush2.msra.mxu0 0.0
    %125 = vmatprep.subr.mxu0 0.0
    %126 = vmatpush2.msra.mxu0 0.0
    %127 = vmatprep.subr.mxu0 0.0
    %128 = vmatpush2.msra.mxu0 0.0
    %129 = vmatprep.subr.mxu0 0.0
    %130 = vmatpush2.msra.mxu0 0.0
    %131 = vmatprep.subr.mxu0 0.0
    %132 = vmatpush2.msra.mxu0 0.0
    %133 = vmatprep.subr.mxu0 0.0
    %134 = vmatpush2.msra.mxu0 0.0
    %135 = vmatprep.subr.mxu0 0.0
    %136 = vmatpush2.msra.mxu0 0.0
    %137 = vmatprep.mubr.f32.mxu0 0.0
    %138 = vmatmul.mubr.f32.gmra.mxu0 %v58
    %v139 = vpop.f32.mrf.mxu0
    %v140 = vadd.f32 %v55, %v139
    %v141 = vpop.f32.mrf.mxu0
    %142 = vmatprep.mubr.f32.mxu0 0.0
    %143 = vmatmul.mubr.f32.gmra.mxu0 %v61
    %v144 = vpop.f32.mrf.mxu0
    %v145 = vadd.f32 %v55, %v144
    %v146 = vpop.f32.mrf.mxu0
    %147 = vmatprep.mubr.f32.mxu0 0.0
    %148 = vmatmul.mubr.f32.gmra.mxu0 %v64
    %v149 = vpop.f32.mrf.mxu0
    %v150 = vadd.f32 %v55, %v149
    %v151 = vpop.f32.mrf.mxu0
    %152 = vmatprep.mubr.f32.mxu0 0.0
    %153 = vmatmul.mubr.f32.gmra.mxu0 %v67
    %v154 = vpop.f32.mrf.mxu0
    %v155 = vadd.f32 %v55, %v154
    %v156 = vpop.f32.mrf.mxu0
    %157 = vdwg.mxu0
    %v158 = vld [vmem:[%s2] sm:$0x3]
    %v159 = vld [vmem:[%s3] sm:$0x3]
    %vm160 = vcmask 261120
    %v162 = vsel %vm160, %v158, 0
    %164 = vmatprep.subr.mxu0 0.0
    %165 = vmatpush1.msra.mxu0 0.0
    %166 = vmatprep.subr.mxu0 0.0
    %167 = vmatpush1.msra.mxu0 0.0
    %168 = vmatprep.subr.mxu0 0.0
    %169 = vmatpush1.msra.mxu0 0.0
    %170 = vmatprep.subr.mxu0 0.0
    %171 = vmatpush1.msra.mxu0 0.0
    %172 = vmatprep.subr.mxu0 0.0
    %173 = vmatpush1.msra.mxu0 0.0
    %174 = vmatprep.subr.mxu0 0.0
    %175 = vmatpush1.msra.mxu0 0.0
    %176 = vmatprep.subr.mxu0 0.0
    %177 = vmatpush1.msra.mxu0 0.0
    %178 = vmatprep.subr.mxu0 0.0
    %179 = vmatpush1.msra.mxu0 0.0
    %180 = vmatprep.subr.mxu0 0.0
    %181 = vmatpush1.msra.mxu0 0.0
    %182 = vmatprep.subr.mxu0 0.0
    %183 = vmatpush1.msra.mxu0 0.0
    %184 = vmatprep.subr.mxu0 0.0
    %185 = vmatpush1.msra.mxu0 0.0
    %186 = vmatprep.subr.mxu0 0.0
    %187 = vmatpush1.msra.mxu0 0.0
    %188 = vmatprep.subr.mxu0 0.0
    %189 = vmatpush1.msra.mxu0 %v46
    %190 = vmatprep.subr.mxu0 0.0
    %191 = vmatpush1.msra.mxu0 %v45
    %192 = vmatprep.subr.mxu0 0.0
    %193 = vmatpush1.msra.mxu0 %v44
    %194 = vmatprep.subr.mxu0 0.0
    %195 = vmatpush1.msra.mxu0 %v43
    %196 = vmatprep.subr.mxu0 0.0
    %197 = vmatpush2.msra.mxu0 0.0
    %198 = vmatprep.subr.mxu0 0.0
    %199 = vmatpush2.msra.mxu0 0.0
    %200 = vmatprep.subr.mxu0 0.0
    %201 = vmatpush2.msra.mxu0 0.0
    %202 = vmatprep.subr.mxu0 0.0
    %203 = vmatpush2.msra.mxu0 0.0
    %204 = vmatprep.subr.mxu0 0.0
    %205 = vmatpush2.msra.mxu0 0.0
    %206 = vmatprep.subr.mxu0 0.0
    %207 = vmatpush2.msra.mxu0 0.0
    %208 = vmatprep.subr.mxu0 0.0
    %209 = vmatpush2.msra.mxu0 0.0
    %210 = vmatprep.subr.mxu0 0.0
    %211 = vmatpush2.msra.mxu0 0.0
    %212 = vmatprep.subr.mxu0 0.0
    %213 = vmatpush2.msra.mxu0 0.0
    %214 = vmatprep.subr.mxu0 0.0
    %215 = vmatpush2.msra.mxu0 0.0
    %216 = vmatprep.subr.mxu0 0.0
    %217 = vmatpush2.msra.mxu0 0.0
    %218 = vmatprep.subr.mxu0 0.0
    %219 = vmatpush2.msra.mxu0 0.0
    %220 = vmatprep.subr.mxu0 0.0
    %221 = vmatpush2.msra.mxu0 0.0
    %222 = vmatprep.subr.mxu0 0.0
    %223 = vmatpush2.msra.mxu0 0.0
    %224 = vmatprep.subr.mxu0 0.0
    %225 = vmatpush2.msra.mxu0 0.0
    %226 = vmatprep.subr.mxu0 0.0
    %227 = vmatpush2.msra.mxu0 0.0
    %228 = vmatprep.mubr.f32.mxu0 0.0
    %229 = vmatmul.mubr.f32.gmra.mxu0 %v162
    %v230 = vpop.f32.mrf.mxu0
    %v231 = vadd.f32 0.0, %v230
    %v232 = vpop.f32.mrf.mxu0
    %233 = vdwg.mxu0
    %v234 = vadd.f32 %v140, %v231
    %v235 = vxor.u32 %v234, 2147483648
    %v236 = vmul.f32 %v235, 1.442695
    %v237 = vpow.pop %v236
    %v238 = vadd.f32 %v237, 1.0
    %v239 = vrcp.pop %v238
    %v240 = vmul.f32 1.0, %v239
    %v241 = vtanh.pop %v234
    %243 = vrot.lane.b32.xlu0 %v159, 32
    %v244 = vpop.permute.xlu0 %243
    %v246 = vmul.f32 %v240, %v244
    %248 = vrot.lane.b32.xlu0 %v241, 32
    %v249 = vpop.permute.xlu0 %248
    %v251 = vmul.f32 %v240, %v249
    %253 = vrot.lane.b32.xlu0 %v251, 32
    %v254 = vpop.permute.xlu0 %253
    %v256 = vadd.f32 %v246, %v254
    %v257 = vtanh.pop %v256
    %259 = vrot.lane.b32.xlu0 %v257, 32
    %v260 = vpop.permute.xlu0 %259
    %v262 = vmul.f32 %v240, %v260
    %264 = vrot.lane.b32.xlu0 %v262, 64
    %v265 = vpop.permute.xlu0 %264
    %v266 = vsel %vm160, %v265, 0
    %268 = vmatprep.subr.mxu0 0.0
    %269 = vmatpush1.msra.mxu0 0.0
    %270 = vmatprep.subr.mxu0 0.0
    %271 = vmatpush1.msra.mxu0 0.0
    %272 = vmatprep.subr.mxu0 0.0
    %273 = vmatpush1.msra.mxu0 0.0
    %274 = vmatprep.subr.mxu0 0.0
    %275 = vmatpush1.msra.mxu0 0.0
    %276 = vmatprep.subr.mxu0 0.0
    %277 = vmatpush1.msra.mxu0 0.0
    %278 = vmatprep.subr.mxu0 0.0
    %279 = vmatpush1.msra.mxu0 0.0
    %280 = vmatprep.subr.mxu0 0.0
    %281 = vmatpush1.msra.mxu0 0.0
    %282 = vmatprep.subr.mxu0 0.0
    %283 = vmatpush1.msra.mxu0 0.0
    %284 = vmatprep.subr.mxu0 0.0
    %285 = vmatpush1.msra.mxu0 0.0
    %286 = vmatprep.subr.mxu0 0.0
    %287 = vmatpush1.msra.mxu0 0.0
    %288 = vmatprep.subr.mxu0 0.0
    %289 = vmatpush1.msra.mxu0 0.0
    %290 = vmatprep.subr.mxu0 0.0
    %291 = vmatpush1.msra.mxu0 0.0
    %292 = vmatprep.subr.mxu0 0.0
    %293 = vmatpush1.msra.mxu0 %v46
    %294 = vmatprep.subr.mxu0 0.0
    %295 = vmatpush1.msra.mxu0 %v45
    %296 = vmatprep.subr.mxu0 0.0
    %297 = vmatpush1.msra.mxu0 %v44
    %298 = vmatprep.subr.mxu0 0.0
    %299 = vmatpush1.msra.mxu0 %v43
    %300 = vmatprep.subr.mxu0 0.0
    %301 = vmatpush2.msra.mxu0 0.0
    %302 = vmatprep.subr.mxu0 0.0
    %303 = vmatpush2.msra.mxu0 0.0
    %304 = vmatprep.subr.mxu0 0.0
    %305 = vmatpush2.msra.mxu0 0.0
    %306 = vmatprep.subr.mxu0 0.0
    %307 = vmatpush2.msra.mxu0 0.0
    %308 = vmatprep.subr.mxu0 0.0
    %309 = vmatpush2.msra.mxu0 0.0
    %310 = vmatprep.subr.mxu0 0.0
    %311 = vmatpush2.msra.mxu0 0.0
    %312 = vmatprep.subr.mxu0 0.0
    %313 = vmatpush2.msra.mxu0 0.0
    %314 = vmatprep.subr.mxu0 0.0
    %315 = vmatpush2.msra.mxu0 0.0
    %316 = vmatprep.subr.mxu0 0.0
    %317 = vmatpush2.msra.mxu0 0.0
    %318 = vmatprep.subr.mxu0 0.0
    %319 = vmatpush2.msra.mxu0 0.0
    %320 = vmatprep.subr.mxu0 0.0
    %321 = vmatpush2.msra.mxu0 0.0
    %322 = vmatprep.subr.mxu0 0.0
    %323 = vmatpush2.msra.mxu0 0.0
    %324 = vmatprep.subr.mxu0 0.0
    %325 = vmatpush2.msra.mxu0 0.0
    %326 = vmatprep.subr.mxu0 0.0
    %327 = vmatpush2.msra.mxu0 0.0
    %328 = vmatprep.subr.mxu0 0.0
    %329 = vmatpush2.msra.mxu0 0.0
    %330 = vmatprep.subr.mxu0 0.0
    %331 = vmatpush2.msra.mxu0 0.0
    %332 = vmatprep.mubr.f32.mxu0 0.0
    %333 = vmatmul.mubr.f32.gmra.mxu0 %v266
    %v334 = vpop.f32.mrf.mxu0
    %v335 = vadd.f32 0.0, %v334
    %v336 = vpop.f32.mrf.mxu0
    %337 = vdwg.mxu0
    %v339 = vrot.slane %v335, 6
    %v341 = vadd.f32 %v140, %v339
    %v342 = vxor.u32 %v341, 2147483648
    %v343 = vmul.f32 %v342, 1.442695
    %v344 = vpow.pop %v343
    %v345 = vadd.f32 %v344, 1.0
    %v346 = vrcp.pop %v345
    %v347 = vmul.f32 1.0, %v346
    %v348 = vtanh.pop %v341
    %v350 = vrot.slane %v256, 6
    %v352 = vmul.f32 %v347, %v350
    %354 = vrot.lane.b32.xlu0 %v348, 32
    %v355 = vpop.permute.xlu0 %354
    %v357 = vmul.f32 %v347, %v355
    %359 = vrot.lane.b32.xlu0 %v357, 32
    %v360 = vpop.permute.xlu0 %359
    %v362 = vadd.f32 %v352, %v360
    %v363 = vtanh.pop %v362
    %365 = vrot.lane.b32.xlu0 %v363, 32
    %v366 = vpop.permute.xlu0 %365
    %v368 = vmul.f32 %v347, %v366
    %v370 = vrot.slane %v368, 2
    %371 = vrot.lane.b32.xlu0 %v370, 64
    %v372 = vpop.permute.xlu0 %371
    %v373 = vsel %vm160, %v372, 0
    %375 = vmatprep.subr.mxu0 0.0
    %376 = vmatpush1.msra.mxu0 0.0
    %377 = vmatprep.subr.mxu0 0.0
    %378 = vmatpush1.msra.mxu0 0.0
    %379 = vmatprep.subr.mxu0 0.0
    %380 = vmatpush1.msra.mxu0 0.0
    %381 = vmatprep.subr.mxu0 0.0
    %382 = vmatpush1.msra.mxu0 0.0
    %383 = vmatprep.subr.mxu0 0.0
    %384 = vmatpush1.msra.mxu0 0.0
    %385 = vmatprep.subr.mxu0 0.0
    %386 = vmatpush1.msra.mxu0 0.0
    %387 = vmatprep.subr.mxu0 0.0
    %388 = vmatpush1.msra.mxu0 0.0
    %389 = vmatprep.subr.mxu0 0.0
    %390 = vmatpush1.msra.mxu0 0.0
    %391 = vmatprep.subr.mxu0 0.0
    %392 = vmatpush1.msra.mxu0 0.0
    %393 = vmatprep.subr.mxu0 0.0
    %394 = vmatpush1.msra.mxu0 0.0
    %395 = vmatprep.subr.mxu0 0.0
    %396 = vmatpush1.msra.mxu0 0.0
    %397 = vmatprep.subr.mxu0 0.0
    %398 = vmatpush1.msra.mxu0 0.0
    %399 = vmatprep.subr.mxu0 0.0
    %400 = vmatpush1.msra.mxu0 %v46
    %401 = vmatprep.subr.mxu0 0.0
    %402 = vmatpush1.msra.mxu0 %v45
    %403 = vmatprep.subr.mxu0 0.0
    %404 = vmatpush1.msra.mxu0 %v44
    %405 = vmatprep.subr.mxu0 0.0
    %406 = vmatpush1.msra.mxu0 %v43
    %407 = vmatprep.subr.mxu0 0.0
    %408 = vmatpush2.msra.mxu0 0.0
    %409 = vmatprep.subr.mxu0 0.0
    %410 = vmatpush2.msra.mxu0 0.0
    %411 = vmatprep.subr.mxu0 0.0
    %412 = vmatpush2.msra.mxu0 0.0
    %413 = vmatprep.subr.mxu0 0.0
    %414 = vmatpush2.msra.mxu0 0.0
    %415 = vmatprep.subr.mxu0 0.0
    %416 = vmatpush2.msra.mxu0 0.0
    %417 = vmatprep.subr.mxu0 0.0
    %418 = vmatpush2.msra.mxu0 0.0
    %419 = vmatprep.subr.mxu0 0.0
    %420 = vmatpush2.msra.mxu0 0.0
    %421 = vmatprep.subr.mxu0 0.0
    %422 = vmatpush2.msra.mxu0 0.0
    %423 = vmatprep.subr.mxu0 0.0
    %424 = vmatpush2.msra.mxu0 0.0
    %425 = vmatprep.subr.mxu0 0.0
    %426 = vmatpush2.msra.mxu0 0.0
    %427 = vmatprep.subr.mxu0 0.0
    %428 = vmatpush2.msra.mxu0 0.0
    %429 = vmatprep.subr.mxu0 0.0
    %430 = vmatpush2.msra.mxu0 0.0
    %431 = vmatprep.subr.mxu0 0.0
    %432 = vmatpush2.msra.mxu0 0.0
    %433 = vmatprep.subr.mxu0 0.0
    %434 = vmatpush2.msra.mxu0 0.0
    %435 = vmatprep.subr.mxu0 0.0
    %436 = vmatpush2.msra.mxu0 0.0
    %437 = vmatprep.subr.mxu0 0.0
    %438 = vmatpush2.msra.mxu0 0.0
    %439 = vmatprep.mubr.f32.mxu0 0.0
    %440 = vmatmul.mubr.f32.gmra.mxu0 %v373
    %v441 = vpop.f32.mrf.mxu0
    %v442 = vadd.f32 0.0, %v441
    %v443 = vpop.f32.mrf.mxu0
    %444 = vdwg.mxu0
    %v446 = vrot.slane %v442, 4
    %v448 = vadd.f32 %v140, %v446
    %v449 = vxor.u32 %v448, 2147483648
    %v450 = vmul.f32 %v449, 1.442695
    %v451 = vpow.pop %v450
    %v452 = vadd.f32 %v451, 1.0
    %v453 = vrcp.pop %v452
    %v454 = vmul.f32 1.0, %v453
    %v455 = vtanh.pop %v448
    %v457 = vrot.slane %v362, 6
    %v459 = vmul.f32 %v454, %v457
    %461 = vrot.lane.b32.xlu0 %v455, 32
    %v462 = vpop.permute.xlu0 %461
    %v464 = vmul.f32 %v454, %v462
    %466 = vrot.lane.b32.xlu0 %v464, 32
    %v467 = vpop.permute.xlu0 %466
    %v469 = vadd.f32 %v459, %v467
    %v470 = vtanh.pop %v469
    %472 = vrot.lane.b32.xlu0 %v470, 32
    %v473 = vpop.permute.xlu0 %472
    %v475 = vmul.f32 %v454, %v473
    %v477 = vrot.slane %v475, 4
    %478 = vrot.lane.b32.xlu0 %v477, 64
    %v479 = vpop.permute.xlu0 %478
    %v480 = vsel %vm160, %v479, 0
    %482 = vmatprep.subr.mxu0 0.0
    %483 = vmatpush1.msra.mxu0 0.0
    %484 = vmatprep.subr.mxu0 0.0
    %485 = vmatpush1.msra.mxu0 0.0
    %486 = vmatprep.subr.mxu0 0.0
    %487 = vmatpush1.msra.mxu0 0.0
    %488 = vmatprep.subr.mxu0 0.0
    %489 = vmatpush1.msra.mxu0 0.0
    %490 = vmatprep.subr.mxu0 0.0
    %491 = vmatpush1.msra.mxu0 0.0
    %492 = vmatprep.subr.mxu0 0.0
    %493 = vmatpush1.msra.mxu0 0.0
    %494 = vmatprep.subr.mxu0 0.0
    %495 = vmatpush1.msra.mxu0 0.0
    %496 = vmatprep.subr.mxu0 0.0
    %497 = vmatpush1.msra.mxu0 0.0
    %498 = vmatprep.subr.mxu0 0.0
    %499 = vmatpush1.msra.mxu0 0.0
    %500 = vmatprep.subr.mxu0 0.0
    %501 = vmatpush1.msra.mxu0 0.0
    %502 = vmatprep.subr.mxu0 0.0
    %503 = vmatpush1.msra.mxu0 0.0
    %504 = vmatprep.subr.mxu0 0.0
    %505 = vmatpush1.msra.mxu0 0.0
    %506 = vmatprep.subr.mxu0 0.0
    %507 = vmatpush1.msra.mxu0 %v46
    %508 = vmatprep.subr.mxu0 0.0
    %509 = vmatpush1.msra.mxu0 %v45
    %510 = vmatprep.subr.mxu0 0.0
    %511 = vmatpush1.msra.mxu0 %v44
    %512 = vmatprep.subr.mxu0 0.0
    %513 = vmatpush1.msra.mxu0 %v43
    %514 = vmatprep.subr.mxu0 0.0
    %515 = vmatpush2.msra.mxu0 0.0
    %516 = vmatprep.subr.mxu0 0.0
    %517 = vmatpush2.msra.mxu0 0.0
    %518 = vmatprep.subr.mxu0 0.0
    %519 = vmatpush2.msra.mxu0 0.0
    %520 = vmatprep.subr.mxu0 0.0
    %521 = vmatpush2.msra.mxu0 0.0
    %522 = vmatprep.subr.mxu0 0.0
    %523 = vmatpush2.msra.mxu0 0.0
    %524 = vmatprep.subr.mxu0 0.0
    %525 = vmatpush2.msra.mxu0 0.0
    %526 = vmatprep.subr.mxu0 0.0
    %527 = vmatpush2.msra.mxu0 0.0
    %528 = vmatprep.subr.mxu0 0.0
    %529 = vmatpush2.msra.mxu0 0.0
    %530 = vmatprep.subr.mxu0 0.0
    %531 = vmatpush2.msra.mxu0 0.0
    %532 = vmatprep.subr.mxu0 0.0
    %533 = vmatpush2.msra.mxu0 0.0
    %534 = vmatprep.subr.mxu0 0.0
    %535 = vmatpush2.msra.mxu0 0.0
    %536 = vmatprep.subr.mxu0 0.0
    %537 = vmatpush2.msra.mxu0 0.0
    %538 = vmatprep.subr.mxu0 0.0
    %539 = vmatpush2.msra.mxu0 0.0
    %540 = vmatprep.subr.mxu0 0.0
    %541 = vmatpush2.msra.mxu0 0.0
    %542 = vmatprep.subr.mxu0 0.0
    %543 = vmatpush2.msra.mxu0 0.0
    %544 = vmatprep.subr.mxu0 0.0
    %545 = vmatpush2.msra.mxu0 0.0
    %546 = vmatprep.mubr.f32.mxu0 0.0
    %547 = vmatmul.mubr.f32.gmra.mxu0 %v480
    %v548 = vpop.f32.mrf.mxu0
    %v549 = vadd.f32 0.0, %v548
    %v550 = vpop.f32.mrf.mxu0
    %551 = vdwg.mxu0
    %v553 = vrot.slane %v549, 2
    %v555 = vadd.f32 %v140, %v553
    %v556 = vxor.u32 %v555, 2147483648
    %v557 = vmul.f32 %v556, 1.442695
    %v558 = vpow.pop %v557
    %v559 = vadd.f32 %v558, 1.0
    %v560 = vrcp.pop %v559
    %v561 = vmul.f32 1.0, %v560
    %v562 = vtanh.pop %v555
    %v564 = vrot.slane %v469, 6
    %v566 = vmul.f32 %v561, %v564
    %568 = vrot.lane.b32.xlu0 %v562, 32
    %v569 = vpop.permute.xlu0 %568
    %v571 = vmul.f32 %v561, %v569
    %573 = vrot.lane.b32.xlu0 %v571, 32
    %v574 = vpop.permute.xlu0 %573
    %v576 = vadd.f32 %v566, %v574
    %v577 = vtanh.pop %v576
    %579 = vrot.lane.b32.xlu0 %v577, 32
    %v580 = vpop.permute.xlu0 %579
    %v582 = vmul.f32 %v561, %v580
    %v584 = vrot.slane %v582, 6
    %585 = vrot.lane.b32.xlu0 %v584, 64
    %v586 = vpop.permute.xlu0 %585
    %v587 = vsel %vm160, %v586, 0
    %589 = vmatprep.subr.mxu0 0.0
    %590 = vmatpush1.msra.mxu0 0.0
    %591 = vmatprep.subr.mxu0 0.0
    %592 = vmatpush1.msra.mxu0 0.0
    %593 = vmatprep.subr.mxu0 0.0
    %594 = vmatpush1.msra.mxu0 0.0
    %595 = vmatprep.subr.mxu0 0.0
    %596 = vmatpush1.msra.mxu0 0.0
    %597 = vmatprep.subr.mxu0 0.0
    %598 = vmatpush1.msra.mxu0 0.0
    %599 = vmatprep.subr.mxu0 0.0
    %600 = vmatpush1.msra.mxu0 0.0
    %601 = vmatprep.subr.mxu0 0.0
    %602 = vmatpush1.msra.mxu0 0.0
    %603 = vmatprep.subr.mxu0 0.0
    %604 = vmatpush1.msra.mxu0 0.0
    %605 = vmatprep.subr.mxu0 0.0
    %606 = vmatpush1.msra.mxu0 0.0
    %607 = vmatprep.subr.mxu0 0.0
    %608 = vmatpush1.msra.mxu0 0.0
    %609 = vmatprep.subr.mxu0 0.0
    %610 = vmatpush1.msra.mxu0 0.0
    %611 = vmatprep.subr.mxu0 0.0
    %612 = vmatpush1.msra.mxu0 0.0
    %613 = vmatprep.subr.mxu0 0.0
    %614 = vmatpush1.msra.mxu0 %v46
    %615 = vmatprep.subr.mxu0 0.0
    %616 = vmatpush1.msra.mxu0 %v45
    %617 = vmatprep.subr.mxu0 0.0
    %618 = vmatpush1.msra.mxu0 %v44
    %619 = vmatprep.subr.mxu0 0.0
    %620 = vmatpush1.msra.mxu0 %v43
    %621 = vmatprep.subr.mxu0 0.0
    %622 = vmatpush2.msra.mxu0 0.0
    %623 = vmatprep.subr.mxu0 0.0
    %624 = vmatpush2.msra.mxu0 0.0
    %625 = vmatprep.subr.mxu0 0.0
    %626 = vmatpush2.msra.mxu0 0.0
    %627 = vmatprep.subr.mxu0 0.0
    %628 = vmatpush2.msra.mxu0 0.0
    %629 = vmatprep.subr.mxu0 0.0
    %630 = vmatpush2.msra.mxu0 0.0
    %631 = vmatprep.subr.mxu0 0.0
    %632 = vmatpush2.msra.mxu0 0.0
    %633 = vmatprep.subr.mxu0 0.0
    %634 = vmatpush2.msra.mxu0 0.0
    %635 = vmatprep.subr.mxu0 0.0
    %636 = vmatpush2.msra.mxu0 0.0
    %637 = vmatprep.subr.mxu0 0.0
    %638 = vmatpush2.msra.mxu0 0.0
    %639 = vmatprep.subr.mxu0 0.0
    %640 = vmatpush2.msra.mxu0 0.0
    %641 = vmatprep.subr.mxu0 0.0
    %642 = vmatpush2.msra.mxu0 0.0
    %643 = vmatprep.subr.mxu0 0.0
    %644 = vmatpush2.msra.mxu0 0.0
    %645 = vmatprep.subr.mxu0 0.0
    %646 = vmatpush2.msra.mxu0 0.0
    %647 = vmatprep.subr.mxu0 0.0
    %648 = vmatpush2.msra.mxu0 0.0
    %649 = vmatprep.subr.mxu0 0.0
    %650 = vmatpush2.msra.mxu0 0.0
    %651 = vmatprep.subr.mxu0 0.0
    %652 = vmatpush2.msra.mxu0 0.0
    %653 = vmatprep.mubr.f32.mxu0 0.0
    %654 = vmatmul.mubr.f32.gmra.mxu0 %v587
    %v655 = vpop.f32.mrf.mxu0
    %v656 = vadd.f32 0.0, %v655
    %v657 = vpop.f32.mrf.mxu0
    %658 = vdwg.mxu0
    %v659 = vadd.f32 %v145, %v656
    %v660 = vxor.u32 %v659, 2147483648
    %v661 = vmul.f32 %v660, 1.442695
    %v662 = vpow.pop %v661
    %v663 = vadd.f32 %v662, 1.0
    %v664 = vrcp.pop %v663
    %v665 = vmul.f32 1.0, %v664
    %v666 = vtanh.pop %v659
    %v668 = vrot.slane %v576, 6
    %v670 = vmul.f32 %v665, %v668
    %672 = vrot.lane.b32.xlu0 %v666, 32
    %v673 = vpop.permute.xlu0 %672
    %v675 = vmul.f32 %v665, %v673
    %677 = vrot.lane.b32.xlu0 %v675, 32
    %v678 = vpop.permute.xlu0 %677
    %v680 = vadd.f32 %v670, %v678
    %v681 = vtanh.pop %v680
    %683 = vrot.lane.b32.xlu0 %v681, 32
    %v684 = vpop.permute.xlu0 %683
    %v686 = vmul.f32 %v665, %v684
    %688 = vrot.lane.b32.xlu0 %v686, 64
    %v689 = vpop.permute.xlu0 %688
    %v690 = vsel %vm160, %v689, 0
    %692 = vmatprep.subr.mxu0 0.0
    %693 = vmatpush1.msra.mxu0 0.0
    %694 = vmatprep.subr.mxu0 0.0
    %695 = vmatpush1.msra.mxu0 0.0
    %696 = vmatprep.subr.mxu0 0.0
    %697 = vmatpush1.msra.mxu0 0.0
    %698 = vmatprep.subr.mxu0 0.0
    %699 = vmatpush1.msra.mxu0 0.0
    %700 = vmatprep.subr.mxu0 0.0
    %701 = vmatpush1.msra.mxu0 0.0
    %702 = vmatprep.subr.mxu0 0.0
    %703 = vmatpush1.msra.mxu0 0.0
    %704 = vmatprep.subr.mxu0 0.0
    %705 = vmatpush1.msra.mxu0 0.0
    %706 = vmatprep.subr.mxu0 0.0
    %707 = vmatpush1.msra.mxu0 0.0
    %708 = vmatprep.subr.mxu0 0.0
    %709 = vmatpush1.msra.mxu0 0.0
    %710 = vmatprep.subr.mxu0 0.0
    %711 = vmatpush1.msra.mxu0 0.0
    %712 = vmatprep.subr.mxu0 0.0
    %713 = vmatpush1.msra.mxu0 0.0
    %714 = vmatprep.subr.mxu0 0.0
    %715 = vmatpush1.msra.mxu0 0.0
    %716 = vmatprep.subr.mxu0 0.0
    %717 = vmatpush1.msra.mxu0 %v46
    %718 = vmatprep.subr.mxu0 0.0
    %719 = vmatpush1.msra.mxu0 %v45
    %720 = vmatprep.subr.mxu0 0.0
    %721 = vmatpush1.msra.mxu0 %v44
    %722 = vmatprep.subr.mxu0 0.0
    %723 = vmatpush1.msra.mxu0 %v43
    %724 = vmatprep.subr.mxu0 0.0
    %725 = vmatpush2.msra.mxu0 0.0
    %726 = vmatprep.subr.mxu0 0.0
    %727 = vmatpush2.msra.mxu0 0.0
    %728 = vmatprep.subr.mxu0 0.0
    %729 = vmatpush2.msra.mxu0 0.0
    %730 = vmatprep.subr.mxu0 0.0
    %731 = vmatpush2.msra.mxu0 0.0
    %732 = vmatprep.subr.mxu0 0.0
    %733 = vmatpush2.msra.mxu0 0.0
    %734 = vmatprep.subr.mxu0 0.0
    %735 = vmatpush2.msra.mxu0 0.0
    %736 = vmatprep.subr.mxu0 0.0
    %737 = vmatpush2.msra.mxu0 0.0
    %738 = vmatprep.subr.mxu0 0.0
    %739 = vmatpush2.msra.mxu0 0.0
    %740 = vmatprep.subr.mxu0 0.0
    %741 = vmatpush2.msra.mxu0 0.0
    %742 = vmatprep.subr.mxu0 0.0
    %743 = vmatpush2.msra.mxu0 0.0
    %744 = vmatprep.subr.mxu0 0.0
    %745 = vmatpush2.msra.mxu0 0.0
    %746 = vmatprep.subr.mxu0 0.0
    %747 = vmatpush2.msra.mxu0 0.0
    %748 = vmatprep.subr.mxu0 0.0
    %749 = vmatpush2.msra.mxu0 0.0
    %750 = vmatprep.subr.mxu0 0.0
    %751 = vmatpush2.msra.mxu0 0.0
    %752 = vmatprep.subr.mxu0 0.0
    %753 = vmatpush2.msra.mxu0 0.0
    %754 = vmatprep.subr.mxu0 0.0
    %755 = vmatpush2.msra.mxu0 0.0
    %756 = vmatprep.mubr.f32.mxu0 0.0
    %757 = vmatmul.mubr.f32.gmra.mxu0 %v690
    %v758 = vpop.f32.mrf.mxu0
    %v759 = vadd.f32 0.0, %v758
    %v760 = vpop.f32.mrf.mxu0
    %761 = vdwg.mxu0
    %v763 = vrot.slane %v759, 6
    %v765 = vadd.f32 %v145, %v763
    %v766 = vxor.u32 %v765, 2147483648
    %v767 = vmul.f32 %v766, 1.442695
    %v768 = vpow.pop %v767
    %v769 = vadd.f32 %v768, 1.0
    %v770 = vrcp.pop %v769
    %v771 = vmul.f32 1.0, %v770
    %v772 = vtanh.pop %v765
    %v774 = vrot.slane %v680, 6
    %v776 = vmul.f32 %v771, %v774
    %778 = vrot.lane.b32.xlu0 %v772, 32
    %v779 = vpop.permute.xlu0 %778
    %v781 = vmul.f32 %v771, %v779
    %783 = vrot.lane.b32.xlu0 %v781, 32
    %v784 = vpop.permute.xlu0 %783
    %v786 = vadd.f32 %v776, %v784
    %v787 = vtanh.pop %v786
    %789 = vrot.lane.b32.xlu0 %v787, 32
    %v790 = vpop.permute.xlu0 %789
    %v792 = vmul.f32 %v771, %v790
    %v794 = vrot.slane %v792, 2
    %795 = vrot.lane.b32.xlu0 %v794, 64
    %v796 = vpop.permute.xlu0 %795
    %v797 = vsel %vm160, %v796, 0
    %799 = vmatprep.subr.mxu0 0.0
    %800 = vmatpush1.msra.mxu0 0.0
    %801 = vmatprep.subr.mxu0 0.0
    %802 = vmatpush1.msra.mxu0 0.0
    %803 = vmatprep.subr.mxu0 0.0
    %804 = vmatpush1.msra.mxu0 0.0
    %805 = vmatprep.subr.mxu0 0.0
    %806 = vmatpush1.msra.mxu0 0.0
    %807 = vmatprep.subr.mxu0 0.0
    %808 = vmatpush1.msra.mxu0 0.0
    %809 = vmatprep.subr.mxu0 0.0
    %810 = vmatpush1.msra.mxu0 0.0
    %811 = vmatprep.subr.mxu0 0.0
    %812 = vmatpush1.msra.mxu0 0.0
    %813 = vmatprep.subr.mxu0 0.0
    %814 = vmatpush1.msra.mxu0 0.0
    %815 = vmatprep.subr.mxu0 0.0
    %816 = vmatpush1.msra.mxu0 0.0
    %817 = vmatprep.subr.mxu0 0.0
    %818 = vmatpush1.msra.mxu0 0.0
    %819 = vmatprep.subr.mxu0 0.0
    %820 = vmatpush1.msra.mxu0 0.0
    %821 = vmatprep.subr.mxu0 0.0
    %822 = vmatpush1.msra.mxu0 0.0
    %823 = vmatprep.subr.mxu0 0.0
    %824 = vmatpush1.msra.mxu0 %v46
    %825 = vmatprep.subr.mxu0 0.0
    %826 = vmatpush1.msra.mxu0 %v45
    %827 = vmatprep.subr.mxu0 0.0
    %828 = vmatpush1.msra.mxu0 %v44
    %829 = vmatprep.subr.mxu0 0.0
    %830 = vmatpush1.msra.mxu0 %v43
    %831 = vmatprep.subr.mxu0 0.0
    %832 = vmatpush2.msra.mxu0 0.0
    %833 = vmatprep.subr.mxu0 0.0
    %834 = vmatpush2.msra.mxu0 0.0
    %835 = vmatprep.subr.mxu0 0.0
    %836 = vmatpush2.msra.mxu0 0.0
    %837 = vmatprep.subr.mxu0 0.0
    %838 = vmatpush2.msra.mxu0 0.0
    %839 = vmatprep.subr.mxu0 0.0
    %840 = vmatpush2.msra.mxu0 0.0
    %841 = vmatprep.subr.mxu0 0.0
    %842 = vmatpush2.msra.mxu0 0.0
    %843 = vmatprep.subr.mxu0 0.0
    %844 = vmatpush2.msra.mxu0 0.0
    %845 = vmatprep.subr.mxu0 0.0
    %846 = vmatpush2.msra.mxu0 0.0
    %847 = vmatprep.subr.mxu0 0.0
    %848 = vmatpush2.msra.mxu0 0.0
    %849 = vmatprep.subr.mxu0 0.0
    %850 = vmatpush2.msra.mxu0 0.0
    %851 = vmatprep.subr.mxu0 0.0
    %852 = vmatpush2.msra.mxu0 0.0
    %853 = vmatprep.subr.mxu0 0.0
    %854 = vmatpush2.msra.mxu0 0.0
    %855 = vmatprep.subr.mxu0 0.0
    %856 = vmatpush2.msra.mxu0 0.0
    %857 = vmatprep.subr.mxu0 0.0
    %858 = vmatpush2.msra.mxu0 0.0
    %859 = vmatprep.subr.mxu0 0.0
    %860 = vmatpush2.msra.mxu0 0.0
    %861 = vmatprep.subr.mxu0 0.0
    %862 = vmatpush2.msra.mxu0 0.0
    %863 = vmatprep.mubr.f32.mxu0 0.0
    %864 = vmatmul.mubr.f32.gmra.mxu0 %v797
    %v865 = vpop.f32.mrf.mxu0
    %v866 = vadd.f32 0.0, %v865
    %v867 = vpop.f32.mrf.mxu0
    %868 = vdwg.mxu0
    %v870 = vrot.slane %v866, 4
    %v872 = vadd.f32 %v145, %v870
    %v873 = vxor.u32 %v872, 2147483648
    %v874 = vmul.f32 %v873, 1.442695
    %v875 = vpow.pop %v874
    %v876 = vadd.f32 %v875, 1.0
    %v877 = vrcp.pop %v876
    %v878 = vmul.f32 1.0, %v877
    %v879 = vtanh.pop %v872
    %v881 = vrot.slane %v786, 6
    %v883 = vmul.f32 %v878, %v881
    %885 = vrot.lane.b32.xlu0 %v879, 32
    %v886 = vpop.permute.xlu0 %885
    %v888 = vmul.f32 %v878, %v886
    %890 = vrot.lane.b32.xlu0 %v888, 32
    %v891 = vpop.permute.xlu0 %890
    %v893 = vadd.f32 %v883, %v891
    %v894 = vtanh.pop %v893
    %896 = vrot.lane.b32.xlu0 %v894, 32
    %v897 = vpop.permute.xlu0 %896
    %v899 = vmul.f32 %v878, %v897
    %v901 = vrot.slane %v899, 4
    %902 = vrot.lane.b32.xlu0 %v901, 64
    %v903 = vpop.permute.xlu0 %902
    %v904 = vsel %vm160, %v903, 0
    %906 = vmatprep.subr.mxu0 0.0
    %907 = vmatpush1.msra.mxu0 0.0
    %908 = vmatprep.subr.mxu0 0.0
    %909 = vmatpush1.msra.mxu0 0.0
    %910 = vmatprep.subr.mxu0 0.0
    %911 = vmatpush1.msra.mxu0 0.0
    %912 = vmatprep.subr.mxu0 0.0
    %913 = vmatpush1.msra.mxu0 0.0
    %914 = vmatprep.subr.mxu0 0.0
    %915 = vmatpush1.msra.mxu0 0.0
    %916 = vmatprep.subr.mxu0 0.0
    %917 = vmatpush1.msra.mxu0 0.0
    %918 = vmatprep.subr.mxu0 0.0
    %919 = vmatpush1.msra.mxu0 0.0
    %920 = vmatprep.subr.mxu0 0.0
    %921 = vmatpush1.msra.mxu0 0.0
    %922 = vmatprep.subr.mxu0 0.0
    %923 = vmatpush1.msra.mxu0 0.0
    %924 = vmatprep.subr.mxu0 0.0
    %925 = vmatpush1.msra.mxu0 0.0
    %926 = vmatprep.subr.mxu0 0.0
    %927 = vmatpush1.msra.mxu0 0.0
    %928 = vmatprep.subr.mxu0 0.0
    %929 = vmatpush1.msra.mxu0 0.0
    %930 = vmatprep.subr.mxu0 0.0
    %931 = vmatpush1.msra.mxu0 %v46
    %932 = vmatprep.subr.mxu0 0.0
    %933 = vmatpush1.msra.mxu0 %v45
    %934 = vmatprep.subr.mxu0 0.0
    %935 = vmatpush1.msra.mxu0 %v44
    %936 = vmatprep.subr.mxu0 0.0
    %937 = vmatpush1.msra.mxu0 %v43
    %938 = vmatprep.subr.mxu0 0.0
    %939 = vmatpush2.msra.mxu0 0.0
    %940 = vmatprep.subr.mxu0 0.0
    %941 = vmatpush2.msra.mxu0 0.0
    %942 = vmatprep.subr.mxu0 0.0
    %943 = vmatpush2.msra.mxu0 0.0
    %944 = vmatprep.subr.mxu0 0.0
    %945 = vmatpush2.msra.mxu0 0.0
    %946 = vmatprep.subr.mxu0 0.0
    %947 = vmatpush2.msra.mxu0 0.0
    %948 = vmatprep.subr.mxu0 0.0
    %949 = vmatpush2.msra.mxu0 0.0
    %950 = vmatprep.subr.mxu0 0.0
    %951 = vmatpush2.msra.mxu0 0.0
    %952 = vmatprep.subr.mxu0 0.0
    %953 = vmatpush2.msra.mxu0 0.0
    %954 = vmatprep.subr.mxu0 0.0
    %955 = vmatpush2.msra.mxu0 0.0
    %956 = vmatprep.subr.mxu0 0.0
    %957 = vmatpush2.msra.mxu0 0.0
    %958 = vmatprep.subr.mxu0 0.0
    %959 = vmatpush2.msra.mxu0 0.0
    %960 = vmatprep.subr.mxu0 0.0
    %961 = vmatpush2.msra.mxu0 0.0
    %962 = vmatprep.subr.mxu0 0.0
    %963 = vmatpush2.msra.mxu0 0.0
    %964 = vmatprep.subr.mxu0 0.0
    %965 = vmatpush2.msra.mxu0 0.0
    %966 = vmatprep.subr.mxu0 0.0
    %967 = vmatpush2.msra.mxu0 0.0
    %968 = vmatprep.subr.mxu0 0.0
    %969 = vmatpush2.msra.mxu0 0.0
    %970 = vmatprep.mubr.f32.mxu0 0.0
    %971 = vmatmul.mubr.f32.gmra.mxu0 %v904
    %v972 = vpop.f32.mrf.mxu0
    %v973 = vadd.f32 0.0, %v972
    %v974 = vpop.f32.mrf.mxu0
    %975 = vdwg.mxu0
    %v977 = vrot.slane %v973, 2
    %v979 = vadd.f32 %v145, %v977
    %v980 = vxor.u32 %v979, 2147483648
    %v981 = vmul.f32 %v980, 1.442695
    %v982 = vpow.pop %v981
    %v983 = vadd.f32 %v982, 1.0
    %v984 = vrcp.pop %v983
    %v985 = vmul.f32 1.0, %v984
    %v986 = vtanh.pop %v979
    %v988 = vrot.slane %v893, 6
    %v990 = vmul.f32 %v985, %v988
    %992 = vrot.lane.b32.xlu0 %v986, 32
    %v993 = vpop.permute.xlu0 %992
    %v995 = vmul.f32 %v985, %v993
    %997 = vrot.lane.b32.xlu0 %v995, 32
    %v998 = vpop.permute.xlu0 %997
    %v1000 = vadd.f32 %v990, %v998
    %v1001 = vtanh.pop %v1000
    %1003 = vrot.lane.b32.xlu0 %v1001, 32
    %v1004 = vpop.permute.xlu0 %1003
    %v1006 = vmul.f32 %v985, %v1004
    %v1008 = vrot.slane %v1006, 6
    %1009 = vrot.lane.b32.xlu0 %v1008, 64
    %v1010 = vpop.permute.xlu0 %1009
    %v1011 = vsel %vm160, %v1010, 0
    %1013 = vmatprep.subr.mxu0 0.0
    %1014 = vmatpush1.msra.mxu0 0.0
    %1015 = vmatprep.subr.mxu0 0.0
    %1016 = vmatpush1.msra.mxu0 0.0
    %1017 = vmatprep.subr.mxu0 0.0
    %1018 = vmatpush1.msra.mxu0 0.0
    %1019 = vmatprep.subr.mxu0 0.0
    %1020 = vmatpush1.msra.mxu0 0.0
    %1021 = vmatprep.subr.mxu0 0.0
    %1022 = vmatpush1.msra.mxu0 0.0
    %1023 = vmatprep.subr.mxu0 0.0
    %1024 = vmatpush1.msra.mxu0 0.0
    %1025 = vmatprep.subr.mxu0 0.0
    %1026 = vmatpush1.msra.mxu0 0.0
    %1027 = vmatprep.subr.mxu0 0.0
    %1028 = vmatpush1.msra.mxu0 0.0
    %1029 = vmatprep.subr.mxu0 0.0
    %1030 = vmatpush1.msra.mxu0 0.0
    %1031 = vmatprep.subr.mxu0 0.0
    %1032 = vmatpush1.msra.mxu0 0.0
    %1033 = vmatprep.subr.mxu0 0.0
    %1034 = vmatpush1.msra.mxu0 0.0
    %1035 = vmatprep.subr.mxu0 0.0
    %1036 = vmatpush1.msra.mxu0 0.0
    %1037 = vmatprep.subr.mxu0 0.0
    %1038 = vmatpush1.msra.mxu0 %v46
    %1039 = vmatprep.subr.mxu0 0.0
    %1040 = vmatpush1.msra.mxu0 %v45
    %1041 = vmatprep.subr.mxu0 0.0
    %1042 = vmatpush1.msra.mxu0 %v44
    %1043 = vmatprep.subr.mxu0 0.0
    %1044 = vmatpush1.msra.mxu0 %v43
    %1045 = vmatprep.subr.mxu0 0.0
    %1046 = vmatpush2.msra.mxu0 0.0
    %1047 = vmatprep.subr.mxu0 0.0
    %1048 = vmatpush2.msra.mxu0 0.0
    %1049 = vmatprep.subr.mxu0 0.0
    %1050 = vmatpush2.msra.mxu0 0.0
    %1051 = vmatprep.subr.mxu0 0.0
    %1052 = vmatpush2.msra.mxu0 0.0
    %1053 = vmatprep.subr.mxu0 0.0
    %1054 = vmatpush2.msra.mxu0 0.0
    %1055 = vmatprep.subr.mxu0 0.0
    %1056 = vmatpush2.msra.mxu0 0.0
    %1057 = vmatprep.subr.mxu0 0.0
    %1058 = vmatpush2.msra.mxu0 0.0
    %1059 = vmatprep.subr.mxu0 0.0
    %1060 = vmatpush2.msra.mxu0 0.0
    %1061 = vmatprep.subr.mxu0 0.0
    %1062 = vmatpush2.msra.mxu0 0.0
    %1063 = vmatprep.subr.mxu0 0.0
    %1064 = vmatpush2.msra.mxu0 0.0
    %1065 = vmatprep.subr.mxu0 0.0
    %1066 = vmatpush2.msra.mxu0 0.0
    %1067 = vmatprep.subr.mxu0 0.0
    %1068 = vmatpush2.msra.mxu0 0.0
    %1069 = vmatprep.subr.mxu0 0.0
    %1070 = vmatpush2.msra.mxu0 0.0
    %1071 = vmatprep.subr.mxu0 0.0
    %1072 = vmatpush2.msra.mxu0 0.0
    %1073 = vmatprep.subr.mxu0 0.0
    %1074 = vmatpush2.msra.mxu0 0.0
    %1075 = vmatprep.subr.mxu0 0.0
    %1076 = vmatpush2.msra.mxu0 0.0
    %1077 = vmatprep.mubr.f32.mxu0 0.0
    %1078 = vmatmul.mubr.f32.gmra.mxu0 %v1011
    %v1079 = vpop.f32.mrf.mxu0
    %v1080 = vadd.f32 0.0, %v1079
    %v1081 = vpop.f32.mrf.mxu0
    %1082 = vdwg.mxu0
    %v1083 = vadd.f32 %v150, %v1080
    %v1084 = vxor.u32 %v1083, 2147483648
    %v1085 = vmul.f32 %v1084, 1.442695
    %v1086 = vpow.pop %v1085
    %v1087 = vadd.f32 %v1086, 1.0
    %v1088 = vrcp.pop %v1087
    %v1089 = vmul.f32 1.0, %v1088
    %v1090 = vtanh.pop %v1083
    %v1092 = vrot.slane %v1000, 6
    %v1094 = vmul.f32 %v1089, %v1092
    %1096 = vrot.lane.b32.xlu0 %v1090, 32
    %v1097 = vpop.permute.xlu0 %1096
    %v1099 = vmul.f32 %v1089, %v1097
    %1101 = vrot.lane.b32.xlu0 %v1099, 32
    %v1102 = vpop.permute.xlu0 %1101
    %v1104 = vadd.f32 %v1094, %v1102
    %v1105 = vtanh.pop %v1104
    %1107 = vrot.lane.b32.xlu0 %v1105, 32
    %v1108 = vpop.permute.xlu0 %1107
    %v1110 = vmul.f32 %v1089, %v1108
    %1112 = vrot.lane.b32.xlu0 %v1110, 64
    %v1113 = vpop.permute.xlu0 %1112
    %v1114 = vsel %vm160, %v1113, 0
    %1116 = vmatprep.subr.mxu0 0.0
    %1117 = vmatpush1.msra.mxu0 0.0
    %1118 = vmatprep.subr.mxu0 0.0
    %1119 = vmatpush1.msra.mxu0 0.0
    %1120 = vmatprep.subr.mxu0 0.0
    %1121 = vmatpush1.msra.mxu0 0.0
    %1122 = vmatprep.subr.mxu0 0.0
    %1123 = vmatpush1.msra.mxu0 0.0
    %1124 = vmatprep.subr.mxu0 0.0
    %1125 = vmatpush1.msra.mxu0 0.0
    %1126 = vmatprep.subr.mxu0 0.0
    %1127 = vmatpush1.msra.mxu0 0.0
    %1128 = vmatprep.subr.mxu0 0.0
    %1129 = vmatpush1.msra.mxu0 0.0
    %1130 = vmatprep.subr.mxu0 0.0
    %1131 = vmatpush1.msra.mxu0 0.0
    %1132 = vmatprep.subr.mxu0 0.0
    %1133 = vmatpush1.msra.mxu0 0.0
    %1134 = vmatprep.subr.mxu0 0.0
    %1135 = vmatpush1.msra.mxu0 0.0
    %1136 = vmatprep.subr.mxu0 0.0
    %1137 = vmatpush1.msra.mxu0 0.0
    %1138 = vmatprep.subr.mxu0 0.0
    %1139 = vmatpush1.msra.mxu0 0.0
    %1140 = vmatprep.subr.mxu0 0.0
    %1141 = vmatpush1.msra.mxu0 %v46
    %1142 = vmatprep.subr.mxu0 0.0
    %1143 = vmatpush1.msra.mxu0 %v45
    %1144 = vmatprep.subr.mxu0 0.0
    %1145 = vmatpush1.msra.mxu0 %v44
    %1146 = vmatprep.subr.mxu0 0.0
    %1147 = vmatpush1.msra.mxu0 %v43
    %1148 = vmatprep.subr.mxu0 0.0
    %1149 = vmatpush2.msra.mxu0 0.0
    %1150 = vmatprep.subr.mxu0 0.0
    %1151 = vmatpush2.msra.mxu0 0.0
    %1152 = vmatprep.subr.mxu0 0.0
    %1153 = vmatpush2.msra.mxu0 0.0
    %1154 = vmatprep.subr.mxu0 0.0
    %1155 = vmatpush2.msra.mxu0 0.0
    %1156 = vmatprep.subr.mxu0 0.0
    %1157 = vmatpush2.msra.mxu0 0.0
    %1158 = vmatprep.subr.mxu0 0.0
    %1159 = vmatpush2.msra.mxu0 0.0
    %1160 = vmatprep.subr.mxu0 0.0
    %1161 = vmatpush2.msra.mxu0 0.0
    %1162 = vmatprep.subr.mxu0 0.0
    %1163 = vmatpush2.msra.mxu0 0.0
    %1164 = vmatprep.subr.mxu0 0.0
    %1165 = vmatpush2.msra.mxu0 0.0
    %1166 = vmatprep.subr.mxu0 0.0
    %1167 = vmatpush2.msra.mxu0 0.0
    %1168 = vmatprep.subr.mxu0 0.0
    %1169 = vmatpush2.msra.mxu0 0.0
    %1170 = vmatprep.subr.mxu0 0.0
    %1171 = vmatpush2.msra.mxu0 0.0
    %1172 = vmatprep.subr.mxu0 0.0
    %1173 = vmatpush2.msra.mxu0 0.0
    %1174 = vmatprep.subr.mxu0 0.0
    %1175 = vmatpush2.msra.mxu0 0.0
    %1176 = vmatprep.subr.mxu0 0.0
    %1177 = vmatpush2.msra.mxu0 0.0
    %1178 = vmatprep.subr.mxu0 0.0
    %1179 = vmatpush2.msra.mxu0 0.0
    %1180 = vmatprep.mubr.f32.mxu0 0.0
    %1181 = vmatmul.mubr.f32.gmra.mxu0 %v1114
    %v1182 = vpop.f32.mrf.mxu0
    %v1183 = vadd.f32 0.0, %v1182
    %v1184 = vpop.f32.mrf.mxu0
    %1185 = vdwg.mxu0
    %v1187 = vrot.slane %v1183, 6
    %v1189 = vadd.f32 %v150, %v1187
    %v1190 = vxor.u32 %v1189, 2147483648
    %v1191 = vmul.f32 %v1190, 1.442695
    %v1192 = vpow.pop %v1191
    %v1193 = vadd.f32 %v1192, 1.0
    %v1194 = vrcp.pop %v1193
    %v1195 = vmul.f32 1.0, %v1194
    %v1196 = vtanh.pop %v1189
    %v1198 = vrot.slane %v1104, 6
    %v1200 = vmul.f32 %v1195, %v1198
    %1202 = vrot.lane.b32.xlu0 %v1196, 32
    %v1203 = vpop.permute.xlu0 %1202
    %v1205 = vmul.f32 %v1195, %v1203
    %1207 = vrot.lane.b32.xlu0 %v1205, 32
    %v1208 = vpop.permute.xlu0 %1207
    %v1210 = vadd.f32 %v1200, %v1208
    %v1211 = vtanh.pop %v1210
    %1213 = vrot.lane.b32.xlu0 %v1211, 32
    %v1214 = vpop.permute.xlu0 %1213
    %v1216 = vmul.f32 %v1195, %v1214
    %v1218 = vrot.slane %v1216, 2
    %1219 = vrot.lane.b32.xlu0 %v1218, 64
    %v1220 = vpop.permute.xlu0 %1219
    %v1221 = vsel %vm160, %v1220, 0
    %1223 = vmatprep.subr.mxu0 0.0
    %1224 = vmatpush1.msra.mxu0 0.0
    %1225 = vmatprep.subr.mxu0 0.0
    %1226 = vmatpush1.msra.mxu0 0.0
    %1227 = vmatprep.subr.mxu0 0.0
    %1228 = vmatpush1.msra.mxu0 0.0
    %1229 = vmatprep.subr.mxu0 0.0
    %1230 = vmatpush1.msra.mxu0 0.0
    %1231 = vmatprep.subr.mxu0 0.0
    %1232 = vmatpush1.msra.mxu0 0.0
    %1233 = vmatprep.subr.mxu0 0.0
    %1234 = vmatpush1.msra.mxu0 0.0
    %1235 = vmatprep.subr.mxu0 0.0
    %1236 = vmatpush1.msra.mxu0 0.0
    %1237 = vmatprep.subr.mxu0 0.0
    %1238 = vmatpush1.msra.mxu0 0.0
    %1239 = vmatprep.subr.mxu0 0.0
    %1240 = vmatpush1.msra.mxu0 0.0
    %1241 = vmatprep.subr.mxu0 0.0
    %1242 = vmatpush1.msra.mxu0 0.0
    %1243 = vmatprep.subr.mxu0 0.0
    %1244 = vmatpush1.msra.mxu0 0.0
    %1245 = vmatprep.subr.mxu0 0.0
    %1246 = vmatpush1.msra.mxu0 0.0
    %1247 = vmatprep.subr.mxu0 0.0
    %1248 = vmatpush1.msra.mxu0 %v46
    %1249 = vmatprep.subr.mxu0 0.0
    %1250 = vmatpush1.msra.mxu0 %v45
    %1251 = vmatprep.subr.mxu0 0.0
    %1252 = vmatpush1.msra.mxu0 %v44
    %1253 = vmatprep.subr.mxu0 0.0
    %1254 = vmatpush1.msra.mxu0 %v43
    %1255 = vmatprep.subr.mxu0 0.0
    %1256 = vmatpush2.msra.mxu0 0.0
    %1257 = vmatprep.subr.mxu0 0.0
    %1258 = vmatpush2.msra.mxu0 0.0
    %1259 = vmatprep.subr.mxu0 0.0
    %1260 = vmatpush2.msra.mxu0 0.0
    %1261 = vmatprep.subr.mxu0 0.0
    %1262 = vmatpush2.msra.mxu0 0.0
    %1263 = vmatprep.subr.mxu0 0.0
    %1264 = vmatpush2.msra.mxu0 0.0
    %1265 = vmatprep.subr.mxu0 0.0
    %1266 = vmatpush2.msra.mxu0 0.0
    %1267 = vmatprep.subr.mxu0 0.0
    %1268 = vmatpush2.msra.mxu0 0.0
    %1269 = vmatprep.subr.mxu0 0.0
    %1270 = vmatpush2.msra.mxu0 0.0
    %1271 = vmatprep.subr.mxu0 0.0
    %1272 = vmatpush2.msra.mxu0 0.0
    %1273 = vmatprep.subr.mxu0 0.0
    %1274 = vmatpush2.msra.mxu0 0.0
    %1275 = vmatprep.subr.mxu0 0.0
    %1276 = vmatpush2.msra.mxu0 0.0
    %1277 = vmatprep.subr.mxu0 0.0
    %1278 = vmatpush2.msra.mxu0 0.0
    %1279 = vmatprep.subr.mxu0 0.0
    %1280 = vmatpush2.msra.mxu0 0.0
    %1281 = vmatprep.subr.mxu0 0.0
    %1282 = vmatpush2.msra.mxu0 0.0
    %1283 = vmatprep.subr.mxu0 0.0
    %1284 = vmatpush2.msra.mxu0 0.0
    %1285 = vmatprep.subr.mxu0 0.0
    %1286 = vmatpush2.msra.mxu0 0.0
    %1287 = vmatprep.mubr.f32.mxu0 0.0
    %1288 = vmatmul.mubr.f32.gmra.mxu0 %v1221
    %v1289 = vpop.f32.mrf.mxu0
    %v1290 = vadd.f32 0.0, %v1289
    %v1291 = vpop.f32.mrf.mxu0
    %1292 = vdwg.mxu0
    %v1294 = vrot.slane %v1290, 4
    %v1296 = vadd.f32 %v150, %v1294
    %v1297 = vxor.u32 %v1296, 2147483648
    %v1298 = vmul.f32 %v1297, 1.442695
    %v1299 = vpow.pop %v1298
    %v1300 = vadd.f32 %v1299, 1.0
    %v1301 = vrcp.pop %v1300
    %v1302 = vmul.f32 1.0, %v1301
    %v1303 = vtanh.pop %v1296
    %v1305 = vrot.slane %v1210, 6
    %v1307 = vmul.f32 %v1302, %v1305
    %1309 = vrot.lane.b32.xlu0 %v1303, 32
    %v1310 = vpop.permute.xlu0 %1309
    %v1312 = vmul.f32 %v1302, %v1310
    %1314 = vrot.lane.b32.xlu0 %v1312, 32
    %v1315 = vpop.permute.xlu0 %1314
    %v1317 = vadd.f32 %v1307, %v1315
    %v1318 = vtanh.pop %v1317
    %1320 = vrot.lane.b32.xlu0 %v1318, 32
    %v1321 = vpop.permute.xlu0 %1320
    %v1323 = vmul.f32 %v1302, %v1321
    %v1325 = vrot.slane %v1323, 4
    %1326 = vrot.lane.b32.xlu0 %v1325, 64
    %v1327 = vpop.permute.xlu0 %1326
    %v1328 = vsel %vm160, %v1327, 0
    %1330 = vmatprep.subr.mxu0 0.0
    %1331 = vmatpush1.msra.mxu0 0.0
    %1332 = vmatprep.subr.mxu0 0.0
    %1333 = vmatpush1.msra.mxu0 0.0
    %1334 = vmatprep.subr.mxu0 0.0
    %1335 = vmatpush1.msra.mxu0 0.0
    %1336 = vmatprep.subr.mxu0 0.0
    %1337 = vmatpush1.msra.mxu0 0.0
    %1338 = vmatprep.subr.mxu0 0.0
    %1339 = vmatpush1.msra.mxu0 0.0
    %1340 = vmatprep.subr.mxu0 0.0
    %1341 = vmatpush1.msra.mxu0 0.0
    %1342 = vmatprep.subr.mxu0 0.0
    %1343 = vmatpush1.msra.mxu0 0.0
    %1344 = vmatprep.subr.mxu0 0.0
    %1345 = vmatpush1.msra.mxu0 0.0
    %1346 = vmatprep.subr.mxu0 0.0
    %1347 = vmatpush1.msra.mxu0 0.0
    %1348 = vmatprep.subr.mxu0 0.0
    %1349 = vmatpush1.msra.mxu0 0.0
    %1350 = vmatprep.subr.mxu0 0.0
    %1351 = vmatpush1.msra.mxu0 0.0
    %1352 = vmatprep.subr.mxu0 0.0
    %1353 = vmatpush1.msra.mxu0 0.0
    %1354 = vmatprep.subr.mxu0 0.0
    %1355 = vmatpush1.msra.mxu0 %v46
    %1356 = vmatprep.subr.mxu0 0.0
    %1357 = vmatpush1.msra.mxu0 %v45
    %1358 = vmatprep.subr.mxu0 0.0
    %1359 = vmatpush1.msra.mxu0 %v44
    %1360 = vmatprep.subr.mxu0 0.0
    %1361 = vmatpush1.msra.mxu0 %v43
    %1362 = vmatprep.subr.mxu0 0.0
    %1363 = vmatpush2.msra.mxu0 0.0
    %1364 = vmatprep.subr.mxu0 0.0
    %1365 = vmatpush2.msra.mxu0 0.0
    %1366 = vmatprep.subr.mxu0 0.0
    %1367 = vmatpush2.msra.mxu0 0.0
    %1368 = vmatprep.subr.mxu0 0.0
    %1369 = vmatpush2.msra.mxu0 0.0
    %1370 = vmatprep.subr.mxu0 0.0
    %1371 = vmatpush2.msra.mxu0 0.0
    %1372 = vmatprep.subr.mxu0 0.0
    %1373 = vmatpush2.msra.mxu0 0.0
    %1374 = vmatprep.subr.mxu0 0.0
    %1375 = vmatpush2.msra.mxu0 0.0
    %1376 = vmatprep.subr.mxu0 0.0
    %1377 = vmatpush2.msra.mxu0 0.0
    %1378 = vmatprep.subr.mxu0 0.0
    %1379 = vmatpush2.msra.mxu0 0.0
    %1380 = vmatprep.subr.mxu0 0.0
    %1381 = vmatpush2.msra.mxu0 0.0
    %1382 = vmatprep.subr.mxu0 0.0
    %1383 = vmatpush2.msra.mxu0 0.0
    %1384 = vmatprep.subr.mxu0 0.0
    %1385 = vmatpush2.msra.mxu0 0.0
    %1386 = vmatprep.subr.mxu0 0.0
    %1387 = vmatpush2.msra.mxu0 0.0
    %1388 = vmatprep.subr.mxu0 0.0
    %1389 = vmatpush2.msra.mxu0 0.0
    %1390 = vmatprep.subr.mxu0 0.0
    %1391 = vmatpush2.msra.mxu0 0.0
    %1392 = vmatprep.subr.mxu0 0.0
    %1393 = vmatpush2.msra.mxu0 0.0
    %1394 = vmatprep.mubr.f32.mxu0 0.0
    %1395 = vmatmul.mubr.f32.gmra.mxu0 %v1328
    %v1396 = vpop.f32.mrf.mxu0
    %v1397 = vadd.f32 0.0, %v1396
    %v1398 = vpop.f32.mrf.mxu0
    %1399 = vdwg.mxu0
    %v1401 = vrot.slane %v1397, 2
    %v1403 = vadd.f32 %v150, %v1401
    %v1404 = vxor.u32 %v1403, 2147483648
    %v1405 = vmul.f32 %v1404, 1.442695
    %v1406 = vpow.pop %v1405
    %v1407 = vadd.f32 %v1406, 1.0
    %v1408 = vrcp.pop %v1407
    %v1409 = vmul.f32 1.0, %v1408
    %v1410 = vtanh.pop %v1403
    %v1412 = vrot.slane %v1317, 6
    %v1414 = vmul.f32 %v1409, %v1412
    %1416 = vrot.lane.b32.xlu0 %v1410, 32
    %v1417 = vpop.permute.xlu0 %1416
    %v1419 = vmul.f32 %v1409, %v1417
    %1421 = vrot.lane.b32.xlu0 %v1419, 32
    %v1422 = vpop.permute.xlu0 %1421
    %v1424 = vadd.f32 %v1414, %v1422
    %v1425 = vtanh.pop %v1424
    %1427 = vrot.lane.b32.xlu0 %v1425, 32
    %v1428 = vpop.permute.xlu0 %1427
    %v1430 = vmul.f32 %v1409, %v1428
    %v1432 = vrot.slane %v1430, 6
    %1433 = vrot.lane.b32.xlu0 %v1432, 64
    %v1434 = vpop.permute.xlu0 %1433
    %v1435 = vsel %vm160, %v1434, 0
    %1437 = vmatprep.subr.mxu0 0.0
    %1438 = vmatpush1.msra.mxu0 0.0
    %1439 = vmatprep.subr.mxu0 0.0
    %1440 = vmatpush1.msra.mxu0 0.0
    %1441 = vmatprep.subr.mxu0 0.0
    %1442 = vmatpush1.msra.mxu0 0.0
    %1443 = vmatprep.subr.mxu0 0.0
    %1444 = vmatpush1.msra.mxu0 0.0
    %1445 = vmatprep.subr.mxu0 0.0
    %1446 = vmatpush1.msra.mxu0 0.0
    %1447 = vmatprep.subr.mxu0 0.0
    %1448 = vmatpush1.msra.mxu0 0.0
    %1449 = vmatprep.subr.mxu0 0.0
    %1450 = vmatpush1.msra.mxu0 0.0
    %1451 = vmatprep.subr.mxu0 0.0
    %1452 = vmatpush1.msra.mxu0 0.0
    %1453 = vmatprep.subr.mxu0 0.0
    %1454 = vmatpush1.msra.mxu0 0.0
    %1455 = vmatprep.subr.mxu0 0.0
    %1456 = vmatpush1.msra.mxu0 0.0
    %1457 = vmatprep.subr.mxu0 0.0
    %1458 = vmatpush1.msra.mxu0 0.0
    %1459 = vmatprep.subr.mxu0 0.0
    %1460 = vmatpush1.msra.mxu0 0.0
    %1461 = vmatprep.subr.mxu0 0.0
    %1462 = vmatpush1.msra.mxu0 %v46
    %1463 = vmatprep.subr.mxu0 0.0
    %1464 = vmatpush1.msra.mxu0 %v45
    %1465 = vmatprep.subr.mxu0 0.0
    %1466 = vmatpush1.msra.mxu0 %v44
    %1467 = vmatprep.subr.mxu0 0.0
    %1468 = vmatpush1.msra.mxu0 %v43
    %1469 = vmatprep.subr.mxu0 0.0
    %1470 = vmatpush2.msra.mxu0 0.0
    %1471 = vmatprep.subr.mxu0 0.0
    %1472 = vmatpush2.msra.mxu0 0.0
    %1473 = vmatprep.subr.mxu0 0.0
    %1474 = vmatpush2.msra.mxu0 0.0
    %1475 = vmatprep.subr.mxu0 0.0
    %1476 = vmatpush2.msra.mxu0 0.0
    %1477 = vmatprep.subr.mxu0 0.0
    %1478 = vmatpush2.msra.mxu0 0.0
    %1479 = vmatprep.subr.mxu0 0.0
    %1480 = vmatpush2.msra.mxu0 0.0
    %1481 = vmatprep.subr.mxu0 0.0
    %1482 = vmatpush2.msra.mxu0 0.0
    %1483 = vmatprep.subr.mxu0 0.0
    %1484 = vmatpush2.msra.mxu0 0.0
    %1485 = vmatprep.subr.mxu0 0.0
    %1486 = vmatpush2.msra.mxu0 0.0
    %1487 = vmatprep.subr.mxu0 0.0
    %1488 = vmatpush2.msra.mxu0 0.0
    %1489 = vmatprep.subr.mxu0 0.0
    %1490 = vmatpush2.msra.mxu0 0.0
    %1491 = vmatprep.subr.mxu0 0.0
    %1492 = vmatpush2.msra.mxu0 0.0
    %1493 = vmatprep.subr.mxu0 0.0
    %1494 = vmatpush2.msra.mxu0 0.0
    %1495 = vmatprep.subr.mxu0 0.0
    %1496 = vmatpush2.msra.mxu0 0.0
    %1497 = vmatprep.subr.mxu0 0.0
    %1498 = vmatpush2.msra.mxu0 0.0
    %1499 = vmatprep.subr.mxu0 0.0
    %1500 = vmatpush2.msra.mxu0 0.0
    %1501 = vmatprep.mubr.f32.mxu0 0.0
    %1502 = vmatmul.mubr.f32.gmra.mxu0 %v1435
    %v1503 = vpop.f32.mrf.mxu0
    %v1504 = vadd.f32 0.0, %v1503
    %v1505 = vpop.f32.mrf.mxu0
    %1506 = vdwg.mxu0
    %v1507 = vadd.f32 %v155, %v1504
    %v1508 = vxor.u32 %v1507, 2147483648
    %v1509 = vmul.f32 %v1508, 1.442695
    %v1510 = vpow.pop %v1509
    %v1511 = vadd.f32 %v1510, 1.0
    %v1512 = vrcp.pop %v1511
    %v1513 = vmul.f32 1.0, %v1512
    %v1514 = vtanh.pop %v1507
    %v1516 = vrot.slane %v1424, 6
    %v1518 = vmul.f32 %v1513, %v1516
    %1520 = vrot.lane.b32.xlu0 %v1514, 32
    %v1521 = vpop.permute.xlu0 %1520
    %v1523 = vmul.f32 %v1513, %v1521
    %1525 = vrot.lane.b32.xlu0 %v1523, 32
    %v1526 = vpop.permute.xlu0 %1525
    %v1528 = vadd.f32 %v1518, %v1526
    %v1529 = vtanh.pop %v1528
    %1531 = vrot.lane.b32.xlu0 %v1529, 32
    %v1532 = vpop.permute.xlu0 %1531
    %v1534 = vmul.f32 %v1513, %v1532
    %1536 = vrot.lane.b32.xlu0 %v1534, 64
    %v1537 = vpop.permute.xlu0 %1536
    %v1538 = vsel %vm160, %v1537, 0
    %1540 = vmatprep.subr.mxu0 0.0
    %1541 = vmatpush1.msra.mxu0 0.0
    %1542 = vmatprep.subr.mxu0 0.0
    %1543 = vmatpush1.msra.mxu0 0.0
    %1544 = vmatprep.subr.mxu0 0.0
    %1545 = vmatpush1.msra.mxu0 0.0
    %1546 = vmatprep.subr.mxu0 0.0
    %1547 = vmatpush1.msra.mxu0 0.0
    %1548 = vmatprep.subr.mxu0 0.0
    %1549 = vmatpush1.msra.mxu0 0.0
    %1550 = vmatprep.subr.mxu0 0.0
    %1551 = vmatpush1.msra.mxu0 0.0
    %1552 = vmatprep.subr.mxu0 0.0
    %1553 = vmatpush1.msra.mxu0 0.0
    %1554 = vmatprep.subr.mxu0 0.0
    %1555 = vmatpush1.msra.mxu0 0.0
    %1556 = vmatprep.subr.mxu0 0.0
    %1557 = vmatpush1.msra.mxu0 0.0
    %1558 = vmatprep.subr.mxu0 0.0
    %1559 = vmatpush1.msra.mxu0 0.0
    %1560 = vmatprep.subr.mxu0 0.0
    %1561 = vmatpush1.msra.mxu0 0.0
    %1562 = vmatprep.subr.mxu0 0.0
    %1563 = vmatpush1.msra.mxu0 0.0
    %1564 = vmatprep.subr.mxu0 0.0
    %1565 = vmatpush1.msra.mxu0 %v46
    %1566 = vmatprep.subr.mxu0 0.0
    %1567 = vmatpush1.msra.mxu0 %v45
    %1568 = vmatprep.subr.mxu0 0.0
    %1569 = vmatpush1.msra.mxu0 %v44
    %1570 = vmatprep.subr.mxu0 0.0
    %1571 = vmatpush1.msra.mxu0 %v43
    %1572 = vmatprep.subr.mxu0 0.0
    %1573 = vmatpush2.msra.mxu0 0.0
    %1574 = vmatprep.subr.mxu0 0.0
    %1575 = vmatpush2.msra.mxu0 0.0
    %1576 = vmatprep.subr.mxu0 0.0
    %1577 = vmatpush2.msra.mxu0 0.0
    %1578 = vmatprep.subr.mxu0 0.0
    %1579 = vmatpush2.msra.mxu0 0.0
    %1580 = vmatprep.subr.mxu0 0.0
    %1581 = vmatpush2.msra.mxu0 0.0
    %1582 = vmatprep.subr.mxu0 0.0
    %1583 = vmatpush2.msra.mxu0 0.0
    %1584 = vmatprep.subr.mxu0 0.0
    %1585 = vmatpush2.msra.mxu0 0.0
    %1586 = vmatprep.subr.mxu0 0.0
    %1587 = vmatpush2.msra.mxu0 0.0
    %1588 = vmatprep.subr.mxu0 0.0
    %1589 = vmatpush2.msra.mxu0 0.0
    %1590 = vmatprep.subr.mxu0 0.0
    %1591 = vmatpush2.msra.mxu0 0.0
    %1592 = vmatprep.subr.mxu0 0.0
    %1593 = vmatpush2.msra.mxu0 0.0
    %1594 = vmatprep.subr.mxu0 0.0
    %1595 = vmatpush2.msra.mxu0 0.0
    %1596 = vmatprep.subr.mxu0 0.0
    %1597 = vmatpush2.msra.mxu0 0.0
    %1598 = vmatprep.subr.mxu0 0.0
    %1599 = vmatpush2.msra.mxu0 0.0
    %1600 = vmatprep.subr.mxu0 0.0
    %1601 = vmatpush2.msra.mxu0 0.0
    %1602 = vmatprep.subr.mxu0 0.0
    %1603 = vmatpush2.msra.mxu0 0.0
    %1604 = vmatprep.mubr.f32.mxu0 0.0
    %1605 = vmatmul.mubr.f32.gmra.mxu0 %v1538
    %v1606 = vpop.f32.mrf.mxu0
    %v1607 = vadd.f32 0.0, %v1606
    %v1608 = vpop.f32.mrf.mxu0
    %1609 = vdwg.mxu0
    %v1611 = vrot.slane %v1607, 6
    %v1613 = vadd.f32 %v155, %v1611
    %v1614 = vxor.u32 %v1613, 2147483648
    %v1615 = vmul.f32 %v1614, 1.442695
    %v1616 = vpow.pop %v1615
    %v1617 = vadd.f32 %v1616, 1.0
    %v1618 = vrcp.pop %v1617
    %v1619 = vmul.f32 1.0, %v1618
    %v1620 = vtanh.pop %v1613
    %v1622 = vrot.slane %v1528, 6
    %v1624 = vmul.f32 %v1619, %v1622
    %1626 = vrot.lane.b32.xlu0 %v1620, 32
    %v1627 = vpop.permute.xlu0 %1626
    %v1629 = vmul.f32 %v1619, %v1627
    %1631 = vrot.lane.b32.xlu0 %v1629, 32
    %v1632 = vpop.permute.xlu0 %1631
    %v1634 = vadd.f32 %v1624, %v1632
    %v1635 = vtanh.pop %v1634
    %1637 = vrot.lane.b32.xlu0 %v1635, 32
    %v1638 = vpop.permute.xlu0 %1637
    %v1640 = vmul.f32 %v1619, %v1638
    %v1642 = vrot.slane %v1640, 2
    %1643 = vrot.lane.b32.xlu0 %v1642, 64
    %v1644 = vpop.permute.xlu0 %1643
    %v1645 = vsel %vm160, %v1644, 0
    %1647 = vmatprep.subr.mxu0 0.0
    %1648 = vmatpush1.msra.mxu0 0.0
    %1649 = vmatprep.subr.mxu0 0.0
    %1650 = vmatpush1.msra.mxu0 0.0
    %1651 = vmatprep.subr.mxu0 0.0
    %1652 = vmatpush1.msra.mxu0 0.0
    %1653 = vmatprep.subr.mxu0 0.0
    %1654 = vmatpush1.msra.mxu0 0.0
    %1655 = vmatprep.subr.mxu0 0.0
    %1656 = vmatpush1.msra.mxu0 0.0
    %1657 = vmatprep.subr.mxu0 0.0
    %1658 = vmatpush1.msra.mxu0 0.0
    %1659 = vmatprep.subr.mxu0 0.0
    %1660 = vmatpush1.msra.mxu0 0.0
    %1661 = vmatprep.subr.mxu0 0.0
    %1662 = vmatpush1.msra.mxu0 0.0
    %1663 = vmatprep.subr.mxu0 0.0
    %1664 = vmatpush1.msra.mxu0 0.0
    %1665 = vmatprep.subr.mxu0 0.0
    %1666 = vmatpush1.msra.mxu0 0.0
    %1667 = vmatprep.subr.mxu0 0.0
    %1668 = vmatpush1.msra.mxu0 0.0
    %1669 = vmatprep.subr.mxu0 0.0
    %1670 = vmatpush1.msra.mxu0 0.0
    %1671 = vmatprep.subr.mxu0 0.0
    %1672 = vmatpush1.msra.mxu0 %v46
    %1673 = vmatprep.subr.mxu0 0.0
    %1674 = vmatpush1.msra.mxu0 %v45
    %1675 = vmatprep.subr.mxu0 0.0
    %1676 = vmatpush1.msra.mxu0 %v44
    %1677 = vmatprep.subr.mxu0 0.0
    %1678 = vmatpush1.msra.mxu0 %v43
    %1679 = vmatprep.subr.mxu0 0.0
    %1680 = vmatpush2.msra.mxu0 0.0
    %1681 = vmatprep.subr.mxu0 0.0
    %1682 = vmatpush2.msra.mxu0 0.0
    %1683 = vmatprep.subr.mxu0 0.0
    %1684 = vmatpush2.msra.mxu0 0.0
    %1685 = vmatprep.subr.mxu0 0.0
    %1686 = vmatpush2.msra.mxu0 0.0
    %1687 = vmatprep.subr.mxu0 0.0
    %1688 = vmatpush2.msra.mxu0 0.0
    %1689 = vmatprep.subr.mxu0 0.0
    %1690 = vmatpush2.msra.mxu0 0.0
    %1691 = vmatprep.subr.mxu0 0.0
    %1692 = vmatpush2.msra.mxu0 0.0
    %1693 = vmatprep.subr.mxu0 0.0
    %1694 = vmatpush2.msra.mxu0 0.0
    %1695 = vmatprep.subr.mxu0 0.0
    %1696 = vmatpush2.msra.mxu0 0.0
    %1697 = vmatprep.subr.mxu0 0.0
    %1698 = vmatpush2.msra.mxu0 0.0
    %1699 = vmatprep.subr.mxu0 0.0
    %1700 = vmatpush2.msra.mxu0 0.0
    %1701 = vmatprep.subr.mxu0 0.0
    %1702 = vmatpush2.msra.mxu0 0.0
    %1703 = vmatprep.subr.mxu0 0.0
    %1704 = vmatpush2.msra.mxu0 0.0
    %1705 = vmatprep.subr.mxu0 0.0
    %1706 = vmatpush2.msra.mxu0 0.0
    %1707 = vmatprep.subr.mxu0 0.0
    %1708 = vmatpush2.msra.mxu0 0.0
    %1709 = vmatprep.subr.mxu0 0.0
    %1710 = vmatpush2.msra.mxu0 0.0
    %1711 = vmatprep.mubr.f32.mxu0 0.0
    %1712 = vmatmul.mubr.f32.gmra.mxu0 %v1645
    %v1713 = vpop.f32.mrf.mxu0
    %v1714 = vadd.f32 0.0, %v1713
    %v1715 = vpop.f32.mrf.mxu0
    %1716 = vdwg.mxu0
    %v1718 = vrot.slane %v1714, 4
    %v1720 = vadd.f32 %v155, %v1718
    %v1721 = vxor.u32 %v1720, 2147483648
    %v1722 = vmul.f32 %v1721, 1.442695
    %v1723 = vpow.pop %v1722
    %v1724 = vadd.f32 %v1723, 1.0
    %v1725 = vrcp.pop %v1724
    %v1726 = vmul.f32 1.0, %v1725
    %v1727 = vtanh.pop %v1720
    %v1729 = vrot.slane %v1634, 6
    %v1731 = vmul.f32 %v1726, %v1729
    %1733 = vrot.lane.b32.xlu0 %v1727, 32
    %v1734 = vpop.permute.xlu0 %1733
    %v1736 = vmul.f32 %v1726, %v1734
    %1738 = vrot.lane.b32.xlu0 %v1736, 32
    %v1739 = vpop.permute.xlu0 %1738
    %v1741 = vadd.f32 %v1731, %v1739
    %v1742 = vtanh.pop %v1741
    %1744 = vrot.lane.b32.xlu0 %v1742, 32
    %v1745 = vpop.permute.xlu0 %1744
    %v1747 = vmul.f32 %v1726, %v1745
    %v1749 = vrot.slane %v1747, 4
    %1750 = vrot.lane.b32.xlu0 %v1749, 64
    %v1751 = vpop.permute.xlu0 %1750
    %v1752 = vsel %vm160, %v1751, 0
    %1754 = vmatprep.subr.mxu0 0.0
    %1755 = vmatpush1.msra.mxu0 0.0
    %1756 = vmatprep.subr.mxu0 0.0
    %1757 = vmatpush1.msra.mxu0 0.0
    %1758 = vmatprep.subr.mxu0 0.0
    %1759 = vmatpush1.msra.mxu0 0.0
    %1760 = vmatprep.subr.mxu0 0.0
    %1761 = vmatpush1.msra.mxu0 0.0
    %1762 = vmatprep.subr.mxu0 0.0
    %1763 = vmatpush1.msra.mxu0 0.0
    %1764 = vmatprep.subr.mxu0 0.0
    %1765 = vmatpush1.msra.mxu0 0.0
    %1766 = vmatprep.subr.mxu0 0.0
    %1767 = vmatpush1.msra.mxu0 0.0
    %1768 = vmatprep.subr.mxu0 0.0
    %1769 = vmatpush1.msra.mxu0 0.0
    %1770 = vmatprep.subr.mxu0 0.0
    %1771 = vmatpush1.msra.mxu0 0.0
    %1772 = vmatprep.subr.mxu0 0.0
    %1773 = vmatpush1.msra.mxu0 0.0
    %1774 = vmatprep.subr.mxu0 0.0
    %1775 = vmatpush1.msra.mxu0 0.0
    %1776 = vmatprep.subr.mxu0 0.0
    %1777 = vmatpush1.msra.mxu0 0.0
    %1778 = vmatprep.subr.mxu0 0.0
    %1779 = vmatpush1.msra.mxu0 %v46
    %1780 = vmatprep.subr.mxu0 0.0
    %1781 = vmatpush1.msra.mxu0 %v45
    %1782 = vmatprep.subr.mxu0 0.0
    %1783 = vmatpush1.msra.mxu0 %v44
    %1784 = vmatprep.subr.mxu0 0.0
    %1785 = vmatpush1.msra.mxu0 %v43
    %1786 = vmatprep.subr.mxu0 0.0
    %1787 = vmatpush2.msra.mxu0 0.0
    %1788 = vmatprep.subr.mxu0 0.0
    %1789 = vmatpush2.msra.mxu0 0.0
    %1790 = vmatprep.subr.mxu0 0.0
    %1791 = vmatpush2.msra.mxu0 0.0
    %1792 = vmatprep.subr.mxu0 0.0
    %1793 = vmatpush2.msra.mxu0 0.0
    %1794 = vmatprep.subr.mxu0 0.0
    %1795 = vmatpush2.msra.mxu0 0.0
    %1796 = vmatprep.subr.mxu0 0.0
    %1797 = vmatpush2.msra.mxu0 0.0
    %1798 = vmatprep.subr.mxu0 0.0
    %1799 = vmatpush2.msra.mxu0 0.0
    %1800 = vmatprep.subr.mxu0 0.0
    %1801 = vmatpush2.msra.mxu0 0.0
    %1802 = vmatprep.subr.mxu0 0.0
    %1803 = vmatpush2.msra.mxu0 0.0
    %1804 = vmatprep.subr.mxu0 0.0
    %1805 = vmatpush2.msra.mxu0 0.0
    %1806 = vmatprep.subr.mxu0 0.0
    %1807 = vmatpush2.msra.mxu0 0.0
    %1808 = vmatprep.subr.mxu0 0.0
    %1809 = vmatpush2.msra.mxu0 0.0
    %1810 = vmatprep.subr.mxu0 0.0
    %1811 = vmatpush2.msra.mxu0 0.0
    %1812 = vmatprep.subr.mxu0 0.0
    %1813 = vmatpush2.msra.mxu0 0.0
    %1814 = vmatprep.subr.mxu0 0.0
    %1815 = vmatpush2.msra.mxu0 0.0
    %1816 = vmatprep.subr.mxu0 0.0
    %1817 = vmatpush2.msra.mxu0 0.0
    %1818 = vmatprep.mubr.f32.mxu0 0.0
    %1819 = vmatmul.mubr.f32.gmra.mxu0 %v1752
    %v1820 = vpop.f32.mrf.mxu0
    %v1821 = vadd.f32 0.0, %v1820
    %v1822 = vpop.f32.mrf.mxu0
    %1823 = vdwg.mxu0
    %v1825 = vrot.slane %v1821, 2
    %v1827 = vadd.f32 %v155, %v1825
    %v1828 = vxor.u32 %v1827, 2147483648
    %v1829 = vmul.f32 %v1828, 1.442695
    %v1830 = vpow.pop %v1829
    %v1831 = vadd.f32 %v1830, 1.0
    %v1832 = vrcp.pop %v1831
    %v1833 = vmul.f32 1.0, %v1832
    %v1834 = vtanh.pop %v1827
    %v1836 = vrot.slane %v1741, 6
    %v1838 = vmul.f32 %v1833, %v1836
    %1840 = vrot.lane.b32.xlu0 %v1834, 32
    %v1841 = vpop.permute.xlu0 %1840
    %v1843 = vmul.f32 %v1833, %v1841
    %1845 = vrot.lane.b32.xlu0 %v1843, 32
    %v1846 = vpop.permute.xlu0 %1845
    %v1848 = vadd.f32 %v1838, %v1846
    %v1849 = vtanh.pop %v1848
    %1851 = vrot.lane.b32.xlu0 %v1849, 32
    %v1852 = vpop.permute.xlu0 %1851
    %v1854 = vmul.f32 %v1833, %v1852
    %v1855 = vld [vmem:[%s9] sm:$0xff]
    %v1856 = vld [vmem:[%s9 + $0x8] sm:$0xff]
    %v1857 = vld [vmem:[%s9 + $0x10] sm:$0xff]
    %v1858 = vld [vmem:[%s9 + $0x18] sm:$0xff]
    %v1859 = vld [vmem:[%s9 + $0x20] sm:$0x1]
    %v1860 = vlaneseq
    %v1861 = vshrl.u32 %v1860, 7
    %v1862 = vsub.s32 0, %v1861
    %v1863 = vrot.slane %v1859, %v1862
    %v1865 = vrot.slane %v1854, 6
    %1866 = vrot.lane.b32.xlu0 %v1865, 64
    %v1867 = vpop.permute.xlu0 %1866
    %v1868 = vsel %vm160, %v1867, 0
    %1870 = vmatprep.subr.mxu0 0.0
    %1871 = vmatpush1.msra.mxu0 0.0
    %1872 = vmatprep.subr.mxu0 0.0
    %1873 = vmatpush1.msra.mxu0 0.0
    %1874 = vmatprep.subr.mxu0 0.0
    %1875 = vmatpush1.msra.mxu0 0.0
    %1876 = vmatprep.subr.mxu0 0.0
    %1877 = vmatpush1.msra.mxu0 0.0
    %1878 = vmatprep.subr.mxu0 0.0
    %1879 = vmatpush1.msra.mxu0 0.0
    %1880 = vmatprep.subr.mxu0 0.0
    %1881 = vmatpush1.msra.mxu0 0.0
    %1882 = vmatprep.subr.mxu0 0.0
    %1883 = vmatpush1.msra.mxu0 0.0
    %1884 = vmatprep.subr.mxu0 0.0
    %1885 = vmatpush1.msra.mxu0 0.0
    %1886 = vmatprep.subr.mxu0 0.0
    %1887 = vmatpush1.msra.mxu0 0.0
    %1888 = vmatprep.subr.mxu0 0.0
    %1889 = vmatpush1.msra.mxu0 0.0
    %1890 = vmatprep.subr.mxu0 0.0
    %1891 = vmatpush1.msra.mxu0 0.0
    %1892 = vmatprep.subr.mxu0 0.0
    %1893 = vmatpush1.msra.mxu0 0.0
    %1894 = vmatprep.subr.mxu0 0.0
    %1895 = vmatpush1.msra.mxu0 %v1858
    %1896 = vmatprep.subr.mxu0 0.0
    %1897 = vmatpush1.msra.mxu0 %v1857
    %1898 = vmatprep.subr.mxu0 0.0
    %1899 = vmatpush1.msra.mxu0 %v1856
    %1900 = vmatprep.subr.mxu0 0.0
    %1901 = vmatpush1.msra.mxu0 %v1855
    %1902 = vmatprep.subr.mxu0 0.0
    %1903 = vmatpush2.msra.mxu0 0.0
    %1904 = vmatprep.subr.mxu0 0.0
    %1905 = vmatpush2.msra.mxu0 0.0
    %1906 = vmatprep.subr.mxu0 0.0
    %1907 = vmatpush2.msra.mxu0 0.0
    %1908 = vmatprep.subr.mxu0 0.0
    %1909 = vmatpush2.msra.mxu0 0.0
    %1910 = vmatprep.subr.mxu0 0.0
    %1911 = vmatpush2.msra.mxu0 0.0
    %1912 = vmatprep.subr.mxu0 0.0
    %1913 = vmatpush2.msra.mxu0 0.0
    %1914 = vmatprep.subr.mxu0 0.0
    %1915 = vmatpush2.msra.mxu0 0.0
    %1916 = vmatprep.subr.mxu0 0.0
    %1917 = vmatpush2.msra.mxu0 0.0
    %1918 = vmatprep.subr.mxu0 0.0
    %1919 = vmatpush2.msra.mxu0 0.0
    %1920 = vmatprep.subr.mxu0 0.0
    %1921 = vmatpush2.msra.mxu0 0.0
    %1922 = vmatprep.subr.mxu0 0.0
    %1923 = vmatpush2.msra.mxu0 0.0
    %1924 = vmatprep.subr.mxu0 0.0
    %1925 = vmatpush2.msra.mxu0 0.0
    %1926 = vmatprep.subr.mxu0 0.0
    %1927 = vmatpush2.msra.mxu0 0.0
    %1928 = vmatprep.subr.mxu0 0.0
    %1929 = vmatpush2.msra.mxu0 0.0
    %1930 = vmatprep.subr.mxu0 0.0
    %1931 = vmatpush2.msra.mxu0 0.0
    %1932 = vmatprep.subr.mxu0 0.0
    %1933 = vmatpush2.msra.mxu0 0.0
    %1934 = vmatprep.mubr.f32.mxu0 0.0
    %1935 = vmatmul.mubr.f32.gmra.mxu0 %v1868
    %v1936 = vpop.f32.mrf.mxu0
    %v1937 = vadd.f32 %v1863, %v1936
    %v1938 = vpop.f32.mrf.mxu0
    %1939 = vdwg.mxu0
    %v1940 = vld [vmem:[%s1] sm:$0xff]
    %v1941 = vld [vmem:[%s4] sm:$0x3]
    %s1942 = scalar_lea.vmem %s4, 2
    %v1943 = vld [vmem:[%s1942] sm:$0x3]
    %1945 = vrot.lane.b32.xlu0 %v1943, 16
    %v1946 = vpop.permute.xlu0 %1945
    %vm1948 = vcmask 130048
    %v1949 = vsel %vm1948, %v1941, %v1946
    %v1950 = vld [vmem:[%s5] sm:$0x3]
    %s1951 = scalar_lea.vmem %s5, 2
    %v1952 = vld [vmem:[%s1951] sm:$0x3]
    %1954 = vrot.lane.b32.xlu0 %v1952, 16
    %v1955 = vpop.permute.xlu0 %1954
    %v1957 = vsel %vm1948, %v1950, %v1955
    %v1958 = vld [vmem:[%s7] sm:$0xff]
    %v1959 = vld [vmem:[%s7 + $0x8] sm:$0xff]
    %v1960 = vld [vmem:[%s7 + $0x10] sm:$0xff]
    %v1961 = vld [vmem:[%s7 + $0x18] sm:$0xff]
    %v1962 = vld [vmem:[%s7 + $0x20] sm:$0xff]
    %v1963 = vld [vmem:[%s7 + $0x28] sm:$0xff]
    %v1964 = vld [vmem:[%s7 + $0x30] sm:$0xff]
    %v1965 = vld [vmem:[%s7 + $0x38] sm:$0xff]
    %v1966 = vld [vmem:[%s7 + $0x40] sm:$0x1]
    %v1967 = vlaneseq
    %v1968 = vshrl.u32 %v1967, 7
    %v1969 = vsub.s32 0, %v1968
    %v1970 = vrot.slane %v1966, %v1969
    %v1972 = vsel %vm1948, %v1940, 0
    %1974 = vmatprep.subr.mxu0 0.0
    %1975 = vmatpush1.msra.mxu0 0.0
    %1976 = vmatprep.subr.mxu0 0.0
    %1977 = vmatpush1.msra.mxu0 0.0
    %1978 = vmatprep.subr.mxu0 0.0
    %1979 = vmatpush1.msra.mxu0 0.0
    %1980 = vmatprep.subr.mxu0 0.0
    %1981 = vmatpush1.msra.mxu0 0.0
    %1982 = vmatprep.subr.mxu0 0.0
    %1983 = vmatpush1.msra.mxu0 0.0
    %1984 = vmatprep.subr.mxu0 0.0
    %1985 = vmatpush1.msra.mxu0 0.0
    %1986 = vmatprep.subr.mxu0 0.0
    %1987 = vmatpush1.msra.mxu0 0.0
    %1988 = vmatprep.subr.mxu0 0.0
    %1989 = vmatpush1.msra.mxu0 0.0
    %1990 = vmatprep.subr.mxu0 0.0
    %1991 = vmatpush1.msra.mxu0 0.0
    %1992 = vmatprep.subr.mxu0 0.0
    %1993 = vmatpush1.msra.mxu0 0.0
    %1994 = vmatprep.subr.mxu0 0.0
    %1995 = vmatpush1.msra.mxu0 0.0
    %1996 = vmatprep.subr.mxu0 0.0
    %1997 = vmatpush1.msra.mxu0 0.0
    %1998 = vmatprep.subr.mxu0 0.0
    %1999 = vmatpush1.msra.mxu0 0.0
    %2000 = vmatprep.subr.mxu0 0.0
    %2001 = vmatpush1.msra.mxu0 0.0
    %2002 = vmatprep.subr.mxu0 0.0
    %2003 = vmatpush1.msra.mxu0 %v1959
    %2004 = vmatprep.subr.mxu0 0.0
    %2005 = vmatpush1.msra.mxu0 %v1958
    %2006 = vmatprep.subr.mxu0 0.0
    %2007 = vmatpush2.msra.mxu0 0.0
    %2008 = vmatprep.subr.mxu0 0.0
    %2009 = vmatpush2.msra.mxu0 0.0
    %2010 = vmatprep.subr.mxu0 0.0
    %2011 = vmatpush2.msra.mxu0 0.0
    %2012 = vmatprep.subr.mxu0 0.0
    %2013 = vmatpush2.msra.mxu0 0.0
    %2014 = vmatprep.subr.mxu0 0.0
    %2015 = vmatpush2.msra.mxu0 0.0
    %2016 = vmatprep.subr.mxu0 0.0
    %2017 = vmatpush2.msra.mxu0 0.0
    %2018 = vmatprep.subr.mxu0 0.0
    %2019 = vmatpush2.msra.mxu0 0.0
    %2020 = vmatprep.subr.mxu0 0.0
    %2021 = vmatpush2.msra.mxu0 0.0
    %2022 = vmatprep.subr.mxu0 0.0
    %2023 = vmatpush2.msra.mxu0 0.0
    %2024 = vmatprep.subr.mxu0 0.0
    %2025 = vmatpush2.msra.mxu0 0.0
    %2026 = vmatprep.subr.mxu0 0.0
    %2027 = vmatpush2.msra.mxu0 0.0
    %2028 = vmatprep.subr.mxu0 0.0
    %2029 = vmatpush2.msra.mxu0 0.0
    %2030 = vmatprep.subr.mxu0 0.0
    %2031 = vmatpush2.msra.mxu0 0.0
    %2032 = vmatprep.subr.mxu0 0.0
    %2033 = vmatpush2.msra.mxu0 0.0
    %2034 = vmatprep.subr.mxu0 0.0
    %2035 = vmatpush2.msra.mxu0 0.0
    %2036 = vmatprep.subr.mxu0 0.0
    %2037 = vmatpush2.msra.mxu0 0.0
    %2038 = vmatprep.mubr.f32.mxu0 0.0
    %2039 = vmatmul.mubr.f32.gmra.mxu0 %v1972
    %v2040 = vpop.f32.mrf.mxu0
    %v2041 = vadd.f32 %v1970, %v2040
    %v2042 = vpop.f32.mrf.mxu0
    %2043 = vdwg.mxu0
    %2044 = vmatprep.subr.mxu0 0.0
    %2045 = vmatpush1.msra.mxu0 0.0
    %2046 = vmatprep.subr.mxu0 0.0
    %2047 = vmatpush1.msra.mxu0 0.0
    %2048 = vmatprep.subr.mxu0 0.0
    %2049 = vmatpush1.msra.mxu0 0.0
    %2050 = vmatprep.subr.mxu0 0.0
    %2051 = vmatpush1.msra.mxu0 0.0
    %2052 = vmatprep.subr.mxu0 0.0
    %2053 = vmatpush1.msra.mxu0 0.0
    %2054 = vmatprep.subr.mxu0 0.0
    %2055 = vmatpush1.msra.mxu0 0.0
    %2056 = vmatprep.subr.mxu0 0.0
    %2057 = vmatpush1.msra.mxu0 0.0
    %2058 = vmatprep.subr.mxu0 0.0
    %2059 = vmatpush1.msra.mxu0 0.0
    %2060 = vmatprep.subr.mxu0 0.0
    %2061 = vmatpush1.msra.mxu0 0.0
    %2062 = vmatprep.subr.mxu0 0.0
    %2063 = vmatpush1.msra.mxu0 0.0
    %2064 = vmatprep.subr.mxu0 0.0
    %2065 = vmatpush1.msra.mxu0 0.0
    %2066 = vmatprep.subr.mxu0 0.0
    %2067 = vmatpush1.msra.mxu0 0.0
    %2068 = vmatprep.subr.mxu0 0.0
    %2069 = vmatpush1.msra.mxu0 0.0
    %2070 = vmatprep.subr.mxu0 0.0
    %2071 = vmatpush1.msra.mxu0 0.0
    %2072 = vmatprep.subr.mxu0 0.0
    %2073 = vmatpush1.msra.mxu0 %v1961
    %2074 = vmatprep.subr.mxu0 0.0
    %2075 = vmatpush1.msra.mxu0 %v1960
    %2076 = vmatprep.subr.mxu0 0.0
    %2077 = vmatpush2.msra.mxu0 0.0
    %2078 = vmatprep.subr.mxu0 0.0
    %2079 = vmatpush2.msra.mxu0 0.0
    %2080 = vmatprep.subr.mxu0 0.0
    %2081 = vmatpush2.msra.mxu0 0.0
    %2082 = vmatprep.subr.mxu0 0.0
    %2083 = vmatpush2.msra.mxu0 0.0
    %2084 = vmatprep.subr.mxu0 0.0
    %2085 = vmatpush2.msra.mxu0 0.0
    %2086 = vmatprep.subr.mxu0 0.0
    %2087 = vmatpush2.msra.mxu0 0.0
    %2088 = vmatprep.subr.mxu0 0.0
    %2089 = vmatpush2.msra.mxu0 0.0
    %2090 = vmatprep.subr.mxu0 0.0
    %2091 = vmatpush2.msra.mxu0 0.0
    %2092 = vmatprep.subr.mxu0 0.0
    %2093 = vmatpush2.msra.mxu0 0.0
    %2094 = vmatprep.subr.mxu0 0.0
    %2095 = vmatpush2.msra.mxu0 0.0
    %2096 = vmatprep.subr.mxu0 0.0
    %2097 = vmatpush2.msra.mxu0 0.0
    %2098 = vmatprep.subr.mxu0 0.0
    %2099 = vmatpush2.msra.mxu0 0.0
    %2100 = vmatprep.subr.mxu0 0.0
    %2101 = vmatpush2.msra.mxu0 0.0
    %2102 = vmatprep.subr.mxu0 0.0
    %2103 = vmatpush2.msra.mxu0 0.0
    %2104 = vmatprep.subr.mxu0 0.0
    %2105 = vmatpush2.msra.mxu0 0.0
    %2106 = vmatprep.subr.mxu0 0.0
    %2107 = vmatpush2.msra.mxu0 0.0
    %2108 = vmatprep.mubr.f32.mxu0 0.0
    %2109 = vmatmul.mubr.f32.gmra.mxu0 %v1972
    %v2110 = vpop.f32.mrf.mxu0
    %v2111 = vadd.f32 0.0, %v2110
    %v2112 = vpop.f32.mrf.mxu0
    %2113 = vdwg.mxu0
    %v2115 = vrot.slane %v2111, 6
    %v2117 = vadd.f32 %v2041, %v2115
    %v2119 = vsel %vm160, %v1949, 0
    %2121 = vmatprep.subr.mxu0 0.0
    %2122 = vmatpush1.msra.mxu0 0.0
    %2123 = vmatprep.subr.mxu0 0.0
    %2124 = vmatpush1.msra.mxu0 0.0
    %2125 = vmatprep.subr.mxu0 0.0
    %2126 = vmatpush1.msra.mxu0 0.0
    %2127 = vmatprep.subr.mxu0 0.0
    %2128 = vmatpush1.msra.mxu0 0.0
    %2129 = vmatprep.subr.mxu0 0.0
    %2130 = vmatpush1.msra.mxu0 0.0
    %2131 = vmatprep.subr.mxu0 0.0
    %2132 = vmatpush1.msra.mxu0 0.0
    %2133 = vmatprep.subr.mxu0 0.0
    %2134 = vmatpush1.msra.mxu0 0.0
    %2135 = vmatprep.subr.mxu0 0.0
    %2136 = vmatpush1.msra.mxu0 0.0
    %2137 = vmatprep.subr.mxu0 0.0
    %2138 = vmatpush1.msra.mxu0 0.0
    %2139 = vmatprep.subr.mxu0 0.0
    %2140 = vmatpush1.msra.mxu0 0.0
    %2141 = vmatprep.subr.mxu0 0.0
    %2142 = vmatpush1.msra.mxu0 0.0
    %2143 = vmatprep.subr.mxu0 0.0
    %2144 = vmatpush1.msra.mxu0 0.0
    %2145 = vmatprep.subr.mxu0 0.0
    %2146 = vmatpush1.msra.mxu0 %v1965
    %2147 = vmatprep.subr.mxu0 0.0
    %2148 = vmatpush1.msra.mxu0 %v1964
    %2149 = vmatprep.subr.mxu0 0.0
    %2150 = vmatpush1.msra.mxu0 %v1963
    %2151 = vmatprep.subr.mxu0 0.0
    %2152 = vmatpush1.msra.mxu0 %v1962
    %2153 = vmatprep.subr.mxu0 0.0
    %2154 = vmatpush2.msra.mxu0 0.0
    %2155 = vmatprep.subr.mxu0 0.0
    %2156 = vmatpush2.msra.mxu0 0.0
    %2157 = vmatprep.subr.mxu0 0.0
    %2158 = vmatpush2.msra.mxu0 0.0
    %2159 = vmatprep.subr.mxu0 0.0
    %2160 = vmatpush2.msra.mxu0 0.0
    %2161 = vmatprep.subr.mxu0 0.0
    %2162 = vmatpush2.msra.mxu0 0.0
    %2163 = vmatprep.subr.mxu0 0.0
    %2164 = vmatpush2.msra.mxu0 0.0
    %2165 = vmatprep.subr.mxu0 0.0
    %2166 = vmatpush2.msra.mxu0 0.0
    %2167 = vmatprep.subr.mxu0 0.0
    %2168 = vmatpush2.msra.mxu0 0.0
    %2169 = vmatprep.subr.mxu0 0.0
    %2170 = vmatpush2.msra.mxu0 0.0
    %2171 = vmatprep.subr.mxu0 0.0
    %2172 = vmatpush2.msra.mxu0 0.0
    %2173 = vmatprep.subr.mxu0 0.0
    %2174 = vmatpush2.msra.mxu0 0.0
    %2175 = vmatprep.subr.mxu0 0.0
    %2176 = vmatpush2.msra.mxu0 0.0
    %2177 = vmatprep.subr.mxu0 0.0
    %2178 = vmatpush2.msra.mxu0 0.0
    %2179 = vmatprep.subr.mxu0 0.0
    %2180 = vmatpush2.msra.mxu0 0.0
    %2181 = vmatprep.subr.mxu0 0.0
    %2182 = vmatpush2.msra.mxu0 0.0
    %2183 = vmatprep.subr.mxu0 0.0
    %2184 = vmatpush2.msra.mxu0 0.0
    %2185 = vmatprep.mubr.f32.mxu0 0.0
    %2186 = vmatmul.mubr.f32.gmra.mxu0 %v2119
    %v2187 = vpop.f32.mrf.mxu0
    %v2188 = vadd.f32 0.0, %v2187
    %v2189 = vpop.f32.mrf.mxu0
    %2190 = vdwg.mxu0
    %v2191 = vadd.f32 %v2117, %v2188
    %v2192 = vxor.u32 %v2191, 2147483648
    %v2193 = vmul.f32 %v2192, 1.442695
    %v2194 = vpow.pop %v2193
    %v2195 = vadd.f32 %v2194, 1.0
    %v2196 = vrcp.pop %v2195
    %v2197 = vmul.f32 1.0, %v2196
    %v2198 = vtanh.pop %v2191
    %2200 = vrot.lane.b32.xlu0 %v1957, 32
    %v2201 = vpop.permute.xlu0 %2200
    %v2203 = vmul.f32 %v2197, %v2201
    %2205 = vrot.lane.b32.xlu0 %v2198, 32
    %v2206 = vpop.permute.xlu0 %2205
    %v2208 = vmul.f32 %v2197, %v2206
    %2210 = vrot.lane.b32.xlu0 %v2208, 32
    %v2211 = vpop.permute.xlu0 %2210
    %v2213 = vadd.f32 %v2203, %v2211
    %v2214 = vtanh.pop %v2213
    %2216 = vrot.lane.b32.xlu0 %v2214, 32
    %v2217 = vpop.permute.xlu0 %2216
    %v2219 = vmul.f32 %v2197, %v2217
    %v2220 = vrot.slane %v2111, 2
    %v2222 = vadd.f32 %v2041, %v2220
    %2224 = vrot.lane.b32.xlu0 %v2219, 64
    %v2225 = vpop.permute.xlu0 %2224
    %v2226 = vsel %vm160, %v2225, 0
    %2228 = vmatprep.subr.mxu0 0.0
    %2229 = vmatpush1.msra.mxu0 0.0
    %2230 = vmatprep.subr.mxu0 0.0
    %2231 = vmatpush1.msra.mxu0 0.0
    %2232 = vmatprep.subr.mxu0 0.0
    %2233 = vmatpush1.msra.mxu0 0.0
    %2234 = vmatprep.subr.mxu0 0.0
    %2235 = vmatpush1.msra.mxu0 0.0
    %2236 = vmatprep.subr.mxu0 0.0
    %2237 = vmatpush1.msra.mxu0 0.0
    %2238 = vmatprep.subr.mxu0 0.0
    %2239 = vmatpush1.msra.mxu0 0.0
    %2240 = vmatprep.subr.mxu0 0.0
    %2241 = vmatpush1.msra.mxu0 0.0
    %2242 = vmatprep.subr.mxu0 0.0
    %2243 = vmatpush1.msra.mxu0 0.0
    %2244 = vmatprep.subr.mxu0 0.0
    %2245 = vmatpush1.msra.mxu0 0.0
    %2246 = vmatprep.subr.mxu0 0.0
    %2247 = vmatpush1.msra.mxu0 0.0
    %2248 = vmatprep.subr.mxu0 0.0
    %2249 = vmatpush1.msra.mxu0 0.0
    %2250 = vmatprep.subr.mxu0 0.0
    %2251 = vmatpush1.msra.mxu0 0.0
    %2252 = vmatprep.subr.mxu0 0.0
    %2253 = vmatpush1.msra.mxu0 %v1965
    %2254 = vmatprep.subr.mxu0 0.0
    %2255 = vmatpush1.msra.mxu0 %v1964
    %2256 = vmatprep.subr.mxu0 0.0
    %2257 = vmatpush1.msra.mxu0 %v1963
    %2258 = vmatprep.subr.mxu0 0.0
    %2259 = vmatpush1.msra.mxu0 %v1962
    %2260 = vmatprep.subr.mxu0 0.0
    %2261 = vmatpush2.msra.mxu0 0.0
    %2262 = vmatprep.subr.mxu0 0.0
    %2263 = vmatpush2.msra.mxu0 0.0
    %2264 = vmatprep.subr.mxu0 0.0
    %2265 = vmatpush2.msra.mxu0 0.0
    %2266 = vmatprep.subr.mxu0 0.0
    %2267 = vmatpush2.msra.mxu0 0.0
    %2268 = vmatprep.subr.mxu0 0.0
    %2269 = vmatpush2.msra.mxu0 0.0
    %2270 = vmatprep.subr.mxu0 0.0
    %2271 = vmatpush2.msra.mxu0 0.0
    %2272 = vmatprep.subr.mxu0 0.0
    %2273 = vmatpush2.msra.mxu0 0.0
    %2274 = vmatprep.subr.mxu0 0.0
    %2275 = vmatpush2.msra.mxu0 0.0
    %2276 = vmatprep.subr.mxu0 0.0
    %2277 = vmatpush2.msra.mxu0 0.0
    %2278 = vmatprep.subr.mxu0 0.0
    %2279 = vmatpush2.msra.mxu0 0.0
    %2280 = vmatprep.subr.mxu0 0.0
    %2281 = vmatpush2.msra.mxu0 0.0
    %2282 = vmatprep.subr.mxu0 0.0
    %2283 = vmatpush2.msra.mxu0 0.0
    %2284 = vmatprep.subr.mxu0 0.0
    %2285 = vmatpush2.msra.mxu0 0.0
    %2286 = vmatprep.subr.mxu0 0.0
    %2287 = vmatpush2.msra.mxu0 0.0
    %2288 = vmatprep.subr.mxu0 0.0
    %2289 = vmatpush2.msra.mxu0 0.0
    %2290 = vmatprep.subr.mxu0 0.0
    %2291 = vmatpush2.msra.mxu0 0.0
    %2292 = vmatprep.mubr.f32.mxu0 0.0
    %2293 = vmatmul.mubr.f32.gmra.mxu0 %v2226
    %v2294 = vpop.f32.mrf.mxu0
    %v2295 = vadd.f32 0.0, %v2294
    %v2296 = vpop.f32.mrf.mxu0
    %2297 = vdwg.mxu0
    %v2299 = vrot.slane %v2295, 6
    %v2301 = vadd.f32 %v2222, %v2299
    %v2302 = vxor.u32 %v2301, 2147483648
    %v2303 = vmul.f32 %v2302, 1.442695
    %v2304 = vpow.pop %v2303
    %v2305 = vadd.f32 %v2304, 1.0
    %v2306 = vrcp.pop %v2305
    %v2307 = vmul.f32 1.0, %v2306
    %v2308 = vtanh.pop %v2301
    %v2310 = vrot.slane %v2213, 6
    %v2312 = vmul.f32 %v2307, %v2310
    %2314 = vrot.lane.b32.xlu0 %v2308, 32
    %v2315 = vpop.permute.xlu0 %2314
    %v2317 = vmul.f32 %v2307, %v2315
    %2319 = vrot.lane.b32.xlu0 %v2317, 32
    %v2320 = vpop.permute.xlu0 %2319
    %v2322 = vadd.f32 %v2312, %v2320
    %v2323 = vtanh.pop %v2322
    %2325 = vrot.lane.b32.xlu0 %v2323, 32
    %v2326 = vpop.permute.xlu0 %2325
    %v2328 = vmul.f32 %v2307, %v2326
    %v2330 = vrot.slane %v2328, 2
    %2331 = vrot.lane.b32.xlu0 %v2330, 64
    %v2332 = vpop.permute.xlu0 %2331
    %v2333 = vsel %vm160, %v2332, 0
    %2335 = vmatprep.subr.mxu0 0.0
    %2336 = vmatpush1.msra.mxu0 0.0
    %2337 = vmatprep.subr.mxu0 0.0
    %2338 = vmatpush1.msra.mxu0 0.0
    %2339 = vmatprep.subr.mxu0 0.0
    %2340 = vmatpush1.msra.mxu0 0.0
    %2341 = vmatprep.subr.mxu0 0.0
    %2342 = vmatpush1.msra.mxu0 0.0
    %2343 = vmatprep.subr.mxu0 0.0
    %2344 = vmatpush1.msra.mxu0 0.0
    %2345 = vmatprep.subr.mxu0 0.0
    %2346 = vmatpush1.msra.mxu0 0.0
    %2347 = vmatprep.subr.mxu0 0.0
    %2348 = vmatpush1.msra.mxu0 0.0
    %2349 = vmatprep.subr.mxu0 0.0
    %2350 = vmatpush1.msra.mxu0 0.0
    %2351 = vmatprep.subr.mxu0 0.0
    %2352 = vmatpush1.msra.mxu0 0.0
    %2353 = vmatprep.subr.mxu0 0.0
    %2354 = vmatpush1.msra.mxu0 0.0
    %2355 = vmatprep.subr.mxu0 0.0
    %2356 = vmatpush1.msra.mxu0 0.0
    %2357 = vmatprep.subr.mxu0 0.0
    %2358 = vmatpush1.msra.mxu0 0.0
    %2359 = vmatprep.subr.mxu0 0.0
    %2360 = vmatpush1.msra.mxu0 %v1965
    %2361 = vmatprep.subr.mxu0 0.0
    %2362 = vmatpush1.msra.mxu0 %v1964
    %2363 = vmatprep.subr.mxu0 0.0
    %2364 = vmatpush1.msra.mxu0 %v1963
    %2365 = vmatprep.subr.mxu0 0.0
    %2366 = vmatpush1.msra.mxu0 %v1962
    %2367 = vmatprep.subr.mxu0 0.0
    %2368 = vmatpush2.msra.mxu0 0.0
    %2369 = vmatprep.subr.mxu0 0.0
    %2370 = vmatpush2.msra.mxu0 0.0
    %2371 = vmatprep.subr.mxu0 0.0
    %2372 = vmatpush2.msra.mxu0 0.0
    %2373 = vmatprep.subr.mxu0 0.0
    %2374 = vmatpush2.msra.mxu0 0.0
    %2375 = vmatprep.subr.mxu0 0.0
    %2376 = vmatpush2.msra.mxu0 0.0
    %2377 = vmatprep.subr.mxu0 0.0
    %2378 = vmatpush2.msra.mxu0 0.0
    %2379 = vmatprep.subr.mxu0 0.0
    %2380 = vmatpush2.msra.mxu0 0.0
    %2381 = vmatprep.subr.mxu0 0.0
    %2382 = vmatpush2.msra.mxu0 0.0
    %2383 = vmatprep.subr.mxu0 0.0
    %2384 = vmatpush2.msra.mxu0 0.0
    %2385 = vmatprep.subr.mxu0 0.0
    %2386 = vmatpush2.msra.mxu0 0.0
    %2387 = vmatprep.subr.mxu0 0.0
    %2388 = vmatpush2.msra.mxu0 0.0
    %2389 = vmatprep.subr.mxu0 0.0
    %2390 = vmatpush2.msra.mxu0 0.0
    %2391 = vmatprep.subr.mxu0 0.0
    %2392 = vmatpush2.msra.mxu0 0.0
    %2393 = vmatprep.subr.mxu0 0.0
    %2394 = vmatpush2.msra.mxu0 0.0
    %2395 = vmatprep.subr.mxu0 0.0
    %2396 = vmatpush2.msra.mxu0 0.0
    %2397 = vmatprep.subr.mxu0 0.0
    %2398 = vmatpush2.msra.mxu0 0.0
    %2399 = vmatprep.mubr.f32.mxu0 0.0
    %2400 = vmatmul.mubr.f32.gmra.mxu0 %v2333
    %v2401 = vpop.f32.mrf.mxu0
    %v2402 = vadd.f32 0.0, %v2401
    %v2403 = vpop.f32.mrf.mxu0
    %2404 = vdwg.mxu0
    %v2406 = vrot.slane %v2402, 4
    %v2408 = vadd.f32 %v2117, %v2406
    %v2409 = vxor.u32 %v2408, 2147483648
    %v2410 = vmul.f32 %v2409, 1.442695
    %v2411 = vpow.pop %v2410
    %v2412 = vadd.f32 %v2411, 1.0
    %v2413 = vrcp.pop %v2412
    %v2414 = vmul.f32 1.0, %v2413
    %v2415 = vtanh.pop %v2408
    %v2417 = vrot.slane %v2322, 6
    %v2419 = vmul.f32 %v2414, %v2417
    %2421 = vrot.lane.b32.xlu0 %v2415, 32
    %v2422 = vpop.permute.xlu0 %2421
    %v2424 = vmul.f32 %v2414, %v2422
    %2426 = vrot.lane.b32.xlu0 %v2424, 32
    %v2427 = vpop.permute.xlu0 %2426
    %v2429 = vadd.f32 %v2419, %v2427
    %v2430 = vtanh.pop %v2429
    %2432 = vrot.lane.b32.xlu0 %v2430, 32
    %v2433 = vpop.permute.xlu0 %2432
    %v2435 = vmul.f32 %v2414, %v2433
    %v2437 = vrot.slane %v2435, 4
    %2438 = vrot.lane.b32.xlu0 %v2437, 64
    %v2439 = vpop.permute.xlu0 %2438
    %v2440 = vsel %vm160, %v2439, 0
    %2442 = vmatprep.subr.mxu0 0.0
    %2443 = vmatpush1.msra.mxu0 0.0
    %2444 = vmatprep.subr.mxu0 0.0
    %2445 = vmatpush1.msra.mxu0 0.0
    %2446 = vmatprep.subr.mxu0 0.0
    %2447 = vmatpush1.msra.mxu0 0.0
    %2448 = vmatprep.subr.mxu0 0.0
    %2449 = vmatpush1.msra.mxu0 0.0
    %2450 = vmatprep.subr.mxu0 0.0
    %2451 = vmatpush1.msra.mxu0 0.0
    %2452 = vmatprep.subr.mxu0 0.0
    %2453 = vmatpush1.msra.mxu0 0.0
    %2454 = vmatprep.subr.mxu0 0.0
    %2455 = vmatpush1.msra.mxu0 0.0
    %2456 = vmatprep.subr.mxu0 0.0
    %2457 = vmatpush1.msra.mxu0 0.0
    %2458 = vmatprep.subr.mxu0 0.0
    %2459 = vmatpush1.msra.mxu0 0.0
    %2460 = vmatprep.subr.mxu0 0.0
    %2461 = vmatpush1.msra.mxu0 0.0
    %2462 = vmatprep.subr.mxu0 0.0
    %2463 = vmatpush1.msra.mxu0 0.0
    %2464 = vmatprep.subr.mxu0 0.0
    %2465 = vmatpush1.msra.mxu0 0.0
    %2466 = vmatprep.subr.mxu0 0.0
    %2467 = vmatpush1.msra.mxu0 %v1965
    %2468 = vmatprep.subr.mxu0 0.0
    %2469 = vmatpush1.msra.mxu0 %v1964
    %2470 = vmatprep.subr.mxu0 0.0
    %2471 = vmatpush1.msra.mxu0 %v1963
    %2472 = vmatprep.subr.mxu0 0.0
    %2473 = vmatpush1.msra.mxu0 %v1962
    %2474 = vmatprep.subr.mxu0 0.0
    %2475 = vmatpush2.msra.mxu0 0.0
    %2476 = vmatprep.subr.mxu0 0.0
    %2477 = vmatpush2.msra.mxu0 0.0
    %2478 = vmatprep.subr.mxu0 0.0
    %2479 = vmatpush2.msra.mxu0 0.0
    %2480 = vmatprep.subr.mxu0 0.0
    %2481 = vmatpush2.msra.mxu0 0.0
    %2482 = vmatprep.subr.mxu0 0.0
    %2483 = vmatpush2.msra.mxu0 0.0
    %2484 = vmatprep.subr.mxu0 0.0
    %2485 = vmatpush2.msra.mxu0 0.0
    %2486 = vmatprep.subr.mxu0 0.0
    %2487 = vmatpush2.msra.mxu0 0.0
    %2488 = vmatprep.subr.mxu0 0.0
    %2489 = vmatpush2.msra.mxu0 0.0
    %2490 = vmatprep.subr.mxu0 0.0
    %2491 = vmatpush2.msra.mxu0 0.0
    %2492 = vmatprep.subr.mxu0 0.0
    %2493 = vmatpush2.msra.mxu0 0.0
    %2494 = vmatprep.subr.mxu0 0.0
    %2495 = vmatpush2.msra.mxu0 0.0
    %2496 = vmatprep.subr.mxu0 0.0
    %2497 = vmatpush2.msra.mxu0 0.0
    %2498 = vmatprep.subr.mxu0 0.0
    %2499 = vmatpush2.msra.mxu0 0.0
    %2500 = vmatprep.subr.mxu0 0.0
    %2501 = vmatpush2.msra.mxu0 0.0
    %2502 = vmatprep.subr.mxu0 0.0
    %2503 = vmatpush2.msra.mxu0 0.0
    %2504 = vmatprep.subr.mxu0 0.0
    %2505 = vmatpush2.msra.mxu0 0.0
    %2506 = vmatprep.mubr.f32.mxu0 0.0
    %2507 = vmatmul.mubr.f32.gmra.mxu0 %v2440
    %v2508 = vpop.f32.mrf.mxu0
    %v2509 = vadd.f32 0.0, %v2508
    %v2510 = vpop.f32.mrf.mxu0
    %2511 = vdwg.mxu0
    %v2513 = vrot.slane %v2509, 2
    %v2515 = vadd.f32 %v2222, %v2513
    %v2516 = vxor.u32 %v2515, 2147483648
    %v2517 = vmul.f32 %v2516, 1.442695
    %v2518 = vpow.pop %v2517
    %v2519 = vadd.f32 %v2518, 1.0
    %v2520 = vrcp.pop %v2519
    %v2521 = vmul.f32 1.0, %v2520
    %v2522 = vtanh.pop %v2515
    %v2524 = vrot.slane %v2429, 6
    %v2526 = vmul.f32 %v2521, %v2524
    %2528 = vrot.lane.b32.xlu0 %v2522, 32
    %v2529 = vpop.permute.xlu0 %2528
    %v2531 = vmul.f32 %v2521, %v2529
    %2533 = vrot.lane.b32.xlu0 %v2531, 32
    %v2534 = vpop.permute.xlu0 %2533
    %v2536 = vadd.f32 %v2526, %v2534
    %v2537 = vtanh.pop %v2536
    %2539 = vrot.lane.b32.xlu0 %v2537, 32
    %v2540 = vpop.permute.xlu0 %2539
    %v2542 = vmul.f32 %v2521, %v2540
    %v2545 = vrot.slane %v2542, 6
    %2546 = vrot.lane.b32.xlu0 %v2545, 64
    %v2547 = vpop.permute.xlu0 %2546
    %v2549 = vsel %vm1948, %v2225, %v2547
    %2550 = vrot.lane.b32.xlu0 %v2328, 64
    %v2551 = vpop.permute.xlu0 %2550
    %v2553 = vrot.slane %v2435, 2
    %2554 = vrot.lane.b32.xlu0 %v2553, 64
    %v2555 = vpop.permute.xlu0 %2554
    %v2557 = vsel %vm1948, %v2551, %v2555
    %2558 = vrot.lane.b32.xlu0 %v2435, 64
    %v2559 = vpop.permute.xlu0 %2558
    %v2561 = vrot.slane %v2328, 6
    %2562 = vrot.lane.b32.xlu0 %v2561, 64
    %v2563 = vpop.permute.xlu0 %2562
    %v2565 = vsel %vm1948, %v2559, %v2563
    %2566 = vrot.lane.b32.xlu0 %v2542, 64
    %v2567 = vpop.permute.xlu0 %2566
    %v2569 = vrot.slane %v2219, 2
    %2570 = vrot.lane.b32.xlu0 %v2569, 64
    %v2571 = vpop.permute.xlu0 %2570
    %v2573 = vsel %vm1948, %v2567, %v2571
    %vm2574 = vcmask 1041408
    %v2575 = vsel %vm2574, %v2549, %v2557
    %v2576 = vsel %vm69, %v2575, %v2565
    %vm2577 = vcmask 1045504
    %v2578 = vsel %vm2577, %v2576, %v2573
    %s2579 = scalar_lea.vmem %s4, 4
    %v2580 = vld [vmem:[%s2579] sm:$0x3]
    %s2581 = scalar_lea.vmem %s4, 6
    %v2582 = vld [vmem:[%s2581] sm:$0x3]
    %2584 = vrot.lane.b32.xlu0 %v2582, 16
    %v2585 = vpop.permute.xlu0 %2584
    %v2587 = vsel %vm1948, %v2580, %v2585
    %s2588 = scalar_lea.vmem %s5, 4
    %v2589 = vld [vmem:[%s2588] sm:$0x3]
    %s2590 = scalar_lea.vmem %s5, 6
    %v2591 = vld [vmem:[%s2590] sm:$0x3]
    %2593 = vrot.lane.b32.xlu0 %v2591, 16
    %v2594 = vpop.permute.xlu0 %2593
    %v2596 = vsel %vm1948, %v2589, %v2594
    %v2597 = vld [vmem:[%s8] sm:$0xff]
    %v2598 = vld [vmem:[%s8 + $0x8] sm:$0xff]
    %v2599 = vld [vmem:[%s8 + $0x10] sm:$0xff]
    %v2600 = vld [vmem:[%s8 + $0x18] sm:$0xff]
    %v2601 = vld [vmem:[%s8 + $0x20] sm:$0xff]
    %v2602 = vld [vmem:[%s8 + $0x28] sm:$0xff]
    %v2603 = vld [vmem:[%s8 + $0x30] sm:$0xff]
    %v2604 = vld [vmem:[%s8 + $0x38] sm:$0xff]
    %v2605 = vld [vmem:[%s8 + $0x40] sm:$0xff]
    %v2606 = vld [vmem:[%s8 + $0x48] sm:$0xff]
    %v2607 = vld [vmem:[%s8 + $0x50] sm:$0xff]
    %v2608 = vld [vmem:[%s8 + $0x58] sm:$0xff]
    %v2609 = vld [vmem:[%s8 + $0x60] sm:$0x1]
    %v2610 = vlaneseq
    %v2611 = vshrl.u32 %v2610, 7
    %v2612 = vsub.s32 0, %v2611
    %v2613 = vrot.slane %v2609, %v2612
    %v2615 = vsel %vm160, %v2578, 0
    %2617 = vmatprep.subr.mxu0 0.0
    %2618 = vmatpush1.msra.mxu0 0.0
    %2619 = vmatprep.subr.mxu0 0.0
    %2620 = vmatpush1.msra.mxu0 0.0
    %2621 = vmatprep.subr.mxu0 0.0
    %2622 = vmatpush1.msra.mxu0 0.0
    %2623 = vmatprep.subr.mxu0 0.0
    %2624 = vmatpush1.msra.mxu0 0.0
    %2625 = vmatprep.subr.mxu0 0.0
    %2626 = vmatpush1.msra.mxu0 0.0
    %2627 = vmatprep.subr.mxu0 0.0
    %2628 = vmatpush1.msra.mxu0 0.0
    %2629 = vmatprep.subr.mxu0 0.0
    %2630 = vmatpush1.msra.mxu0 0.0
    %2631 = vmatprep.subr.mxu0 0.0
    %2632 = vmatpush1.msra.mxu0 0.0
    %2633 = vmatprep.subr.mxu0 0.0
    %2634 = vmatpush1.msra.mxu0 0.0
    %2635 = vmatprep.subr.mxu0 0.0
    %2636 = vmatpush1.msra.mxu0 0.0
    %2637 = vmatprep.subr.mxu0 0.0
    %2638 = vmatpush1.msra.mxu0 0.0
    %2639 = vmatprep.subr.mxu0 0.0
    %2640 = vmatpush1.msra.mxu0 0.0
    %2641 = vmatprep.subr.mxu0 0.0
    %2642 = vmatpush1.msra.mxu0 %v2600
    %2643 = vmatprep.subr.mxu0 0.0
    %2644 = vmatpush1.msra.mxu0 %v2599
    %2645 = vmatprep.subr.mxu0 0.0
    %2646 = vmatpush1.msra.mxu0 %v2598
    %2647 = vmatprep.subr.mxu0 0.0
    %2648 = vmatpush1.msra.mxu0 %v2597
    %2649 = vmatprep.subr.mxu0 0.0
    %2650 = vmatpush2.msra.mxu0 0.0
    %2651 = vmatprep.subr.mxu0 0.0
    %2652 = vmatpush2.msra.mxu0 0.0
    %2653 = vmatprep.subr.mxu0 0.0
    %2654 = vmatpush2.msra.mxu0 0.0
    %2655 = vmatprep.subr.mxu0 0.0
    %2656 = vmatpush2.msra.mxu0 0.0
    %2657 = vmatprep.subr.mxu0 0.0
    %2658 = vmatpush2.msra.mxu0 0.0
    %2659 = vmatprep.subr.mxu0 0.0
    %2660 = vmatpush2.msra.mxu0 0.0
    %2661 = vmatprep.subr.mxu0 0.0
    %2662 = vmatpush2.msra.mxu0 0.0
    %2663 = vmatprep.subr.mxu0 0.0
    %2664 = vmatpush2.msra.mxu0 0.0
    %2665 = vmatprep.subr.mxu0 0.0
    %2666 = vmatpush2.msra.mxu0 0.0
    %2667 = vmatprep.subr.mxu0 0.0
    %2668 = vmatpush2.msra.mxu0 0.0
    %2669 = vmatprep.subr.mxu0 0.0
    %2670 = vmatpush2.msra.mxu0 0.0
    %2671 = vmatprep.subr.mxu0 0.0
    %2672 = vmatpush2.msra.mxu0 0.0
    %2673 = vmatprep.subr.mxu0 0.0
    %2674 = vmatpush2.msra.mxu0 0.0
    %2675 = vmatprep.subr.mxu0 0.0
    %2676 = vmatpush2.msra.mxu0 0.0
    %2677 = vmatprep.subr.mxu0 0.0
    %2678 = vmatpush2.msra.mxu0 0.0
    %2679 = vmatprep.subr.mxu0 0.0
    %2680 = vmatpush2.msra.mxu0 0.0
    %2681 = vmatprep.mubr.f32.mxu0 0.0
    %2682 = vmatmul.mubr.f32.gmra.mxu0 %v2615
    %v2683 = vpop.f32.mrf.mxu0
    %v2684 = vadd.f32 %v2613, %v2683
    %v2685 = vpop.f32.mrf.mxu0
    %2686 = vdwg.mxu0
    %2687 = vmatprep.subr.mxu0 0.0
    %2688 = vmatpush1.msra.mxu0 0.0
    %2689 = vmatprep.subr.mxu0 0.0
    %2690 = vmatpush1.msra.mxu0 0.0
    %2691 = vmatprep.subr.mxu0 0.0
    %2692 = vmatpush1.msra.mxu0 0.0
    %2693 = vmatprep.subr.mxu0 0.0
    %2694 = vmatpush1.msra.mxu0 0.0
    %2695 = vmatprep.subr.mxu0 0.0
    %2696 = vmatpush1.msra.mxu0 0.0
    %2697 = vmatprep.subr.mxu0 0.0
    %2698 = vmatpush1.msra.mxu0 0.0
    %2699 = vmatprep.subr.mxu0 0.0
    %2700 = vmatpush1.msra.mxu0 0.0
    %2701 = vmatprep.subr.mxu0 0.0
    %2702 = vmatpush1.msra.mxu0 0.0
    %2703 = vmatprep.subr.mxu0 0.0
    %2704 = vmatpush1.msra.mxu0 0.0
    %2705 = vmatprep.subr.mxu0 0.0
    %2706 = vmatpush1.msra.mxu0 0.0
    %2707 = vmatprep.subr.mxu0 0.0
    %2708 = vmatpush1.msra.mxu0 0.0
    %2709 = vmatprep.subr.mxu0 0.0
    %2710 = vmatpush1.msra.mxu0 0.0
    %2711 = vmatprep.subr.mxu0 0.0
    %2712 = vmatpush1.msra.mxu0 %v2604
    %2713 = vmatprep.subr.mxu0 0.0
    %2714 = vmatpush1.msra.mxu0 %v2603
    %2715 = vmatprep.subr.mxu0 0.0
    %2716 = vmatpush1.msra.mxu0 %v2602
    %2717 = vmatprep.subr.mxu0 0.0
    %2718 = vmatpush1.msra.mxu0 %v2601
    %2719 = vmatprep.subr.mxu0 0.0
    %2720 = vmatpush2.msra.mxu0 0.0
    %2721 = vmatprep.subr.mxu0 0.0
    %2722 = vmatpush2.msra.mxu0 0.0
    %2723 = vmatprep.subr.mxu0 0.0
    %2724 = vmatpush2.msra.mxu0 0.0
    %2725 = vmatprep.subr.mxu0 0.0
    %2726 = vmatpush2.msra.mxu0 0.0
    %2727 = vmatprep.subr.mxu0 0.0
    %2728 = vmatpush2.msra.mxu0 0.0
    %2729 = vmatprep.subr.mxu0 0.0
    %2730 = vmatpush2.msra.mxu0 0.0
    %2731 = vmatprep.subr.mxu0 0.0
    %2732 = vmatpush2.msra.mxu0 0.0
    %2733 = vmatprep.subr.mxu0 0.0
    %2734 = vmatpush2.msra.mxu0 0.0
    %2735 = vmatprep.subr.mxu0 0.0
    %2736 = vmatpush2.msra.mxu0 0.0
    %2737 = vmatprep.subr.mxu0 0.0
    %2738 = vmatpush2.msra.mxu0 0.0
    %2739 = vmatprep.subr.mxu0 0.0
    %2740 = vmatpush2.msra.mxu0 0.0
    %2741 = vmatprep.subr.mxu0 0.0
    %2742 = vmatpush2.msra.mxu0 0.0
    %2743 = vmatprep.subr.mxu0 0.0
    %2744 = vmatpush2.msra.mxu0 0.0
    %2745 = vmatprep.subr.mxu0 0.0
    %2746 = vmatpush2.msra.mxu0 0.0
    %2747 = vmatprep.subr.mxu0 0.0
    %2748 = vmatpush2.msra.mxu0 0.0
    %2749 = vmatprep.subr.mxu0 0.0
    %2750 = vmatpush2.msra.mxu0 0.0
    %2751 = vmatprep.mubr.f32.mxu0 0.0
    %2752 = vmatmul.mubr.f32.gmra.mxu0 %v2615
    %v2753 = vpop.f32.mrf.mxu0
    %v2754 = vadd.f32 0.0, %v2753
    %v2755 = vpop.f32.mrf.mxu0
    %2756 = vdwg.mxu0
    %v2758 = vrot.slane %v2754, 6
    %v2760 = vadd.f32 %v2684, %v2758
    %v2762 = vsel %vm160, %v2587, 0
    %2764 = vmatprep.subr.mxu0 0.0
    %2765 = vmatpush1.msra.mxu0 0.0
    %2766 = vmatprep.subr.mxu0 0.0
    %2767 = vmatpush1.msra.mxu0 0.0
    %2768 = vmatprep.subr.mxu0 0.0
    %2769 = vmatpush1.msra.mxu0 0.0
    %2770 = vmatprep.subr.mxu0 0.0
    %2771 = vmatpush1.msra.mxu0 0.0
    %2772 = vmatprep.subr.mxu0 0.0
    %2773 = vmatpush1.msra.mxu0 0.0
    %2774 = vmatprep.subr.mxu0 0.0
    %2775 = vmatpush1.msra.mxu0 0.0
    %2776 = vmatprep.subr.mxu0 0.0
    %2777 = vmatpush1.msra.mxu0 0.0
    %2778 = vmatprep.subr.mxu0 0.0
    %2779 = vmatpush1.msra.mxu0 0.0
    %2780 = vmatprep.subr.mxu0 0.0
    %2781 = vmatpush1.msra.mxu0 0.0
    %2782 = vmatprep.subr.mxu0 0.0
    %2783 = vmatpush1.msra.mxu0 0.0
    %2784 = vmatprep.subr.mxu0 0.0
    %2785 = vmatpush1.msra.mxu0 0.0
    %2786 = vmatprep.subr.mxu0 0.0
    %2787 = vmatpush1.msra.mxu0 0.0
    %2788 = vmatprep.subr.mxu0 0.0
    %2789 = vmatpush1.msra.mxu0 %v2608
    %2790 = vmatprep.subr.mxu0 0.0
    %2791 = vmatpush1.msra.mxu0 %v2607
    %2792 = vmatprep.subr.mxu0 0.0
    %2793 = vmatpush1.msra.mxu0 %v2606
    %2794 = vmatprep.subr.mxu0 0.0
    %2795 = vmatpush1.msra.mxu0 %v2605
    %2796 = vmatprep.subr.mxu0 0.0
    %2797 = vmatpush2.msra.mxu0 0.0
    %2798 = vmatprep.subr.mxu0 0.0
    %2799 = vmatpush2.msra.mxu0 0.0
    %2800 = vmatprep.subr.mxu0 0.0
    %2801 = vmatpush2.msra.mxu0 0.0
    %2802 = vmatprep.subr.mxu0 0.0
    %2803 = vmatpush2.msra.mxu0 0.0
    %2804 = vmatprep.subr.mxu0 0.0
    %2805 = vmatpush2.msra.mxu0 0.0
    %2806 = vmatprep.subr.mxu0 0.0
    %2807 = vmatpush2.msra.mxu0 0.0
    %2808 = vmatprep.subr.mxu0 0.0
    %2809 = vmatpush2.msra.mxu0 0.0
    %2810 = vmatprep.subr.mxu0 0.0
    %2811 = vmatpush2.msra.mxu0 0.0
    %2812 = vmatprep.subr.mxu0 0.0
    %2813 = vmatpush2.msra.mxu0 0.0
    %2814 = vmatprep.subr.mxu0 0.0
    %2815 = vmatpush2.msra.mxu0 0.0
    %2816 = vmatprep.subr.mxu0 0.0
    %2817 = vmatpush2.msra.mxu0 0.0
    %2818 = vmatprep.subr.mxu0 0.0
    %2819 = vmatpush2.msra.mxu0 0.0
    %2820 = vmatprep.subr.mxu0 0.0
    %2821 = vmatpush2.msra.mxu0 0.0
    %2822 = vmatprep.subr.mxu0 0.0
    %2823 = vmatpush2.msra.mxu0 0.0
    %2824 = vmatprep.subr.mxu0 0.0
    %2825 = vmatpush2.msra.mxu0 0.0
    %2826 = vmatprep.subr.mxu0 0.0
    %2827 = vmatpush2.msra.mxu0 0.0
    %2828 = vmatprep.mubr.f32.mxu0 0.0
    %2829 = vmatmul.mubr.f32.gmra.mxu0 %v2762
    %v2830 = vpop.f32.mrf.mxu0
    %v2831 = vadd.f32 0.0, %v2830
    %v2832 = vpop.f32.mrf.mxu0
    %2833 = vdwg.mxu0
    %v2834 = vadd.f32 %v2760, %v2831
    %v2835 = vxor.u32 %v2834, 2147483648
    %v2836 = vmul.f32 %v2835, 1.442695
    %v2837 = vpow.pop %v2836
    %v2838 = vadd.f32 %v2837, 1.0
    %v2839 = vrcp.pop %v2838
    %v2840 = vmul.f32 1.0, %v2839
    %v2841 = vtanh.pop %v2834
    %2843 = vrot.lane.b32.xlu0 %v2596, 32
    %v2844 = vpop.permute.xlu0 %2843
    %v2846 = vmul.f32 %v2840, %v2844
    %2848 = vrot.lane.b32.xlu0 %v2841, 32
    %v2849 = vpop.permute.xlu0 %2848
    %v2851 = vmul.f32 %v2840, %v2849
    %2853 = vrot.lane.b32.xlu0 %v2851, 32
    %v2854 = vpop.permute.xlu0 %2853
    %v2856 = vadd.f32 %v2846, %v2854
    %v2857 = vtanh.pop %v2856
    %2859 = vrot.lane.b32.xlu0 %v2857, 32
    %v2860 = vpop.permute.xlu0 %2859
    %v2862 = vmul.f32 %v2840, %v2860
    %v2863 = vrot.slane %v2754, 2
    %v2865 = vadd.f32 %v2684, %v2863
    %2867 = vrot.lane.b32.xlu0 %v2862, 64
    %v2868 = vpop.permute.xlu0 %2867
    %v2869 = vsel %vm160, %v2868, 0
    %2871 = vmatprep.subr.mxu0 0.0
    %2872 = vmatpush1.msra.mxu0 0.0
    %2873 = vmatprep.subr.mxu0 0.0
    %2874 = vmatpush1.msra.mxu0 0.0
    %2875 = vmatprep.subr.mxu0 0.0
    %2876 = vmatpush1.msra.mxu0 0.0
    %2877 = vmatprep.subr.mxu0 0.0
    %2878 = vmatpush1.msra.mxu0 0.0
    %2879 = vmatprep.subr.mxu0 0.0
    %2880 = vmatpush1.msra.mxu0 0.0
    %2881 = vmatprep.subr.mxu0 0.0
    %2882 = vmatpush1.msra.mxu0 0.0
    %2883 = vmatprep.subr.mxu0 0.0
    %2884 = vmatpush1.msra.mxu0 0.0
    %2885 = vmatprep.subr.mxu0 0.0
    %2886 = vmatpush1.msra.mxu0 0.0
    %2887 = vmatprep.subr.mxu0 0.0
    %2888 = vmatpush1.msra.mxu0 0.0
    %2889 = vmatprep.subr.mxu0 0.0
    %2890 = vmatpush1.msra.mxu0 0.0
    %2891 = vmatprep.subr.mxu0 0.0
    %2892 = vmatpush1.msra.mxu0 0.0
    %2893 = vmatprep.subr.mxu0 0.0
    %2894 = vmatpush1.msra.mxu0 0.0
    %2895 = vmatprep.subr.mxu0 0.0
    %2896 = vmatpush1.msra.mxu0 %v2608
    %2897 = vmatprep.subr.mxu0 0.0
    %2898 = vmatpush1.msra.mxu0 %v2607
    %2899 = vmatprep.subr.mxu0 0.0
    %2900 = vmatpush1.msra.mxu0 %v2606
    %2901 = vmatprep.subr.mxu0 0.0
    %2902 = vmatpush1.msra.mxu0 %v2605
    %2903 = vmatprep.subr.mxu0 0.0
    %2904 = vmatpush2.msra.mxu0 0.0
    %2905 = vmatprep.subr.mxu0 0.0
    %2906 = vmatpush2.msra.mxu0 0.0
    %2907 = vmatprep.subr.mxu0 0.0
    %2908 = vmatpush2.msra.mxu0 0.0
    %2909 = vmatprep.subr.mxu0 0.0
    %2910 = vmatpush2.msra.mxu0 0.0
    %2911 = vmatprep.subr.mxu0 0.0
    %2912 = vmatpush2.msra.mxu0 0.0
    %2913 = vmatprep.subr.mxu0 0.0
    %2914 = vmatpush2.msra.mxu0 0.0
    %2915 = vmatprep.subr.mxu0 0.0
    %2916 = vmatpush2.msra.mxu0 0.0
    %2917 = vmatprep.subr.mxu0 0.0
    %2918 = vmatpush2.msra.mxu0 0.0
    %2919 = vmatprep.subr.mxu0 0.0
    %2920 = vmatpush2.msra.mxu0 0.0
    %2921 = vmatprep.subr.mxu0 0.0
    %2922 = vmatpush2.msra.mxu0 0.0
    %2923 = vmatprep.subr.mxu0 0.0
    %2924 = vmatpush2.msra.mxu0 0.0
    %2925 = vmatprep.subr.mxu0 0.0
    %2926 = vmatpush2.msra.mxu0 0.0
    %2927 = vmatprep.subr.mxu0 0.0
    %2928 = vmatpush2.msra.mxu0 0.0
    %2929 = vmatprep.subr.mxu0 0.0
    %2930 = vmatpush2.msra.mxu0 0.0
    %2931 = vmatprep.subr.mxu0 0.0
    %2932 = vmatpush2.msra.mxu0 0.0
    %2933 = vmatprep.subr.mxu0 0.0
    %2934 = vmatpush2.msra.mxu0 0.0
    %2935 = vmatprep.mubr.f32.mxu0 0.0
    %2936 = vmatmul.mubr.f32.gmra.mxu0 %v2869
    %v2937 = vpop.f32.mrf.mxu0
    %v2938 = vadd.f32 0.0, %v2937
    %v2939 = vpop.f32.mrf.mxu0
    %2940 = vdwg.mxu0
    %v2942 = vrot.slane %v2938, 6
    %v2944 = vadd.f32 %v2865, %v2942
    %v2945 = vxor.u32 %v2944, 2147483648
    %v2946 = vmul.f32 %v2945, 1.442695
    %v2947 = vpow.pop %v2946
    %v2948 = vadd.f32 %v2947, 1.0
    %v2949 = vrcp.pop %v2948
    %v2950 = vmul.f32 1.0, %v2949
    %v2951 = vtanh.pop %v2944
    %v2953 = vrot.slane %v2856, 6
    %v2955 = vmul.f32 %v2950, %v2953
    %2957 = vrot.lane.b32.xlu0 %v2951, 32
    %v2958 = vpop.permute.xlu0 %2957
    %v2960 = vmul.f32 %v2950, %v2958
    %2962 = vrot.lane.b32.xlu0 %v2960, 32
    %v2963 = vpop.permute.xlu0 %2962
    %v2965 = vadd.f32 %v2955, %v2963
    %v2966 = vtanh.pop %v2965
    %2968 = vrot.lane.b32.xlu0 %v2966, 32
    %v2969 = vpop.permute.xlu0 %2968
    %v2971 = vmul.f32 %v2950, %v2969
    %v2973 = vrot.slane %v2971, 2
    %2974 = vrot.lane.b32.xlu0 %v2973, 64
    %v2975 = vpop.permute.xlu0 %2974
    %v2976 = vsel %vm160, %v2975, 0
    %2978 = vmatprep.subr.mxu0 0.0
    %2979 = vmatpush1.msra.mxu0 0.0
    %2980 = vmatprep.subr.mxu0 0.0
    %2981 = vmatpush1.msra.mxu0 0.0
    %2982 = vmatprep.subr.mxu0 0.0
    %2983 = vmatpush1.msra.mxu0 0.0
    %2984 = vmatprep.subr.mxu0 0.0
    %2985 = vmatpush1.msra.mxu0 0.0
    %2986 = vmatprep.subr.mxu0 0.0
    %2987 = vmatpush1.msra.mxu0 0.0
    %2988 = vmatprep.subr.mxu0 0.0
    %2989 = vmatpush1.msra.mxu0 0.0
    %2990 = vmatprep.subr.mxu0 0.0
    %2991 = vmatpush1.msra.mxu0 0.0
    %2992 = vmatprep.subr.mxu0 0.0
    %2993 = vmatpush1.msra.mxu0 0.0
    %2994 = vmatprep.subr.mxu0 0.0
    %2995 = vmatpush1.msra.mxu0 0.0
    %2996 = vmatprep.subr.mxu0 0.0
    %2997 = vmatpush1.msra.mxu0 0.0
    %2998 = vmatprep.subr.mxu0 0.0
    %2999 = vmatpush1.msra.mxu0 0.0
    %3000 = vmatprep.subr.mxu0 0.0
    %3001 = vmatpush1.msra.mxu0 0.0
    %3002 = vmatprep.subr.mxu0 0.0
    %3003 = vmatpush1.msra.mxu0 %v2608
    %3004 = vmatprep.subr.mxu0 0.0
    %3005 = vmatpush1.msra.mxu0 %v2607
    %3006 = vmatprep.subr.mxu0 0.0
    %3007 = vmatpush1.msra.mxu0 %v2606
    %3008 = vmatprep.subr.mxu0 0.0
    %3009 = vmatpush1.msra.mxu0 %v2605
    %3010 = vmatprep.subr.mxu0 0.0
    %3011 = vmatpush2.msra.mxu0 0.0
    %3012 = vmatprep.subr.mxu0 0.0
    %3013 = vmatpush2.msra.mxu0 0.0
    %3014 = vmatprep.subr.mxu0 0.0
    %3015 = vmatpush2.msra.mxu0 0.0
    %3016 = vmatprep.subr.mxu0 0.0
    %3017 = vmatpush2.msra.mxu0 0.0
    %3018 = vmatprep.subr.mxu0 0.0
    %3019 = vmatpush2.msra.mxu0 0.0
    %3020 = vmatprep.subr.mxu0 0.0
    %3021 = vmatpush2.msra.mxu0 0.0
    %3022 = vmatprep.subr.mxu0 0.0
    %3023 = vmatpush2.msra.mxu0 0.0
    %3024 = vmatprep.subr.mxu0 0.0
    %3025 = vmatpush2.msra.mxu0 0.0
    %3026 = vmatprep.subr.mxu0 0.0
    %3027 = vmatpush2.msra.mxu0 0.0
    %3028 = vmatprep.subr.mxu0 0.0
    %3029 = vmatpush2.msra.mxu0 0.0
    %3030 = vmatprep.subr.mxu0 0.0
    %3031 = vmatpush2.msra.mxu0 0.0
    %3032 = vmatprep.subr.mxu0 0.0
    %3033 = vmatpush2.msra.mxu0 0.0
    %3034 = vmatprep.subr.mxu0 0.0
    %3035 = vmatpush2.msra.mxu0 0.0
    %3036 = vmatprep.subr.mxu0 0.0
    %3037 = vmatpush2.msra.mxu0 0.0
    %3038 = vmatprep.subr.mxu0 0.0
    %3039 = vmatpush2.msra.mxu0 0.0
    %3040 = vmatprep.subr.mxu0 0.0
    %3041 = vmatpush2.msra.mxu0 0.0
    %3042 = vmatprep.mubr.f32.mxu0 0.0
    %3043 = vmatmul.mubr.f32.gmra.mxu0 %v2976
    %v3044 = vpop.f32.mrf.mxu0
    %v3045 = vadd.f32 0.0, %v3044
    %v3046 = vpop.f32.mrf.mxu0
    %3047 = vdwg.mxu0
    %v3049 = vrot.slane %v3045, 4
    %v3051 = vadd.f32 %v2760, %v3049
    %v3052 = vxor.u32 %v3051, 2147483648
    %v3053 = vmul.f32 %v3052, 1.442695
    %v3054 = vpow.pop %v3053
    %v3055 = vadd.f32 %v3054, 1.0
    %v3056 = vrcp.pop %v3055
    %v3057 = vmul.f32 1.0, %v3056
    %v3058 = vtanh.pop %v3051
    %v3060 = vrot.slane %v2965, 6
    %v3062 = vmul.f32 %v3057, %v3060
    %3064 = vrot.lane.b32.xlu0 %v3058, 32
    %v3065 = vpop.permute.xlu0 %3064
    %v3067 = vmul.f32 %v3057, %v3065
    %3069 = vrot.lane.b32.xlu0 %v3067, 32
    %v3070 = vpop.permute.xlu0 %3069
    %v3072 = vadd.f32 %v3062, %v3070
    %v3073 = vtanh.pop %v3072
    %3075 = vrot.lane.b32.xlu0 %v3073, 32
    %v3076 = vpop.permute.xlu0 %3075
    %v3078 = vmul.f32 %v3057, %v3076
    %v3080 = vrot.slane %v3078, 4
    %3081 = vrot.lane.b32.xlu0 %v3080, 64
    %v3082 = vpop.permute.xlu0 %3081
    %v3083 = vsel %vm160, %v3082, 0
    %3085 = vmatprep.subr.mxu0 0.0
    %3086 = vmatpush1.msra.mxu0 0.0
    %3087 = vmatprep.subr.mxu0 0.0
    %3088 = vmatpush1.msra.mxu0 0.0
    %3089 = vmatprep.subr.mxu0 0.0
    %3090 = vmatpush1.msra.mxu0 0.0
    %3091 = vmatprep.subr.mxu0 0.0
    %3092 = vmatpush1.msra.mxu0 0.0
    %3093 = vmatprep.subr.mxu0 0.0
    %3094 = vmatpush1.msra.mxu0 0.0
    %3095 = vmatprep.subr.mxu0 0.0
    %3096 = vmatpush1.msra.mxu0 0.0
    %3097 = vmatprep.subr.mxu0 0.0
    %3098 = vmatpush1.msra.mxu0 0.0
    %3099 = vmatprep.subr.mxu0 0.0
    %3100 = vmatpush1.msra.mxu0 0.0
    %3101 = vmatprep.subr.mxu0 0.0
    %3102 = vmatpush1.msra.mxu0 0.0
    %3103 = vmatprep.subr.mxu0 0.0
    %3104 = vmatpush1.msra.mxu0 0.0
    %3105 = vmatprep.subr.mxu0 0.0
    %3106 = vmatpush1.msra.mxu0 0.0
    %3107 = vmatprep.subr.mxu0 0.0
    %3108 = vmatpush1.msra.mxu0 0.0
    %3109 = vmatprep.subr.mxu0 0.0
    %3110 = vmatpush1.msra.mxu0 %v2608
    %3111 = vmatprep.subr.mxu0 0.0
    %3112 = vmatpush1.msra.mxu0 %v2607
    %3113 = vmatprep.subr.mxu0 0.0
    %3114 = vmatpush1.msra.mxu0 %v2606
    %3115 = vmatprep.subr.mxu0 0.0
    %3116 = vmatpush1.msra.mxu0 %v2605
    %3117 = vmatprep.subr.mxu0 0.0
    %3118 = vmatpush2.msra.mxu0 0.0
    %3119 = vmatprep.subr.mxu0 0.0
    %3120 = vmatpush2.msra.mxu0 0.0
    %3121 = vmatprep.subr.mxu0 0.0
    %3122 = vmatpush2.msra.mxu0 0.0
    %3123 = vmatprep.subr.mxu0 0.0
    %3124 = vmatpush2.msra.mxu0 0.0
    %3125 = vmatprep.subr.mxu0 0.0
    %3126 = vmatpush2.msra.mxu0 0.0
    %3127 = vmatprep.subr.mxu0 0.0
    %3128 = vmatpush2.msra.mxu0 0.0
    %3129 = vmatprep.subr.mxu0 0.0
    %3130 = vmatpush2.msra.mxu0 0.0
    %3131 = vmatprep.subr.mxu0 0.0
    %3132 = vmatpush2.msra.mxu0 0.0
    %3133 = vmatprep.subr.mxu0 0.0
    %3134 = vmatpush2.msra.mxu0 0.0
    %3135 = vmatprep.subr.mxu0 0.0
    %3136 = vmatpush2.msra.mxu0 0.0
    %3137 = vmatprep.subr.mxu0 0.0
    %3138 = vmatpush2.msra.mxu0 0.0
    %3139 = vmatprep.subr.mxu0 0.0
    %3140 = vmatpush2.msra.mxu0 0.0
    %3141 = vmatprep.subr.mxu0 0.0
    %3142 = vmatpush2.msra.mxu0 0.0
    %3143 = vmatprep.subr.mxu0 0.0
    %3144 = vmatpush2.msra.mxu0 0.0
    %3145 = vmatprep.subr.mxu0 0.0
    %3146 = vmatpush2.msra.mxu0 0.0
    %3147 = vmatprep.subr.mxu0 0.0
    %3148 = vmatpush2.msra.mxu0 0.0
    %3149 = vmatprep.mubr.f32.mxu0 0.0
    %3150 = vmatmul.mubr.f32.gmra.mxu0 %v3083
    %v3151 = vpop.f32.mrf.mxu0
    %v3152 = vadd.f32 0.0, %v3151
    %v3153 = vpop.f32.mrf.mxu0
    %3154 = vdwg.mxu0
    %v3156 = vrot.slane %v3152, 2
    %v3158 = vadd.f32 %v2865, %v3156
    %v3159 = vxor.u32 %v3158, 2147483648
    %v3160 = vmul.f32 %v3159, 1.442695
    %v3161 = vpow.pop %v3160
    %v3162 = vadd.f32 %v3161, 1.0
    %v3163 = vrcp.pop %v3162
    %v3164 = vmul.f32 1.0, %v3163
    %v3165 = vtanh.pop %v3158
    %v3167 = vrot.slane %v3072, 6
    %v3169 = vmul.f32 %v3164, %v3167
    %3171 = vrot.lane.b32.xlu0 %v3165, 32
    %v3172 = vpop.permute.xlu0 %3171
    %v3174 = vmul.f32 %v3164, %v3172
    %3176 = vrot.lane.b32.xlu0 %v3174, 32
    %v3177 = vpop.permute.xlu0 %3176
    %v3179 = vadd.f32 %v3169, %v3177
    %v3180 = vtanh.pop %v3179
    %3182 = vrot.lane.b32.xlu0 %v3180, 32
    %v3183 = vpop.permute.xlu0 %3182
    %v3185 = vmul.f32 %v3164, %v3183
    %v3188 = vrot.slane %v3185, 6
    %3189 = vrot.lane.b32.xlu0 %v3188, 64
    %v3190 = vpop.permute.xlu0 %3189
    %v3192 = vsel %vm1948, %v2868, %v3190
    %3193 = vrot.lane.b32.xlu0 %v2971, 64
    %v3194 = vpop.permute.xlu0 %3193
    %v3196 = vrot.slane %v3078, 2
    %3197 = vrot.lane.b32.xlu0 %v3196, 64
    %v3198 = vpop.permute.xlu0 %3197
    %v3200 = vsel %vm1948, %v3194, %v3198
    %3201 = vrot.lane.b32.xlu0 %v3078, 64
    %v3202 = vpop.permute.xlu0 %3201
    %v3204 = vrot.slane %v2971, 6
    %3205 = vrot.lane.b32.xlu0 %v3204, 64
    %v3206 = vpop.permute.xlu0 %3205
    %v3208 = vsel %vm1948, %v3202, %v3206
    %3209 = vrot.lane.b32.xlu0 %v3185, 64
    %v3210 = vpop.permute.xlu0 %3209
    %v3212 = vrot.slane %v2862, 2
    %3213 = vrot.lane.b32.xlu0 %v3212, 64
    %v3214 = vpop.permute.xlu0 %3213
    %v3216 = vsel %vm1948, %v3210, %v3214
    %v3218 = vrot.slane %v3200, 2
    %3219 = vrot.lane.b32.xlu0 %v3218, 32
    %v3220 = vpop.permute.xlu0 %3219
    %v3223 = vrot.slane %v3208, 4
    %3224 = vrot.lane.b32.xlu0 %v3223, 64
    %v3225 = vpop.permute.xlu0 %3224
    %v3228 = vrot.slane %v3216, 6
    %3229 = vrot.lane.b32.xlu0 %v3228, 96
    %v3230 = vpop.permute.xlu0 %3229
    %v3232 = vsel %vm160, %v3192, %v3220
    %vm3233 = vcmask 523264
    %v3234 = vsel %vm3233, %v3232, %v3225
    %vm3235 = vcmask 785408
    %v3236 = vsel %vm3235, %v3234, %v3230
    %v3237 = vld [vmem:[%s10] sm:$0xff]
    %v3238 = vld [vmem:[%s10 + $0x8] sm:$0xff]
    %v3239 = vld [vmem:[%s10 + $0x10] sm:$0xff]
    %v3240 = vld [vmem:[%s10 + $0x18] sm:$0xff]
    %v3241 = vld [vmem:[%s10 + $0x20] sm:$0xff]
    %v3242 = vld [vmem:[%s10 + $0x28] sm:$0xff]
    %v3243 = vld [vmem:[%s10 + $0x30] sm:$0xff]
    %v3244 = vld [vmem:[%s10 + $0x38] sm:$0xff]
    %v3245 = vld [vmem:[%s10 + $0x40] sm:$0xff]
    %v3246 = vld [vmem:[%s10 + $0x48] sm:$0xff]
    %v3247 = vld [vmem:[%s10 + $0x50] sm:$0xff]
    %v3248 = vld [vmem:[%s10 + $0x58] sm:$0xff]
    %v3249 = vld [vmem:[%s10 + $0x60] sm:$0xff]
    %v3250 = vld [vmem:[%s10 + $0x68] sm:$0xff]
    %v3251 = vld [vmem:[%s10 + $0x70] sm:$0xff]
    %v3252 = vld [vmem:[%s10 + $0x78] sm:$0xff]
    %v3253 = vld [vmem:[%s10 + $0x80] sm:$0x1]
    %v3254 = vlaneseq
    %v3255 = vshrl.u32 %v3254, 7
    %v3256 = vsub.s32 0, %v3255
    %v3257 = vrot.slane %v3253, %v3256
    %3258 = vmatprep.subr.mxu0 0.0
    %3259 = vmatpush1.msra.mxu0 %v3252
    %3260 = vmatprep.subr.mxu0 0.0
    %3261 = vmatpush1.msra.mxu0 %v3251
    %3262 = vmatprep.subr.mxu0 0.0
    %3263 = vmatpush1.msra.mxu0 %v3250
    %3264 = vmatprep.subr.mxu0 0.0
    %3265 = vmatpush1.msra.mxu0 %v3249
    %3266 = vmatprep.subr.mxu0 0.0
    %3267 = vmatpush1.msra.mxu0 %v3248
    %3268 = vmatprep.subr.mxu0 0.0
    %3269 = vmatpush1.msra.mxu0 %v3247
    %3270 = vmatprep.subr.mxu0 0.0
    %3271 = vmatpush1.msra.mxu0 %v3246
    %3272 = vmatprep.subr.mxu0 0.0
    %3273 = vmatpush1.msra.mxu0 %v3245
    %3274 = vmatprep.subr.mxu0 0.0
    %3275 = vmatpush1.msra.mxu0 %v3244
    %3276 = vmatprep.subr.mxu0 0.0
    %3277 = vmatpush1.msra.mxu0 %v3243
    %3278 = vmatprep.subr.mxu0 0.0
    %3279 = vmatpush1.msra.mxu0 %v3242
    %3280 = vmatprep.subr.mxu0 0.0
    %3281 = vmatpush1.msra.mxu0 %v3241
    %3282 = vmatprep.subr.mxu0 0.0
    %3283 = vmatpush1.msra.mxu0 %v3240
    %3284 = vmatprep.subr.mxu0 0.0
    %3285 = vmatpush1.msra.mxu0 %v3239
    %3286 = vmatprep.subr.mxu0 0.0
    %3287 = vmatpush1.msra.mxu0 %v3238
    %3288 = vmatprep.subr.mxu0 0.0
    %3289 = vmatpush1.msra.mxu0 %v3237
    %3290 = vmatprep.subr.mxu0 0.0
    %3291 = vmatpush2.msra.mxu0 0.0
    %3292 = vmatprep.subr.mxu0 0.0
    %3293 = vmatpush2.msra.mxu0 0.0
    %3294 = vmatprep.subr.mxu0 0.0
    %3295 = vmatpush2.msra.mxu0 0.0
    %3296 = vmatprep.subr.mxu0 0.0
    %3297 = vmatpush2.msra.mxu0 0.0
    %3298 = vmatprep.subr.mxu0 0.0
    %3299 = vmatpush2.msra.mxu0 0.0
    %3300 = vmatprep.subr.mxu0 0.0
    %3301 = vmatpush2.msra.mxu0 0.0
    %3302 = vmatprep.subr.mxu0 0.0
    %3303 = vmatpush2.msra.mxu0 0.0
    %3304 = vmatprep.subr.mxu0 0.0
    %3305 = vmatpush2.msra.mxu0 0.0
    %3306 = vmatprep.subr.mxu0 0.0
    %3307 = vmatpush2.msra.mxu0 0.0
    %3308 = vmatprep.subr.mxu0 0.0
    %3309 = vmatpush2.msra.mxu0 0.0
    %3310 = vmatprep.subr.mxu0 0.0
    %3311 = vmatpush2.msra.mxu0 0.0
    %3312 = vmatprep.subr.mxu0 0.0
    %3313 = vmatpush2.msra.mxu0 0.0
    %3314 = vmatprep.subr.mxu0 0.0
    %3315 = vmatpush2.msra.mxu0 0.0
    %3316 = vmatprep.subr.mxu0 0.0
    %3317 = vmatpush2.msra.mxu0 0.0
    %3318 = vmatprep.subr.mxu0 0.0
    %3319 = vmatpush2.msra.mxu0 0.0
    %3320 = vmatprep.subr.mxu0 0.0
    %3321 = vmatpush2.msra.mxu0 0.0
    %3322 = vmatprep.mubr.f32.mxu0 0.0
    %3323 = vmatmul.mubr.f32.gmra.mxu0 %v3236
    %v3324 = vpop.f32.mrf.mxu0
    %v3325 = vadd.f32 %v3257, %v3324
    %v3326 = vpop.f32.mrf.mxu0
    %3327 = vdwg.mxu0
    %v3328 = vadd.f32 %v3325, %v1937
    %v3329 = vld [vmem:[%s11] sm:$0xff]
    %v3330 = vld [vmem:[%s11 + $0x8] sm:$0xff]
    %v3331 = vld [vmem:[%s11 + $0x10] sm:$0xff]
    %v3332 = vld [vmem:[%s11 + $0x18] sm:$0x1]
    %v3333 = vlaneseq
    %v3334 = vshrl.u32 %v3333, 7
    %v3335 = vsub.s32 0, %v3334
    %v3336 = vrot.slane %v3332, %v3335
    %vm3337 = vcmask 195584
    %v3339 = vsel %vm3337, %v3328, 0
    %3341 = vmatprep.subr.mxu0 0.0
    %3342 = vmatpush1.msra.mxu0 0.0
    %3343 = vmatprep.subr.mxu0 0.0
    %3344 = vmatpush1.msra.mxu0 0.0
    %3345 = vmatprep.subr.mxu0 0.0
    %3346 = vmatpush1.msra.mxu0 0.0
    %3347 = vmatprep.subr.mxu0 0.0
    %3348 = vmatpush1.msra.mxu0 0.0
    %3349 = vmatprep.subr.mxu0 0.0
    %3350 = vmatpush1.msra.mxu0 0.0
    %3351 = vmatprep.subr.mxu0 0.0
    %3352 = vmatpush1.msra.mxu0 0.0
    %3353 = vmatprep.subr.mxu0 0.0
    %3354 = vmatpush1.msra.mxu0 0.0
    %3355 = vmatprep.subr.mxu0 0.0
    %3356 = vmatpush1.msra.mxu0 0.0
    %3357 = vmatprep.subr.mxu0 0.0
    %3358 = vmatpush1.msra.mxu0 0.0
    %3359 = vmatprep.subr.mxu0 0.0
    %3360 = vmatpush1.msra.mxu0 0.0
    %3361 = vmatprep.subr.mxu0 0.0
    %3362 = vmatpush1.msra.mxu0 0.0
    %3363 = vmatprep.subr.mxu0 0.0
    %3364 = vmatpush1.msra.mxu0 0.0
    %3365 = vmatprep.subr.mxu0 0.0
    %3366 = vmatpush1.msra.mxu0 0.0
    %3367 = vmatprep.subr.mxu0 0.0
    %3368 = vmatpush1.msra.mxu0 %v3331
    %3369 = vmatprep.subr.mxu0 0.0
    %3370 = vmatpush1.msra.mxu0 %v3330
    %3371 = vmatprep.subr.mxu0 0.0
    %3372 = vmatpush1.msra.mxu0 %v3329
    %3373 = vmatprep.subr.mxu0 0.0
    %3374 = vmatpush2.msra.mxu0 0.0
    %3375 = vmatprep.subr.mxu0 0.0
    %3376 = vmatpush2.msra.mxu0 0.0
    %3377 = vmatprep.subr.mxu0 0.0
    %3378 = vmatpush2.msra.mxu0 0.0
    %3379 = vmatprep.subr.mxu0 0.0
    %3380 = vmatpush2.msra.mxu0 0.0
    %3381 = vmatprep.subr.mxu0 0.0
    %3382 = vmatpush2.msra.mxu0 0.0
    %3383 = vmatprep.subr.mxu0 0.0
    %3384 = vmatpush2.msra.mxu0 0.0
    %3385 = vmatprep.subr.mxu0 0.0
    %3386 = vmatpush2.msra.mxu0 0.0
    %3387 = vmatprep.subr.mxu0 0.0
    %3388 = vmatpush2.msra.mxu0 0.0
    %3389 = vmatprep.subr.mxu0 0.0
    %3390 = vmatpush2.msra.mxu0 0.0
    %3391 = vmatprep.subr.mxu0 0.0
    %3392 = vmatpush2.msra.mxu0 0.0
    %3393 = vmatprep.subr.mxu0 0.0
    %3394 = vmatpush2.msra.mxu0 0.0
    %3395 = vmatprep.subr.mxu0 0.0
    %3396 = vmatpush2.msra.mxu0 0.0
    %3397 = vmatprep.subr.mxu0 0.0
    %3398 = vmatpush2.msra.mxu0 0.0
    %3399 = vmatprep.subr.mxu0 0.0
    %3400 = vmatpush2.msra.mxu0 0.0
    %3401 = vmatprep.subr.mxu0 0.0
    %3402 = vmatpush2.msra.mxu0 0.0
    %3403 = vmatprep.subr.mxu0 0.0
    %3404 = vmatpush2.msra.mxu0 0.0
    %3405 = vmatprep.mubr.f32.mxu0 0.0
    %3406 = vmatmul.mubr.f32.gmra.mxu0 %v3339
    %v3407 = vpop.f32.mrf.mxu0
    %v3408 = vadd.f32 %v3336, %v3407
    %v3409 = vpop.f32.mrf.mxu0
    %3410 = vdwg.mxu0
    %vm3411 = vcmask 33792
    %v3412 = vsel %vm3411, %v3408, -inf
    %3413 = vmax.xlane.f32.xlu0 %v3412
    %v3414 = vpop.xlane.xlu0 %3413
    %v3415 = vsub.f32 %v3408, %v3414
    %v3416 = vmul.f32 %v3415, 1.442695
    %v3417 = vpow.pop %v3416
    %v3418 = vsel %vm3411, %v3417, 0.0
    %3419 = vadd.xlane.f32.xlu0 %v3418
    %v3420 = vpop.xlane.xlu0 %3419
    %v3421 = vlog2.pop %v3420
    %v3422 = vmul.f32 %v3421, 0.6931472
    %v3423 = vsub.f32 %v3415, %v3422
    %3424 = vst.msk [vmem:[#allocation2] sm:$0x3] %vm3411, %v3423
    // Predicated region
    $region50: #{spatwave_lstm_forward.1} parent=1 // pred_check
      _
    $region51: #{spatwave_lstm_forward.1} parent=1 // pred_check_branch
      %3426 = sbr.rel (0) target = $region53
    $region52: #{spatwave_lstm_forward.1} parent=1 // pred_region
      %s3428 = ssub.s32 32, 32
      %3429 = vsyncadd [#allocation3], %s3428
      %s3431 = sshll.u32 [#allocation2], 4
      %s3432 = int_to_ptr.vmem [resolvable:$true] %s3431
      %3434 = dma.vmem_to_hbm [thread:$0]  %s3432, 32, %s12, [#allocation3]
    $region53: #{spatwave_lstm_forward.1} parent=1 // pred_fallthru
      _
    // Predicated region
    $region54: #{spatwave_lstm_forward.1} parent=1 // pred_check
      _
    $region55: #{spatwave_lstm_forward.1} parent=1 // pred_check_branch
      %3436 = sbr.rel (0) target = $region57
    $region56: #{spatwave_lstm_forward.1} parent=1 // pred_region
      %3437 = dma.done [#allocation3], 32
    $region57: #{spatwave_lstm_forward.1} parent=1 // pred_fallthru
      _
    %3438 = vsyncpa [#allocation3], 1

</llo_original>
